<compile_context>
chip_gen: v7x
topology: tpu7x:2x2x1
jax: 0.10.0
libtpu: 0.0.40
codegen_flags: <defaults>
</compile_context>

<pallas_src>
import functools

import jax
import jax.numpy as jnp
from jax.experimental import pallas as pl
from jax.experimental.pallas import tpu as pltpu


def _generate_mode_kernel(ent_ref, rel_ref, w_ent_ref, w_rel_ref, b_ref, out_ref):
    # score = [ent | rel] @ W^T + b, fused: two MXU pushes against the two
    # static halves of the weight (K = H each), f32 accumulation.
    score = (
        jnp.dot(ent_ref[...], w_ent_ref[...],
                preferred_element_type=jnp.float32,
                precision=jax.lax.Precision.HIGHEST)
        + jnp.dot(rel_ref[...], w_rel_ref[...],
                  preferred_element_type=jnp.float32,
                  precision=jax.lax.Precision.HIGHEST)
        + b_ref[...]
    )
    # numerically-stable softmax along dim=1 (last dim)
    row_max = jnp.max(score, axis=-1, keepdims=True)
    e = jnp.exp(score - row_max)
    denom = jnp.sum(e, axis=-1, keepdims=True)
    # Exact divide (not pl.reciprocal(approx=True)): rows sum to 1 to f32
    # precision, and at O=16 the extra cost is noise.
    out_ref[...] = (e / denom).astype(out_ref.dtype)


def prepare_params(weight, bias, hidden_size):
    """One-time parameter prep, kept OUT of the per-call path.

    weight: [O, 2H] (PyTorch nn.Linear layout) ->
        w_ent: [H, O]  (half multiplying ent_embed)
        w_rel: [H, O]  (half multiplying rel_embed)
    bias:   [O]      -> b2d: [1, O]
    """
    w_t = weight.T  # [2H, O]
    return w_t[:hidden_size], w_t[hidden_size:], bias.reshape(1, -1)


@functools.partial(jax.jit, static_argnames=("block_rows",))
def generate_mode(ent_embed, rel_embed, w_ent, w_rel, b2d, *, block_rows=1024):
    """ent_embed, rel_embed: [B, H]; w_ent/w_rel: [H, O]; b2d: [1, O] -> [B, O]."""
    B, H = ent_embed.shape
    O = w_ent.shape[1]

    # Batch tile: as large as block_rows allows (fewer grid steps = less fixed
    # per-step overhead).  If it does not cover B, round to a multiple of 8
    # (f32 sublane); Pallas masks the ragged last block, so no pad / slice.
    tb = min(block_rows, B)
    if tb < B:
        tb = max(8, (tb // 8) * 8)
    nb = pl.cdiv(B, tb)
    # VMEM: double-buffered inputs 2*tb*H*4*2 + output tb*O*4*2 + weights
    # 2*H*O*4 -- at tb=1024, H=32, O=16 that is < 1 MiB, far under any
    # generation's scoped-VMEM default.

    return pl.pallas_call(
        _generate_mode_kernel,
        out_shape=jax.ShapeDtypeStruct((B, O), jnp.float32),
        grid=(nb,),
        in_specs=[
            pl.BlockSpec((tb, H), lambda i: (i, 0),
                         memory_space=pltpu.MemorySpace.VMEM),
            pl.BlockSpec((tb, H), lambda i: (i, 0),
                         memory_space=pltpu.MemorySpace.VMEM),
            # Constant index_map -> weights/bias stay resident across steps.
            pl.BlockSpec((H, O), lambda i: (0, 0),
                         memory_space=pltpu.MemorySpace.VMEM),
            pl.BlockSpec((H, O), lambda i: (0, 0),
                         memory_space=pltpu.MemorySpace.VMEM),
            pl.BlockSpec((1, O), lambda i: (0, 0),
                         memory_space=pltpu.MemorySpace.VMEM),
        ],
        out_specs=pl.BlockSpec((tb, O), lambda i: (i, 0),
                               memory_space=pltpu.MemorySpace.VMEM),
        compiler_params=pltpu.CompilerParams(
            dimension_semantics=("parallel",)),
    )(ent_embed, rel_embed, w_ent, w_rel, b2d)


if __name__ == "__main__":
    # hidden_size=32, output_dim=16, batch=256 (fits one grid step by default).
    B, H, O = 256, 32, 16

    key = jax.random.PRNGKey(0)
    k_e, k_r, k_w, k_b = jax.random.split(key, 4)

    ent_embed = jax.random.normal(k_e, (B, H), dtype=jnp.float32)
    rel_embed = jax.random.normal(k_r, (B, H), dtype=jnp.float32)

    # Deterministic nn.Linear-style init: U(-k, k), k = 1/sqrt(in_features)
    fan_in = 2 * H
    bound = 1.0 / (fan_in ** 0.5)
    weight = jax.random.uniform(k_w, (O, 2 * H), minval=-bound, maxval=bound,
                                dtype=jnp.float32)
    bias = jax.random.uniform(k_b, (O,), minval=-bound, maxval=bound,
                              dtype=jnp.float32)

    # One-time weight split/transpose + bias reshape, outside the per-call path.
    w_ent, w_rel, b2d = prepare_params(weight, bias, H)

    out = generate_mode(ent_embed, rel_embed, w_ent, w_rel, b2d)
    out = jax.block_until_ready(out)

    # Pure-JAX reference at matching (f32) matmul precision.
    m_t_ref = jnp.concatenate([ent_embed, rel_embed], axis=1)
    score_ref = jnp.dot(m_t_ref, weight.T,
                        precision=jax.lax.Precision.HIGHEST) + bias
    ref = jax.nn.softmax(score_ref, axis=1)

    assert out.shape == (B, O)
    assert jnp.allclose(out, ref, atol=1e-3, rtol=1e-3)
    assert jnp.allclose(jnp.sum(out, axis=1), 1.0, atol=1e-4)

    print("KERNEL_OK")
</pallas_src>

<mosaic_0001>
module attributes {stable_mosaic.version = 11 : i64} {
  func.func @_generate_mode_kernel(%arg0: i32, %arg1: memref<256x32xf32, #tpu.memory_space<vmem>>, %arg2: memref<256x32xf32, #tpu.memory_space<vmem>>, %arg3: memref<32x16xf32, #tpu.memory_space<vmem>>, %arg4: memref<32x16xf32, #tpu.memory_space<vmem>>, %arg5: memref<1x16xf32, #tpu.memory_space<vmem>>, %arg6: memref<256x16xf32, #tpu.memory_space<vmem>>) attributes {dimension_semantics = [#tpu.dimension_semantics<parallel>], iteration_bounds = array<i64: 1>, scalar_prefetch = 0 : i64, scratch_operands = 0 : i64, tpu.core_type = #tpu.core_type<tc>, window_params = [{transform_indices = @transform_0, window_bounds = array<i64: 256, 32>}, {transform_indices = @transform_1, window_bounds = array<i64: 256, 32>}, {pipeline_mode = #tpu.pipeline_mode<synchronous>, transform_indices = @transform_2, window_bounds = array<i64: 32, 16>}, {pipeline_mode = #tpu.pipeline_mode<synchronous>, transform_indices = @transform_3, window_bounds = array<i64: 32, 16>}, {pipeline_mode = #tpu.pipeline_mode<synchronous>, transform_indices = @transform_4, window_bounds = array<i64: 1, 16>}, {transform_indices = @transform_5, window_bounds = array<i64: 256, 16>}]} {
    %c0 = arith.constant 0 : index
    %c0_0 = arith.constant 0 : index
    %0 = vector.load %arg1[%c0, %c0_0] : memref<256x32xf32, #tpu.memory_space<vmem>>, vector<256x32xf32>
    %c0_1 = arith.constant 0 : index
    %c0_2 = arith.constant 0 : index
    %1 = vector.load %arg3[%c0_1, %c0_2] : memref<32x16xf32, #tpu.memory_space<vmem>>, vector<32x16xf32>
    %cst = arith.constant dense<0.000000e+00> : vector<256x16xf32>
    %2 = tpu.matmul %0, %1, %cst {dimension_numbers = #tpu.dot_dimension_numbers<[1], [0], [0], [1], [0, 0, 1, 1], [], []>, precision = #tpu.contract_precision<fp32>} : vector<256x32xf32>, vector<32x16xf32>, vector<256x16xf32> -> vector<256x16xf32>
    %c0_3 = arith.constant 0 : index
    %c0_4 = arith.constant 0 : index
    %3 = vector.load %arg2[%c0_3, %c0_4] : memref<256x32xf32, #tpu.memory_space<vmem>>, vector<256x32xf32>
    %c0_5 = arith.constant 0 : index
    %c0_6 = arith.constant 0 : index
    %4 = vector.load %arg4[%c0_5, %c0_6] : memref<32x16xf32, #tpu.memory_space<vmem>>, vector<32x16xf32>
    %cst_7 = arith.constant dense<0.000000e+00> : vector<256x16xf32>
    %5 = tpu.matmul %3, %4, %cst_7 {dimension_numbers = #tpu.dot_dimension_numbers<[1], [0], [0], [1], [0, 0, 1, 1], [], []>, precision = #tpu.contract_precision<fp32>} : vector<256x32xf32>, vector<32x16xf32>, vector<256x16xf32> -> vector<256x16xf32>
    %6 = arith.addf %2, %5 : vector<256x16xf32>
    %c0_8 = arith.constant 0 : index
    %c0_9 = arith.constant 0 : index
    %7 = vector.load %arg5[%c0_8, %c0_9] : memref<1x16xf32, #tpu.memory_space<vmem>>, vector<1x16xf32>
    %8 = vector.broadcast %7 : vector<1x16xf32> to vector<256x16xf32>
    %9 = arith.addf %6, %8 : vector<256x16xf32>
    %cst_10 = arith.constant dense<0xFF800000> : vector<256xf32>
    %10 = vector.multi_reduction <maximumf>, %9, %cst_10 [1] : vector<256x16xf32> to vector<256xf32>
    %11 = vector.shape_cast %10 : vector<256xf32> to vector<256x1xf32>
    %12 = vector.broadcast %11 : vector<256x1xf32> to vector<256x16xf32>
    %13 = arith.subf %9, %12 : vector<256x16xf32>
    %14 = math.exp %13 : vector<256x16xf32>
    %cst_11 = arith.constant dense<0.000000e+00> : vector<256xf32>
    %15 = vector.multi_reduction <add>, %14, %cst_11 [1] : vector<256x16xf32> to vector<256xf32>
    %16 = vector.shape_cast %15 : vector<256xf32> to vector<256x1xf32>
    %17 = vector.broadcast %16 : vector<256x1xf32> to vector<256x16xf32>
    %18 = arith.divf %14, %17 : vector<256x16xf32>
    %c0_12 = arith.constant 0 : index
    %c0_13 = arith.constant 0 : index
    %19 = vector.load %arg6[%c0_12, %c0_13] : memref<256x16xf32, #tpu.memory_space<vmem>>, vector<256x16xf32>
    tpu.vector_store %arg6[%c0_12, %c0_13], %18 {strides = array<i32>} : memref<256x16xf32, #tpu.memory_space<vmem>>, vector<256x16xf32>,
    return
  }
  func.func @transform_0(%arg0: i32) -> (i32, i32) {
    %c0_i32 = arith.constant 0 : i32
    %c0_i32_0 = arith.constant 0 : i32
    return %arg0, %c0_i32 : i32, i32
  }
  func.func @transform_1(%arg0: i32) -> (i32, i32) {
    %c0_i32 = arith.constant 0 : i32
    %c0_i32_0 = arith.constant 0 : i32
    return %arg0, %c0_i32 : i32, i32
  }
  func.func @transform_2(%arg0: i32) -> (i32, i32) {
    %c0_i32 = arith.constant 0 : i32
    %c0_i32_0 = arith.constant 0 : i32
    %c0_i32_1 = arith.constant 0 : i32
    return %c0_i32, %c0_i32_0 : i32, i32
  }
  func.func @transform_3(%arg0: i32) -> (i32, i32) {
    %c0_i32 = arith.constant 0 : i32
    %c0_i32_0 = arith.constant 0 : i32
    %c0_i32_1 = arith.constant 0 : i32
    return %c0_i32, %c0_i32_0 : i32, i32
  }
  func.func @transform_4(%arg0: i32) -> (i32, i32) {
    %c0_i32 = arith.constant 0 : i32
    %c0_i32_0 = arith.constant 0 : i32
    %c0_i32_1 = arith.constant 0 : i32
    return %c0_i32, %c0_i32_0 : i32, i32
  }
  func.func @transform_5(%arg0: i32) -> (i32, i32) {
    %c0_i32 = arith.constant 0 : i32
    %c0_i32_0 = arith.constant 0 : i32
    return %arg0, %c0_i32 : i32, i32
  }
}

</mosaic_0001>

<llo_original>
// kernel: generate_mode.1
$region0: #{generate_mode.1}
  #allocation0 [shape = 'u32[]', space=smem, size = 0x4, offset = 0x4, fixed_abs, tag = 'smem constant byte address 0x4 - core index']
  #allocation1 [shape = 'u32[144,128]{1,0:T(1,128)}', space=vmem, size = 0x12000, scoped, tag = 'internal scratch']
  %s0 = inlined_call_operand.vmem [shape: f32[256,32], index: 0, kind: input, shape index: {}]
  %s1 = inlined_call_operand.vmem [shape: f32[256,32], index: 1, kind: input, shape index: {}]
  %s2 = inlined_call_operand.vmem [shape: f32[32,16], index: 2, kind: input, shape index: {}]
  %s3 = inlined_call_operand.vmem [shape: f32[32,16], index: 3, kind: input, shape index: {}]
  %s4 = inlined_call_operand.vmem [shape: f32[1,16], index: 4, kind: input, shape index: {}]
  %s5 = inlined_call_operand.vmem [shape: f32[256,16], index: 5, kind: output, shape index: {}]
  %s6 = sld [smem:[#allocation0]]
  $region30: #{generate_mode.1} parent=0
    _
  %s8 = ssub.s32 1, %s6
  %s9 = scalar_select 0, %s8, %s6
  // Predicated region
  $region2: #{generate_mode.1} parent=0 // pred_check
    _
  $region3: #{generate_mode.1} parent=0 // pred_check_branch
    %11 = sbr.rel (0) target = $region5
  $region4: #{generate_mode.1} parent=0 // pred_region
    _
  $region5: #{generate_mode.1} parent=0 // pred_fallthru
    _
  // Predicated region
  $region6: #{generate_mode.1} parent=0 // pred_check
    _
  $region7: #{generate_mode.1} parent=0 // pred_check_branch
    %13 = sbr.rel (0) target = $region9
  $region8: #{generate_mode.1} parent=0 // pred_region
    _
  $region9: #{generate_mode.1} parent=0 // pred_fallthru
    _
  // Predicated region
  $region10: #{generate_mode.1} parent=0 // pred_check
    _
  $region11: #{generate_mode.1} parent=0 // pred_check_branch
    %15 = sbr.rel (0) target = $region13
  $region12: #{generate_mode.1} parent=0 // pred_region
    _
  $region13: #{generate_mode.1} parent=0 // pred_fallthru
    _
  // Predicated region
  $region14: #{generate_mode.1} parent=0 // pred_check
    _
  $region15: #{generate_mode.1} parent=0 // pred_check_branch
    %17 = sbr.rel (0) target = $region17
  $region16: #{generate_mode.1} parent=0 // pred_region
    _
  $region17: #{generate_mode.1} parent=0 // pred_fallthru
    _
  // Predicated region
  $region18: #{generate_mode.1} parent=0 // pred_check
    _
  $region19: #{generate_mode.1} parent=0 // pred_check_branch
    %19 = sbr.rel (0) target = $region21
  $region20: #{generate_mode.1} parent=0 // pred_region
    _
  $region21: #{generate_mode.1} parent=0 // pred_fallthru
    _
  %v20 = vld [vmem:[%s0] sm:$0xff]
  %v21 = vld [vmem:[%s0 + $0x8] sm:$0xff]
  %v22 = vld [vmem:[%s0 + $0x10] sm:$0xff]
  %v23 = vld [vmem:[%s0 + $0x18] sm:$0xff]
  %v24 = vld [vmem:[%s0 + $0x20] sm:$0xff]
  %v25 = vld [vmem:[%s0 + $0x28] sm:$0xff]
  %v26 = vld [vmem:[%s0 + $0x30] sm:$0xff]
  %v27 = vld [vmem:[%s0 + $0x38] sm:$0xff]
  %v28 = vld [vmem:[%s0 + $0x40] sm:$0xff]
  %v29 = vld [vmem:[%s0 + $0x48] sm:$0xff]
  %v30 = vld [vmem:[%s0 + $0x50] sm:$0xff]
  %v31 = vld [vmem:[%s0 + $0x58] sm:$0xff]
  %v32 = vld [vmem:[%s0 + $0x60] sm:$0xff]
  %v33 = vld [vmem:[%s0 + $0x68] sm:$0xff]
  %v34 = vld [vmem:[%s0 + $0x70] sm:$0xff]
  %v35 = vld [vmem:[%s0 + $0x78] sm:$0xff]
  %v36 = vld [vmem:[%s0 + $0x80] sm:$0xff]
  %v37 = vld [vmem:[%s0 + $0x88] sm:$0xff]
  %v38 = vld [vmem:[%s0 + $0x90] sm:$0xff]
  %v39 = vld [vmem:[%s0 + $0x98] sm:$0xff]
  %v40 = vld [vmem:[%s0 + $0xa0] sm:$0xff]
  %v41 = vld [vmem:[%s0 + $0xa8] sm:$0xff]
  %v42 = vld [vmem:[%s0 + $0xb0] sm:$0xff]
  %v43 = vld [vmem:[%s0 + $0xb8] sm:$0xff]
  %v44 = vld [vmem:[%s0 + $0xc0] sm:$0xff]
  %v45 = vld [vmem:[%s0 + $0xc8] sm:$0xff]
  %v46 = vld [vmem:[%s0 + $0xd0] sm:$0xff]
  %v47 = vld [vmem:[%s0 + $0xd8] sm:$0xff]
  %v48 = vld [vmem:[%s0 + $0xe0] sm:$0xff]
  %v49 = vld [vmem:[%s0 + $0xe8] sm:$0xff]
  %v50 = vld [vmem:[%s0 + $0xf0] sm:$0xff]
  %v51 = vld [vmem:[%s0 + $0xf8] sm:$0xff]
  %v52 = vld [vmem:[%s2] sm:$0xff]
  %v53 = vld [vmem:[%s2 + $0x8] sm:$0xff]
  %v54 = vld [vmem:[%s2 + $0x10] sm:$0xff]
  %v55 = vld [vmem:[%s2 + $0x18] sm:$0xff]
  %v56 = vld [vmem:[%s1] sm:$0xff]
  %v57 = vld [vmem:[%s1 + $0x8] sm:$0xff]
  %v58 = vld [vmem:[%s1 + $0x10] sm:$0xff]
  %v59 = vld [vmem:[%s1 + $0x18] sm:$0xff]
  %v60 = vld [vmem:[%s1 + $0x20] sm:$0xff]
  %v61 = vld [vmem:[%s1 + $0x28] sm:$0xff]
  %v62 = vld [vmem:[%s1 + $0x30] sm:$0xff]
  %v63 = vld [vmem:[%s1 + $0x38] sm:$0xff]
  %v64 = vld [vmem:[%s1 + $0x40] sm:$0xff]
  %v65 = vld [vmem:[%s1 + $0x48] sm:$0xff]
  %v66 = vld [vmem:[%s1 + $0x50] sm:$0xff]
  %v67 = vld [vmem:[%s1 + $0x58] sm:$0xff]
  %v68 = vld [vmem:[%s1 + $0x60] sm:$0xff]
  %v69 = vld [vmem:[%s1 + $0x68] sm:$0xff]
  %v70 = vld [vmem:[%s1 + $0x70] sm:$0xff]
  %v71 = vld [vmem:[%s1 + $0x78] sm:$0xff]
  %v72 = vld [vmem:[%s1 + $0x80] sm:$0xff]
  %v73 = vld [vmem:[%s1 + $0x88] sm:$0xff]
  %v74 = vld [vmem:[%s1 + $0x90] sm:$0xff]
  %v75 = vld [vmem:[%s1 + $0x98] sm:$0xff]
  %v76 = vld [vmem:[%s1 + $0xa0] sm:$0xff]
  %v77 = vld [vmem:[%s1 + $0xa8] sm:$0xff]
  %v78 = vld [vmem:[%s1 + $0xb0] sm:$0xff]
  %v79 = vld [vmem:[%s1 + $0xb8] sm:$0xff]
  %v80 = vld [vmem:[%s1 + $0xc0] sm:$0xff]
  %v81 = vld [vmem:[%s1 + $0xc8] sm:$0xff]
  %v82 = vld [vmem:[%s1 + $0xd0] sm:$0xff]
  %v83 = vld [vmem:[%s1 + $0xd8] sm:$0xff]
  %v84 = vld [vmem:[%s1 + $0xe0] sm:$0xff]
  %v85 = vld [vmem:[%s1 + $0xe8] sm:$0xff]
  %v86 = vld [vmem:[%s1 + $0xf0] sm:$0xff]
  %v87 = vld [vmem:[%s1 + $0xf8] sm:$0xff]
  %v88 = vld [vmem:[%s3] sm:$0xff]
  %v89 = vld [vmem:[%s3 + $0x8] sm:$0xff]
  %v90 = vld [vmem:[%s3 + $0x10] sm:$0xff]
  %v91 = vld [vmem:[%s3 + $0x18] sm:$0xff]
  %vm92 = vcmask 261120
  %v94 = vsel %vm92, %v56, 0
  %v97 = vsel %vm92, %v57, 0
  %v100 = vsel %vm92, %v58, 0
  %v103 = vsel %vm92, %v59, 0
  %v106 = vsel %vm92, %v60, 0
  %v109 = vsel %vm92, %v61, 0
  %v112 = vsel %vm92, %v62, 0
  %v115 = vsel %vm92, %v63, 0
  %v118 = vsel %vm92, %v64, 0
  %v121 = vsel %vm92, %v65, 0
  %v124 = vsel %vm92, %v66, 0
  %v127 = vsel %vm92, %v67, 0
  %v130 = vsel %vm92, %v68, 0
  %v133 = vsel %vm92, %v69, 0
  %v136 = vsel %vm92, %v70, 0
  %v139 = vsel %vm92, %v71, 0
  %v142 = vsel %vm92, %v72, 0
  %v145 = vsel %vm92, %v73, 0
  %v148 = vsel %vm92, %v74, 0
  %v151 = vsel %vm92, %v75, 0
  %v154 = vsel %vm92, %v76, 0
  %v157 = vsel %vm92, %v77, 0
  %v160 = vsel %vm92, %v78, 0
  %v163 = vsel %vm92, %v79, 0
  %v166 = vsel %vm92, %v80, 0
  %v169 = vsel %vm92, %v81, 0
  %v172 = vsel %vm92, %v82, 0
  %v175 = vsel %vm92, %v83, 0
  %v178 = vsel %vm92, %v84, 0
  %v181 = vsel %vm92, %v85, 0
  %v184 = vsel %vm92, %v86, 0
  %v187 = vsel %vm92, %v87, 0
  %189 = vmatprep.subr.mxu0 0.0
  %v190 = vand.u32 %v88, 4294901760
  %191 = vmatpush1.msra.mxu0 %v190
  %192 = vmatprep.subr.mxu0 0.0
  %v193 = vand.u32 %v89, 4294901760
  %194 = vmatpush1.msra.mxu0 %v193
  %195 = vmatprep.subr.mxu0 0.0
  %v196 = vand.u32 %v90, 4294901760
  %197 = vmatpush1.msra.mxu0 %v196
  %198 = vmatprep.subr.mxu0 0.0
  %v199 = vand.u32 %v91, 4294901760
  %200 = vmatpush1.msra.mxu0 %v199
  %201 = vmatprep.subr.mxu0 0.0
  %202 = vmatpush1.msra.mxu0 0.0
  %203 = vmatprep.subr.mxu0 0.0
  %204 = vmatpush1.msra.mxu0 0.0
  %205 = vmatprep.subr.mxu0 0.0
  %206 = vmatpush1.msra.mxu0 0.0
  %207 = vmatprep.subr.mxu0 0.0
  %208 = vmatpush1.msra.mxu0 0.0
  %209 = vmatprep.subr.mxu0 0.0
  %210 = vmatpush1.msra.mxu0 0.0
  %211 = vmatprep.subr.mxu0 0.0
  %212 = vmatpush1.msra.mxu0 0.0
  %213 = vmatprep.subr.mxu0 0.0
  %214 = vmatpush1.msra.mxu0 0.0
  %215 = vmatprep.subr.mxu0 0.0
  %216 = vmatpush1.msra.mxu0 0.0
  %217 = vmatprep.subr.mxu0 0.0
  %218 = vmatpush1.msra.mxu0 0.0
  %219 = vmatprep.subr.mxu0 0.0
  %220 = vmatpush1.msra.mxu0 0.0
  %221 = vmatprep.subr.mxu0 0.0
  %222 = vmatpush1.msra.mxu0 0.0
  %223 = vmatprep.subr.mxu0 0.0
  %224 = vmatpush1.msra.mxu0 0.0
  %225 = vmatprep.subr.mxu0 0.0
  %226 = vmatpush1.msra.mxu0 0.0
  %227 = vmatprep.subr.mxu0 0.0
  %228 = vmatpush1.msra.mxu0 0.0
  %229 = vmatprep.subr.mxu0 0.0
  %230 = vmatpush1.msra.mxu0 0.0
  %231 = vmatprep.subr.mxu0 0.0
  %232 = vmatpush1.msra.mxu0 0.0
  %233 = vmatprep.subr.mxu0 0.0
  %234 = vmatpush1.msra.mxu0 0.0
  %235 = vmatprep.subr.mxu0 0.0
  %236 = vmatpush1.msra.mxu0 0.0
  %237 = vmatprep.subr.mxu0 0.0
  %238 = vmatpush1.msra.mxu0 0.0
  %239 = vmatprep.subr.mxu0 0.0
  %240 = vmatpush1.msra.mxu0 0.0
  %241 = vmatprep.subr.mxu0 0.0
  %242 = vmatpush1.msra.mxu0 0.0
  %243 = vmatprep.subr.mxu0 0.0
  %244 = vmatpush1.msra.mxu0 0.0
  %245 = vmatprep.subr.mxu0 0.0
  %246 = vmatpush1.msra.mxu0 0.0
  %247 = vmatprep.subr.mxu0 0.0
  %248 = vmatpush1.msra.mxu0 0.0
  %249 = vmatprep.subr.mxu0 0.0
  %250 = vmatpush1.msra.mxu0 0.0
  %251 = vmatprep.subr.mxu0 0.0
  %252 = vmatpush1.msra.mxu0 0.0
  %253 = vmatprep.subr.mxu0 0.0
  %254 = vmatpush1.msra.mxu0 0.0
  %255 = vmatprep.subr.mxu0 0.0
  %256 = vmatpush1.msra.mxu0 0.0
  %257 = vmatprep.mubr.f32.mxu0 0.0
  %v258 = vand.u32 %v94, 4294901760
  %v259 = vsub.f32 %v94, %v258
  %v260 = vand.u32 %v259, 4294901760
  %v261 = vsub.f32 %v259, %v260
  %v262 = vand.u32 %v261, 4294901760
  %263 = vmatmul.mubr.f32.gmra.mrb[0].mxu0 %v262
  %v264 = vpop.f32.mrb[0].mxu0
  %v265 = vadd.f32 0.0, %v264
  %v266 = vpop.f32.mrb[0].mxu0
  %267 = vmatprep.mubr.f32.mxu0 0.0
  %v268 = vand.u32 %v97, 4294901760
  %v269 = vsub.f32 %v97, %v268
  %v270 = vand.u32 %v269, 4294901760
  %v271 = vsub.f32 %v269, %v270
  %v272 = vand.u32 %v271, 4294901760
  %273 = vmatmul.mubr.f32.gmra.mrb[0].mxu0 %v272
  %v274 = vpop.f32.mrb[0].mxu0
  %v275 = vadd.f32 0.0, %v274
  %v276 = vpop.f32.mrb[0].mxu0
  %277 = vmatprep.mubr.f32.mxu0 0.0
  %v278 = vand.u32 %v100, 4294901760
  %v279 = vsub.f32 %v100, %v278
  %v280 = vand.u32 %v279, 4294901760
  %v281 = vsub.f32 %v279, %v280
  %v282 = vand.u32 %v281, 4294901760
  %283 = vmatmul.mubr.f32.gmra.mrb[0].mxu0 %v282
  %v284 = vpop.f32.mrb[0].mxu0
  %v285 = vadd.f32 0.0, %v284
  %v286 = vpop.f32.mrb[0].mxu0
  %287 = vmatprep.mubr.f32.mxu0 0.0
  %v288 = vand.u32 %v103, 4294901760
  %v289 = vsub.f32 %v103, %v288
  %v290 = vand.u32 %v289, 4294901760
  %v291 = vsub.f32 %v289, %v290
  %v292 = vand.u32 %v291, 4294901760
  %293 = vmatmul.mubr.f32.gmra.mrb[0].mxu0 %v292
  %v294 = vpop.f32.mrb[0].mxu0
  %v295 = vadd.f32 0.0, %v294
  %v296 = vpop.f32.mrb[0].mxu0
  %297 = vmatprep.mubr.f32.mxu0 0.0
  %v298 = vand.u32 %v106, 4294901760
  %v299 = vsub.f32 %v106, %v298
  %v300 = vand.u32 %v299, 4294901760
  %v301 = vsub.f32 %v299, %v300
  %v302 = vand.u32 %v301, 4294901760
  %303 = vmatmul.mubr.f32.gmra.mrb[0].mxu0 %v302
  %v304 = vpop.f32.mrb[0].mxu0
  %v305 = vadd.f32 0.0, %v304
  %v306 = vpop.f32.mrb[0].mxu0
  %307 = vmatprep.mubr.f32.mxu0 0.0
  %v308 = vand.u32 %v109, 4294901760
  %v309 = vsub.f32 %v109, %v308
  %v310 = vand.u32 %v309, 4294901760
  %v311 = vsub.f32 %v309, %v310
  %v312 = vand.u32 %v311, 4294901760
  %313 = vmatmul.mubr.f32.gmra.mrb[0].mxu0 %v312
  %v314 = vpop.f32.mrb[0].mxu0
  %v315 = vadd.f32 0.0, %v314
  %v316 = vpop.f32.mrb[0].mxu0
  %317 = vmatprep.mubr.f32.mxu0 0.0
  %v318 = vand.u32 %v112, 4294901760
  %v319 = vsub.f32 %v112, %v318
  %v320 = vand.u32 %v319, 4294901760
  %v321 = vsub.f32 %v319, %v320
  %v322 = vand.u32 %v321, 4294901760
  %323 = vmatmul.mubr.f32.gmra.mrb[0].mxu0 %v322
  %v324 = vpop.f32.mrb[0].mxu0
  %v325 = vadd.f32 0.0, %v324
  %v326 = vpop.f32.mrb[0].mxu0
  %327 = vmatprep.mubr.f32.mxu0 0.0
  %v328 = vand.u32 %v115, 4294901760
  %v329 = vsub.f32 %v115, %v328
  %v330 = vand.u32 %v329, 4294901760
  %v331 = vsub.f32 %v329, %v330
  %v332 = vand.u32 %v331, 4294901760
  %333 = vmatmul.mubr.f32.gmra.mrb[0].mxu0 %v332
  %v334 = vpop.f32.mrb[0].mxu0
  %v335 = vadd.f32 0.0, %v334
  %v336 = vpop.f32.mrb[0].mxu0
  %337 = vmatprep.mubr.f32.mxu0 0.0
  %v338 = vand.u32 %v118, 4294901760
  %v339 = vsub.f32 %v118, %v338
  %v340 = vand.u32 %v339, 4294901760
  %v341 = vsub.f32 %v339, %v340
  %v342 = vand.u32 %v341, 4294901760
  %343 = vmatmul.mubr.f32.gmra.mrb[0].mxu0 %v342
  %v344 = vpop.f32.mrb[0].mxu0
  %v345 = vadd.f32 0.0, %v344
  %v346 = vpop.f32.mrb[0].mxu0
  %347 = vmatprep.mubr.f32.mxu0 0.0
  %v348 = vand.u32 %v121, 4294901760
  %v349 = vsub.f32 %v121, %v348
  %v350 = vand.u32 %v349, 4294901760
  %v351 = vsub.f32 %v349, %v350
  %v352 = vand.u32 %v351, 4294901760
  %353 = vmatmul.mubr.f32.gmra.mrb[0].mxu0 %v352
  %v354 = vpop.f32.mrb[0].mxu0
  %v355 = vadd.f32 0.0, %v354
  %v356 = vpop.f32.mrb[0].mxu0
  %357 = vmatprep.mubr.f32.mxu0 0.0
  %v358 = vand.u32 %v124, 4294901760
  %v359 = vsub.f32 %v124, %v358
  %v360 = vand.u32 %v359, 4294901760
  %v361 = vsub.f32 %v359, %v360
  %v362 = vand.u32 %v361, 4294901760
  %363 = vmatmul.mubr.f32.gmra.mrb[0].mxu0 %v362
  %v364 = vpop.f32.mrb[0].mxu0
  %v365 = vadd.f32 0.0, %v364
  %v366 = vpop.f32.mrb[0].mxu0
  %367 = vmatprep.mubr.f32.mxu0 0.0
  %v368 = vand.u32 %v127, 4294901760
  %v369 = vsub.f32 %v127, %v368
  %v370 = vand.u32 %v369, 4294901760
  %v371 = vsub.f32 %v369, %v370
  %v372 = vand.u32 %v371, 4294901760
  %373 = vmatmul.mubr.f32.gmra.mrb[0].mxu0 %v372
  %v374 = vpop.f32.mrb[0].mxu0
  %v375 = vadd.f32 0.0, %v374
  %v376 = vpop.f32.mrb[0].mxu0
  %377 = vmatprep.mubr.f32.mxu0 0.0
  %v378 = vand.u32 %v130, 4294901760
  %v379 = vsub.f32 %v130, %v378
  %v380 = vand.u32 %v379, 4294901760
  %v381 = vsub.f32 %v379, %v380
  %v382 = vand.u32 %v381, 4294901760
  %383 = vmatmul.mubr.f32.gmra.mrb[0].mxu0 %v382
  %v384 = vpop.f32.mrb[0].mxu0
  %v385 = vadd.f32 0.0, %v384
  %v386 = vpop.f32.mrb[0].mxu0
  %387 = vmatprep.mubr.f32.mxu0 0.0
  %v388 = vand.u32 %v133, 4294901760
  %v389 = vsub.f32 %v133, %v388
  %v390 = vand.u32 %v389, 4294901760
  %v391 = vsub.f32 %v389, %v390
  %v392 = vand.u32 %v391, 4294901760
  %393 = vmatmul.mubr.f32.gmra.mrb[0].mxu0 %v392
  %v394 = vpop.f32.mrb[0].mxu0
  %v395 = vadd.f32 0.0, %v394
  %v396 = vpop.f32.mrb[0].mxu0
  %397 = vmatprep.mubr.f32.mxu0 0.0
  %v398 = vand.u32 %v136, 4294901760
  %v399 = vsub.f32 %v136, %v398
  %v400 = vand.u32 %v399, 4294901760
  %v401 = vsub.f32 %v399, %v400
  %v402 = vand.u32 %v401, 4294901760
  %403 = vmatmul.mubr.f32.gmra.mrb[0].mxu0 %v402
  %v404 = vpop.f32.mrb[0].mxu0
  %v405 = vadd.f32 0.0, %v404
  %v406 = vpop.f32.mrb[0].mxu0
  %407 = vmatprep.mubr.f32.mxu0 0.0
  %v408 = vand.u32 %v139, 4294901760
  %v409 = vsub.f32 %v139, %v408
  %v410 = vand.u32 %v409, 4294901760
  %v411 = vsub.f32 %v409, %v410
  %v412 = vand.u32 %v411, 4294901760
  %413 = vmatmul.mubr.f32.gmra.mrb[0].mxu0 %v412
  %v414 = vpop.f32.mrb[0].mxu0
  %v415 = vadd.f32 0.0, %v414
  %v416 = vpop.f32.mrb[0].mxu0
  %417 = vmatprep.mubr.f32.mxu0 0.0
  %v418 = vand.u32 %v142, 4294901760
  %v419 = vsub.f32 %v142, %v418
  %v420 = vand.u32 %v419, 4294901760
  %v421 = vsub.f32 %v419, %v420
  %v422 = vand.u32 %v421, 4294901760
  %423 = vmatmul.mubr.f32.gmra.mrb[0].mxu0 %v422
  %v424 = vpop.f32.mrb[0].mxu0
  %v425 = vadd.f32 0.0, %v424
  %v426 = vpop.f32.mrb[0].mxu0
  %427 = vmatprep.mubr.f32.mxu0 0.0
  %v428 = vand.u32 %v145, 4294901760
  %v429 = vsub.f32 %v145, %v428
  %v430 = vand.u32 %v429, 4294901760
  %v431 = vsub.f32 %v429, %v430
  %v432 = vand.u32 %v431, 4294901760
  %433 = vmatmul.mubr.f32.gmra.mrb[0].mxu0 %v432
  %v434 = vpop.f32.mrb[0].mxu0
  %v435 = vadd.f32 0.0, %v434
  %v436 = vpop.f32.mrb[0].mxu0
  %437 = vmatprep.mubr.f32.mxu0 0.0
  %v438 = vand.u32 %v148, 4294901760
  %v439 = vsub.f32 %v148, %v438
  %v440 = vand.u32 %v439, 4294901760
  %v441 = vsub.f32 %v439, %v440
  %v442 = vand.u32 %v441, 4294901760
  %443 = vmatmul.mubr.f32.gmra.mrb[0].mxu0 %v442
  %v444 = vpop.f32.mrb[0].mxu0
  %v445 = vadd.f32 0.0, %v444
  %v446 = vpop.f32.mrb[0].mxu0
  %447 = vmatprep.mubr.f32.mxu0 0.0
  %v448 = vand.u32 %v151, 4294901760
  %v449 = vsub.f32 %v151, %v448
  %v450 = vand.u32 %v449, 4294901760
  %v451 = vsub.f32 %v449, %v450
  %v452 = vand.u32 %v451, 4294901760
  %453 = vmatmul.mubr.f32.gmra.mrb[0].mxu0 %v452
  %v454 = vpop.f32.mrb[0].mxu0
  %v455 = vadd.f32 0.0, %v454
  %v456 = vpop.f32.mrb[0].mxu0
  %457 = vmatprep.mubr.f32.mxu0 0.0
  %v458 = vand.u32 %v154, 4294901760
  %v459 = vsub.f32 %v154, %v458
  %v460 = vand.u32 %v459, 4294901760
  %v461 = vsub.f32 %v459, %v460
  %v462 = vand.u32 %v461, 4294901760
  %463 = vmatmul.mubr.f32.gmra.mrb[0].mxu0 %v462
  %v464 = vpop.f32.mrb[0].mxu0
  %v465 = vadd.f32 0.0, %v464
  %v466 = vpop.f32.mrb[0].mxu0
  %467 = vmatprep.mubr.f32.mxu0 0.0
  %v468 = vand.u32 %v157, 4294901760
  %v469 = vsub.f32 %v157, %v468
  %v470 = vand.u32 %v469, 4294901760
  %v471 = vsub.f32 %v469, %v470
  %v472 = vand.u32 %v471, 4294901760
  %473 = vmatmul.mubr.f32.gmra.mrb[0].mxu0 %v472
  %v474 = vpop.f32.mrb[0].mxu0
  %v475 = vadd.f32 0.0, %v474
  %v476 = vpop.f32.mrb[0].mxu0
  %477 = vmatprep.mubr.f32.mxu0 0.0
  %v478 = vand.u32 %v160, 4294901760
  %v479 = vsub.f32 %v160, %v478
  %v480 = vand.u32 %v479, 4294901760
  %v481 = vsub.f32 %v479, %v480
  %v482 = vand.u32 %v481, 4294901760
  %483 = vmatmul.mubr.f32.gmra.mrb[0].mxu0 %v482
  %v484 = vpop.f32.mrb[0].mxu0
  %v485 = vadd.f32 0.0, %v484
  %v486 = vpop.f32.mrb[0].mxu0
  %487 = vmatprep.mubr.f32.mxu0 0.0
  %v488 = vand.u32 %v163, 4294901760
  %v489 = vsub.f32 %v163, %v488
  %v490 = vand.u32 %v489, 4294901760
  %v491 = vsub.f32 %v489, %v490
  %v492 = vand.u32 %v491, 4294901760
  %493 = vmatmul.mubr.f32.gmra.mrb[0].mxu0 %v492
  %v494 = vpop.f32.mrb[0].mxu0
  %v495 = vadd.f32 0.0, %v494
  %v496 = vpop.f32.mrb[0].mxu0
  %497 = vmatprep.mubr.f32.mxu0 0.0
  %v498 = vand.u32 %v166, 4294901760
  %v499 = vsub.f32 %v166, %v498
  %v500 = vand.u32 %v499, 4294901760
  %v501 = vsub.f32 %v499, %v500
  %v502 = vand.u32 %v501, 4294901760
  %503 = vmatmul.mubr.f32.gmra.mrb[0].mxu0 %v502
  %v504 = vpop.f32.mrb[0].mxu0
  %v505 = vadd.f32 0.0, %v504
  %v506 = vpop.f32.mrb[0].mxu0
  %507 = vmatprep.mubr.f32.mxu0 0.0
  %v508 = vand.u32 %v169, 4294901760
  %v509 = vsub.f32 %v169, %v508
  %v510 = vand.u32 %v509, 4294901760
  %v511 = vsub.f32 %v509, %v510
  %v512 = vand.u32 %v511, 4294901760
  %513 = vmatmul.mubr.f32.gmra.mrb[0].mxu0 %v512
  %v514 = vpop.f32.mrb[0].mxu0
  %v515 = vadd.f32 0.0, %v514
  %v516 = vpop.f32.mrb[0].mxu0
  %517 = vmatprep.mubr.f32.mxu0 0.0
  %v518 = vand.u32 %v172, 4294901760
  %v519 = vsub.f32 %v172, %v518
  %v520 = vand.u32 %v519, 4294901760
  %v521 = vsub.f32 %v519, %v520
  %v522 = vand.u32 %v521, 4294901760
  %523 = vmatmul.mubr.f32.gmra.mrb[0].mxu0 %v522
  %v524 = vpop.f32.mrb[0].mxu0
  %v525 = vadd.f32 0.0, %v524
  %v526 = vpop.f32.mrb[0].mxu0
  %527 = vmatprep.mubr.f32.mxu0 0.0
  %v528 = vand.u32 %v175, 4294901760
  %v529 = vsub.f32 %v175, %v528
  %v530 = vand.u32 %v529, 4294901760
  %v531 = vsub.f32 %v529, %v530
  %v532 = vand.u32 %v531, 4294901760
  %533 = vmatmul.mubr.f32.gmra.mrb[0].mxu0 %v532
  %v534 = vpop.f32.mrb[0].mxu0
  %v535 = vadd.f32 0.0, %v534
  %v536 = vpop.f32.mrb[0].mxu0
  %537 = vmatprep.mubr.f32.mxu0 0.0
  %v538 = vand.u32 %v178, 4294901760
  %v539 = vsub.f32 %v178, %v538
  %v540 = vand.u32 %v539, 4294901760
  %v541 = vsub.f32 %v539, %v540
  %v542 = vand.u32 %v541, 4294901760
  %543 = vmatmul.mubr.f32.gmra.mrb[0].mxu0 %v542
  %v544 = vpop.f32.mrb[0].mxu0
  %v545 = vadd.f32 0.0, %v544
  %v546 = vpop.f32.mrb[0].mxu0
  %547 = vmatprep.mubr.f32.mxu0 0.0
  %v548 = vand.u32 %v181, 4294901760
  %v549 = vsub.f32 %v181, %v548
  %v550 = vand.u32 %v549, 4294901760
  %v551 = vsub.f32 %v549, %v550
  %v552 = vand.u32 %v551, 4294901760
  %553 = vmatmul.mubr.f32.gmra.mrb[0].mxu0 %v552
  %v554 = vpop.f32.mrb[0].mxu0
  %v555 = vadd.f32 0.0, %v554
  %v556 = vpop.f32.mrb[0].mxu0
  %557 = vmatprep.mubr.f32.mxu0 0.0
  %v558 = vand.u32 %v184, 4294901760
  %v559 = vsub.f32 %v184, %v558
  %v560 = vand.u32 %v559, 4294901760
  %v561 = vsub.f32 %v559, %v560
  %v562 = vand.u32 %v561, 4294901760
  %563 = vmatmul.mubr.f32.gmra.mrb[0].mxu0 %v562
  %v564 = vpop.f32.mrb[0].mxu0
  %v565 = vadd.f32 0.0, %v564
  %v566 = vpop.f32.mrb[0].mxu0
  %567 = vmatprep.mubr.f32.mxu0 0.0
  %v568 = vand.u32 %v187, 4294901760
  %v569 = vsub.f32 %v187, %v568
  %v570 = vand.u32 %v569, 4294901760
  %v571 = vsub.f32 %v569, %v570
  %v572 = vand.u32 %v571, 4294901760
  %573 = vmatmul.mubr.f32.gmra.mrb[0].mxu0 %v572
  %v574 = vpop.f32.mrb[0].mxu0
  %v575 = vadd.f32 0.0, %v574
  %v576 = vpop.f32.mrb[0].mxu0
  %577 = vdwg.mxu0
  %578 = vmatprep.subr.mxu0 0.0
  %v579 = vand.u32 %v88, 4294901760
  %v580 = vsub.f32 %v88, %v579
  %v581 = vand.u32 %v580, 4294901760
  %v582 = vsub.f32 %v580, %v581
  %v583 = vand.u32 %v582, 4294901760
  %584 = vmatpush1.msra.mxu0 %v583
  %585 = vmatprep.subr.mxu0 0.0
  %v586 = vand.u32 %v89, 4294901760
  %v587 = vsub.f32 %v89, %v586
  %v588 = vand.u32 %v587, 4294901760
  %v589 = vsub.f32 %v587, %v588
  %v590 = vand.u32 %v589, 4294901760
  %591 = vmatpush1.msra.mxu0 %v590
  %592 = vmatprep.subr.mxu0 0.0
  %v593 = vand.u32 %v90, 4294901760
  %v594 = vsub.f32 %v90, %v593
  %v595 = vand.u32 %v594, 4294901760
  %v596 = vsub.f32 %v594, %v595
  %v597 = vand.u32 %v596, 4294901760
  %598 = vmatpush1.msra.mxu0 %v597
  %599 = vmatprep.subr.mxu0 0.0
  %v600 = vand.u32 %v91, 4294901760
  %v601 = vsub.f32 %v91, %v600
  %v602 = vand.u32 %v601, 4294901760
  %v603 = vsub.f32 %v601, %v602
  %v604 = vand.u32 %v603, 4294901760
  %605 = vmatpush1.msra.mxu0 %v604
  %606 = vmatprep.subr.mxu0 0.0
  %607 = vmatpush1.msra.mxu0 0.0
  %608 = vmatprep.subr.mxu0 0.0
  %609 = vmatpush1.msra.mxu0 0.0
  %610 = vmatprep.subr.mxu0 0.0
  %611 = vmatpush1.msra.mxu0 0.0
  %612 = vmatprep.subr.mxu0 0.0
  %613 = vmatpush1.msra.mxu0 0.0
  %614 = vmatprep.subr.mxu0 0.0
  %615 = vmatpush1.msra.mxu0 0.0
  %616 = vmatprep.subr.mxu0 0.0
  %617 = vmatpush1.msra.mxu0 0.0
  %618 = vmatprep.subr.mxu0 0.0
  %619 = vmatpush1.msra.mxu0 0.0
  %620 = vmatprep.subr.mxu0 0.0
  %621 = vmatpush1.msra.mxu0 0.0
  %622 = vmatprep.subr.mxu0 0.0
  %623 = vmatpush1.msra.mxu0 0.0
  %624 = vmatprep.subr.mxu0 0.0
  %625 = vmatpush1.msra.mxu0 0.0
  %626 = vmatprep.subr.mxu0 0.0
  %627 = vmatpush1.msra.mxu0 0.0
  %628 = vmatprep.subr.mxu0 0.0
  %629 = vmatpush1.msra.mxu0 0.0
  %630 = vmatprep.subr.mxu0 0.0
  %631 = vmatpush1.msra.mxu0 0.0
  %632 = vmatprep.subr.mxu0 0.0
  %633 = vmatpush1.msra.mxu0 0.0
  %634 = vmatprep.subr.mxu0 0.0
  %635 = vmatpush1.msra.mxu0 0.0
  %636 = vmatprep.subr.mxu0 0.0
  %637 = vmatpush1.msra.mxu0 0.0
  %638 = vmatprep.subr.mxu0 0.0
  %639 = vmatpush1.msra.mxu0 0.0
  %640 = vmatprep.subr.mxu0 0.0
  %641 = vmatpush1.msra.mxu0 0.0
  %642 = vmatprep.subr.mxu0 0.0
  %643 = vmatpush1.msra.mxu0 0.0
  %644 = vmatprep.subr.mxu0 0.0
  %645 = vmatpush1.msra.mxu0 0.0
  %646 = vmatprep.subr.mxu0 0.0
  %647 = vmatpush1.msra.mxu0 0.0
  %648 = vmatprep.subr.mxu0 0.0
  %649 = vmatpush1.msra.mxu0 0.0
  %650 = vmatprep.subr.mxu0 0.0
  %651 = vmatpush1.msra.mxu0 0.0
  %652 = vmatprep.subr.mxu0 0.0
  %653 = vmatpush1.msra.mxu0 0.0
  %654 = vmatprep.subr.mxu0 0.0
  %655 = vmatpush1.msra.mxu0 0.0
  %656 = vmatprep.subr.mxu0 0.0
  %657 = vmatpush1.msra.mxu0 0.0
  %658 = vmatprep.subr.mxu0 0.0
  %659 = vmatpush1.msra.mxu0 0.0
  %660 = vmatprep.subr.mxu0 0.0
  %661 = vmatpush1.msra.mxu0 0.0
  %662 = vmatprep.mubr.f32.mxu0 0.0
  %v663 = vand.u32 %v94, 4294901760
  %664 = vmatmul.mubr.f32.gmra.mrb[0].mxu0 %v663
  %v665 = vpop.f32.mrb[0].mxu0
  %v666 = vadd.f32 %v265, %v665
  %v667 = vpop.f32.mrb[0].mxu0
  %668 = vmatprep.mubr.f32.mxu0 0.0
  %v669 = vand.u32 %v97, 4294901760
  %670 = vmatmul.mubr.f32.gmra.mrb[0].mxu0 %v669
  %v671 = vpop.f32.mrb[0].mxu0
  %v672 = vadd.f32 %v275, %v671
  %v673 = vpop.f32.mrb[0].mxu0
  %674 = vmatprep.mubr.f32.mxu0 0.0
  %v675 = vand.u32 %v100, 4294901760
  %676 = vmatmul.mubr.f32.gmra.mrb[0].mxu0 %v675
  %v677 = vpop.f32.mrb[0].mxu0
  %v678 = vadd.f32 %v285, %v677
  %v679 = vpop.f32.mrb[0].mxu0
  %680 = vmatprep.mubr.f32.mxu0 0.0
  %v681 = vand.u32 %v103, 4294901760
  %682 = vmatmul.mubr.f32.gmra.mrb[0].mxu0 %v681
  %v683 = vpop.f32.mrb[0].mxu0
  %v684 = vadd.f32 %v295, %v683
  %v685 = vpop.f32.mrb[0].mxu0
  %686 = vmatprep.mubr.f32.mxu0 0.0
  %v687 = vand.u32 %v106, 4294901760
  %688 = vmatmul.mubr.f32.gmra.mrb[0].mxu0 %v687
  %v689 = vpop.f32.mrb[0].mxu0
  %v690 = vadd.f32 %v305, %v689
  %v691 = vpop.f32.mrb[0].mxu0
  %692 = vmatprep.mubr.f32.mxu0 0.0
  %v693 = vand.u32 %v109, 4294901760
  %694 = vmatmul.mubr.f32.gmra.mrb[0].mxu0 %v693
  %v695 = vpop.f32.mrb[0].mxu0
  %v696 = vadd.f32 %v315, %v695
  %v697 = vpop.f32.mrb[0].mxu0
  %698 = vmatprep.mubr.f32.mxu0 0.0
  %v699 = vand.u32 %v112, 4294901760
  %700 = vmatmul.mubr.f32.gmra.mrb[0].mxu0 %v699
  %v701 = vpop.f32.mrb[0].mxu0
  %v702 = vadd.f32 %v325, %v701
  %v703 = vpop.f32.mrb[0].mxu0
  %704 = vmatprep.mubr.f32.mxu0 0.0
  %v705 = vand.u32 %v115, 4294901760
  %706 = vmatmul.mubr.f32.gmra.mrb[0].mxu0 %v705
  %v707 = vpop.f32.mrb[0].mxu0
  %v708 = vadd.f32 %v335, %v707
  %v709 = vpop.f32.mrb[0].mxu0
  %710 = vmatprep.mubr.f32.mxu0 0.0
  %v711 = vand.u32 %v118, 4294901760
  %712 = vmatmul.mubr.f32.gmra.mrb[0].mxu0 %v711
  %v713 = vpop.f32.mrb[0].mxu0
  %v714 = vadd.f32 %v345, %v713
  %v715 = vpop.f32.mrb[0].mxu0
  %716 = vmatprep.mubr.f32.mxu0 0.0
  %v717 = vand.u32 %v121, 4294901760
  %718 = vmatmul.mubr.f32.gmra.mrb[0].mxu0 %v717
  %v719 = vpop.f32.mrb[0].mxu0
  %v720 = vadd.f32 %v355, %v719
  %v721 = vpop.f32.mrb[0].mxu0
  %722 = vmatprep.mubr.f32.mxu0 0.0
  %v723 = vand.u32 %v124, 4294901760
  %724 = vmatmul.mubr.f32.gmra.mrb[0].mxu0 %v723
  %v725 = vpop.f32.mrb[0].mxu0
  %v726 = vadd.f32 %v365, %v725
  %v727 = vpop.f32.mrb[0].mxu0
  %728 = vmatprep.mubr.f32.mxu0 0.0
  %v729 = vand.u32 %v127, 4294901760
  %730 = vmatmul.mubr.f32.gmra.mrb[0].mxu0 %v729
  %v731 = vpop.f32.mrb[0].mxu0
  %v732 = vadd.f32 %v375, %v731
  %v733 = vpop.f32.mrb[0].mxu0
  %734 = vmatprep.mubr.f32.mxu0 0.0
  %v735 = vand.u32 %v130, 4294901760
  %736 = vmatmul.mubr.f32.gmra.mrb[0].mxu0 %v735
  %v737 = vpop.f32.mrb[0].mxu0
  %v738 = vadd.f32 %v385, %v737
  %v739 = vpop.f32.mrb[0].mxu0
  %740 = vmatprep.mubr.f32.mxu0 0.0
  %v741 = vand.u32 %v133, 4294901760
  %742 = vmatmul.mubr.f32.gmra.mrb[0].mxu0 %v741
  %v743 = vpop.f32.mrb[0].mxu0
  %v744 = vadd.f32 %v395, %v743
  %v745 = vpop.f32.mrb[0].mxu0
  %746 = vmatprep.mubr.f32.mxu0 0.0
  %v747 = vand.u32 %v136, 4294901760
  %748 = vmatmul.mubr.f32.gmra.mrb[0].mxu0 %v747
  %v749 = vpop.f32.mrb[0].mxu0
  %v750 = vadd.f32 %v405, %v749
  %v751 = vpop.f32.mrb[0].mxu0
  %752 = vmatprep.mubr.f32.mxu0 0.0
  %v753 = vand.u32 %v139, 4294901760
  %754 = vmatmul.mubr.f32.gmra.mrb[0].mxu0 %v753
  %v755 = vpop.f32.mrb[0].mxu0
  %v756 = vadd.f32 %v415, %v755
  %v757 = vpop.f32.mrb[0].mxu0
  %758 = vmatprep.mubr.f32.mxu0 0.0
  %v759 = vand.u32 %v142, 4294901760
  %760 = vmatmul.mubr.f32.gmra.mrb[0].mxu0 %v759
  %v761 = vpop.f32.mrb[0].mxu0
  %v762 = vadd.f32 %v425, %v761
  %v763 = vpop.f32.mrb[0].mxu0
  %764 = vmatprep.mubr.f32.mxu0 0.0
  %v765 = vand.u32 %v145, 4294901760
  %766 = vmatmul.mubr.f32.gmra.mrb[0].mxu0 %v765
  %v767 = vpop.f32.mrb[0].mxu0
  %v768 = vadd.f32 %v435, %v767
  %v769 = vpop.f32.mrb[0].mxu0
  %770 = vmatprep.mubr.f32.mxu0 0.0
  %v771 = vand.u32 %v148, 4294901760
  %772 = vmatmul.mubr.f32.gmra.mrb[0].mxu0 %v771
  %v773 = vpop.f32.mrb[0].mxu0
  %v774 = vadd.f32 %v445, %v773
  %v775 = vpop.f32.mrb[0].mxu0
  %776 = vmatprep.mubr.f32.mxu0 0.0
  %v777 = vand.u32 %v151, 4294901760
  %778 = vmatmul.mubr.f32.gmra.mrb[0].mxu0 %v777
  %v779 = vpop.f32.mrb[0].mxu0
  %v780 = vadd.f32 %v455, %v779
  %v781 = vpop.f32.mrb[0].mxu0
  %782 = vmatprep.mubr.f32.mxu0 0.0
  %v783 = vand.u32 %v154, 4294901760
  %784 = vmatmul.mubr.f32.gmra.mrb[0].mxu0 %v783
  %v785 = vpop.f32.mrb[0].mxu0
  %v786 = vadd.f32 %v465, %v785
  %v787 = vpop.f32.mrb[0].mxu0
  %788 = vmatprep.mubr.f32.mxu0 0.0
  %v789 = vand.u32 %v157, 4294901760
  %790 = vmatmul.mubr.f32.gmra.mrb[0].mxu0 %v789
  %v791 = vpop.f32.mrb[0].mxu0
  %v792 = vadd.f32 %v475, %v791
  %v793 = vpop.f32.mrb[0].mxu0
  %794 = vmatprep.mubr.f32.mxu0 0.0
  %v795 = vand.u32 %v160, 4294901760
  %796 = vmatmul.mubr.f32.gmra.mrb[0].mxu0 %v795
  %v797 = vpop.f32.mrb[0].mxu0
  %v798 = vadd.f32 %v485, %v797
  %v799 = vpop.f32.mrb[0].mxu0
  %800 = vmatprep.mubr.f32.mxu0 0.0
  %v801 = vand.u32 %v163, 4294901760
  %802 = vmatmul.mubr.f32.gmra.mrb[0].mxu0 %v801
  %v803 = vpop.f32.mrb[0].mxu0
  %v804 = vadd.f32 %v495, %v803
  %v805 = vpop.f32.mrb[0].mxu0
  %806 = vmatprep.mubr.f32.mxu0 0.0
  %v807 = vand.u32 %v166, 4294901760
  %808 = vmatmul.mubr.f32.gmra.mrb[0].mxu0 %v807
  %v809 = vpop.f32.mrb[0].mxu0
  %v810 = vadd.f32 %v505, %v809
  %v811 = vpop.f32.mrb[0].mxu0
  %812 = vmatprep.mubr.f32.mxu0 0.0
  %v813 = vand.u32 %v169, 4294901760
  %814 = vmatmul.mubr.f32.gmra.mrb[0].mxu0 %v813
  %v815 = vpop.f32.mrb[0].mxu0
  %v816 = vadd.f32 %v515, %v815
  %v817 = vpop.f32.mrb[0].mxu0
  %818 = vmatprep.mubr.f32.mxu0 0.0
  %v819 = vand.u32 %v172, 4294901760
  %820 = vmatmul.mubr.f32.gmra.mrb[0].mxu0 %v819
  %v821 = vpop.f32.mrb[0].mxu0
  %v822 = vadd.f32 %v525, %v821
  %v823 = vpop.f32.mrb[0].mxu0
  %824 = vmatprep.mubr.f32.mxu0 0.0
  %v825 = vand.u32 %v175, 4294901760
  %826 = vmatmul.mubr.f32.gmra.mrb[0].mxu0 %v825
  %v827 = vpop.f32.mrb[0].mxu0
  %v828 = vadd.f32 %v535, %v827
  %v829 = vpop.f32.mrb[0].mxu0
  %830 = vmatprep.mubr.f32.mxu0 0.0
  %v831 = vand.u32 %v178, 4294901760
  %832 = vmatmul.mubr.f32.gmra.mrb[0].mxu0 %v831
  %v833 = vpop.f32.mrb[0].mxu0
  %v834 = vadd.f32 %v545, %v833
  %v835 = vpop.f32.mrb[0].mxu0
  %836 = vmatprep.mubr.f32.mxu0 0.0
  %v837 = vand.u32 %v181, 4294901760
  %838 = vmatmul.mubr.f32.gmra.mrb[0].mxu0 %v837
  %v839 = vpop.f32.mrb[0].mxu0
  %v840 = vadd.f32 %v555, %v839
  %v841 = vpop.f32.mrb[0].mxu0
  %842 = vmatprep.mubr.f32.mxu0 0.0
  %v843 = vand.u32 %v184, 4294901760
  %844 = vmatmul.mubr.f32.gmra.mrb[0].mxu0 %v843
  %v845 = vpop.f32.mrb[0].mxu0
  %v846 = vadd.f32 %v565, %v845
  %v847 = vpop.f32.mrb[0].mxu0
  %848 = vmatprep.mubr.f32.mxu0 0.0
  %v849 = vand.u32 %v187, 4294901760
  %850 = vmatmul.mubr.f32.gmra.mrb[0].mxu0 %v849
  %v851 = vpop.f32.mrb[0].mxu0
  %v852 = vadd.f32 %v575, %v851
  %v853 = vpop.f32.mrb[0].mxu0
  %854 = vdwg.mxu0
  %855 = vmatprep.subr.mxu0 0.0
  %v856 = vand.u32 %v88, 4294901760
  %v857 = vsub.f32 %v88, %v856
  %858 = vmatpush1.msra.mxu0 %v857
  %859 = vmatprep.subr.mxu0 0.0
  %v860 = vand.u32 %v89, 4294901760
  %v861 = vsub.f32 %v89, %v860
  %862 = vmatpush1.msra.mxu0 %v861
  %863 = vmatprep.subr.mxu0 0.0
  %v864 = vand.u32 %v90, 4294901760
  %v865 = vsub.f32 %v90, %v864
  %866 = vmatpush1.msra.mxu0 %v865
  %867 = vmatprep.subr.mxu0 0.0
  %v868 = vand.u32 %v91, 4294901760
  %v869 = vsub.f32 %v91, %v868
  %870 = vmatpush1.msra.mxu0 %v869
  %871 = vmatprep.subr.mxu0 0.0
  %872 = vmatpush1.msra.mxu0 0.0
  %873 = vmatprep.subr.mxu0 0.0
  %874 = vmatpush1.msra.mxu0 0.0
  %875 = vmatprep.subr.mxu0 0.0
  %876 = vmatpush1.msra.mxu0 0.0
  %877 = vmatprep.subr.mxu0 0.0
  %878 = vmatpush1.msra.mxu0 0.0
  %879 = vmatprep.subr.mxu0 0.0
  %880 = vmatpush1.msra.mxu0 0.0
  %881 = vmatprep.subr.mxu0 0.0
  %882 = vmatpush1.msra.mxu0 0.0
  %883 = vmatprep.subr.mxu0 0.0
  %884 = vmatpush1.msra.mxu0 0.0
  %885 = vmatprep.subr.mxu0 0.0
  %886 = vmatpush1.msra.mxu0 0.0
  %887 = vmatprep.subr.mxu0 0.0
  %888 = vmatpush1.msra.mxu0 0.0
  %889 = vmatprep.subr.mxu0 0.0
  %890 = vmatpush1.msra.mxu0 0.0
  %891 = vmatprep.subr.mxu0 0.0
  %892 = vmatpush1.msra.mxu0 0.0
  %893 = vmatprep.subr.mxu0 0.0
  %894 = vmatpush1.msra.mxu0 0.0
  %895 = vmatprep.subr.mxu0 0.0
  %896 = vmatpush1.msra.mxu0 0.0
  %897 = vmatprep.subr.mxu0 0.0
  %898 = vmatpush1.msra.mxu0 0.0
  %899 = vmatprep.subr.mxu0 0.0
  %900 = vmatpush1.msra.mxu0 0.0
  %901 = vmatprep.subr.mxu0 0.0
  %902 = vmatpush1.msra.mxu0 0.0
  %903 = vmatprep.subr.mxu0 0.0
  %904 = vmatpush1.msra.mxu0 0.0
  %905 = vmatprep.subr.mxu0 0.0
  %906 = vmatpush1.msra.mxu0 0.0
  %907 = vmatprep.subr.mxu0 0.0
  %908 = vmatpush1.msra.mxu0 0.0
  %909 = vmatprep.subr.mxu0 0.0
  %910 = vmatpush1.msra.mxu0 0.0
  %911 = vmatprep.subr.mxu0 0.0
  %912 = vmatpush1.msra.mxu0 0.0
  %913 = vmatprep.subr.mxu0 0.0
  %914 = vmatpush1.msra.mxu0 0.0
  %915 = vmatprep.subr.mxu0 0.0
  %916 = vmatpush1.msra.mxu0 0.0
  %917 = vmatprep.subr.mxu0 0.0
  %918 = vmatpush1.msra.mxu0 0.0
  %919 = vmatprep.subr.mxu0 0.0
  %920 = vmatpush1.msra.mxu0 0.0
  %921 = vmatprep.subr.mxu0 0.0
  %922 = vmatpush1.msra.mxu0 0.0
  %923 = vmatprep.subr.mxu0 0.0
  %924 = vmatpush1.msra.mxu0 0.0
  %925 = vmatprep.subr.mxu0 0.0
  %926 = vmatpush1.msra.mxu0 0.0
  %927 = vmatprep.mubr.f32.mxu0 0.0
  %v928 = vand.u32 %v94, 4294901760
  %v929 = vsub.f32 %v94, %v928
  %930 = vmatmul.mubr.f32.gmra.mrb[0].mxu0 %v929
  %v931 = vpop.f32.mrb[0].mxu0
  %v932 = vadd.f32 %v666, %v931
  %v933 = vpop.f32.mrb[0].mxu0
  %934 = vmatprep.mubr.f32.mxu0 0.0
  %v935 = vand.u32 %v97, 4294901760
  %v936 = vsub.f32 %v97, %v935
  %937 = vmatmul.mubr.f32.gmra.mrb[0].mxu0 %v936
  %v938 = vpop.f32.mrb[0].mxu0
  %v939 = vadd.f32 %v672, %v938
  %v940 = vpop.f32.mrb[0].mxu0
  %941 = vmatprep.mubr.f32.mxu0 0.0
  %v942 = vand.u32 %v100, 4294901760
  %v943 = vsub.f32 %v100, %v942
  %944 = vmatmul.mubr.f32.gmra.mrb[0].mxu0 %v943
  %v945 = vpop.f32.mrb[0].mxu0
  %v946 = vadd.f32 %v678, %v945
  %v947 = vpop.f32.mrb[0].mxu0
  %948 = vmatprep.mubr.f32.mxu0 0.0
  %v949 = vand.u32 %v103, 4294901760
  %v950 = vsub.f32 %v103, %v949
  %951 = vmatmul.mubr.f32.gmra.mrb[0].mxu0 %v950
  %v952 = vpop.f32.mrb[0].mxu0
  %v953 = vadd.f32 %v684, %v952
  %v954 = vpop.f32.mrb[0].mxu0
  %955 = vmatprep.mubr.f32.mxu0 0.0
  %v956 = vand.u32 %v106, 4294901760
  %v957 = vsub.f32 %v106, %v956
  %958 = vmatmul.mubr.f32.gmra.mrb[0].mxu0 %v957
  %v959 = vpop.f32.mrb[0].mxu0
  %v960 = vadd.f32 %v690, %v959
  %v961 = vpop.f32.mrb[0].mxu0
  %962 = vmatprep.mubr.f32.mxu0 0.0
  %v963 = vand.u32 %v109, 4294901760
  %v964 = vsub.f32 %v109, %v963
  %965 = vmatmul.mubr.f32.gmra.mrb[0].mxu0 %v964
  %v966 = vpop.f32.mrb[0].mxu0
  %v967 = vadd.f32 %v696, %v966
  %v968 = vpop.f32.mrb[0].mxu0
  %969 = vmatprep.mubr.f32.mxu0 0.0
  %v970 = vand.u32 %v112, 4294901760
  %v971 = vsub.f32 %v112, %v970
  %972 = vmatmul.mubr.f32.gmra.mrb[0].mxu0 %v971
  %v973 = vpop.f32.mrb[0].mxu0
  %v974 = vadd.f32 %v702, %v973
  %v975 = vpop.f32.mrb[0].mxu0
  %976 = vmatprep.mubr.f32.mxu0 0.0
  %v977 = vand.u32 %v115, 4294901760
  %v978 = vsub.f32 %v115, %v977
  %979 = vmatmul.mubr.f32.gmra.mrb[0].mxu0 %v978
  %v980 = vpop.f32.mrb[0].mxu0
  %v981 = vadd.f32 %v708, %v980
  %v982 = vpop.f32.mrb[0].mxu0
  %983 = vmatprep.mubr.f32.mxu0 0.0
  %v984 = vand.u32 %v118, 4294901760
  %v985 = vsub.f32 %v118, %v984
  %986 = vmatmul.mubr.f32.gmra.mrb[0].mxu0 %v985
  %v987 = vpop.f32.mrb[0].mxu0
  %v988 = vadd.f32 %v714, %v987
  %v989 = vpop.f32.mrb[0].mxu0
  %990 = vmatprep.mubr.f32.mxu0 0.0
  %v991 = vand.u32 %v121, 4294901760
  %v992 = vsub.f32 %v121, %v991
  %993 = vmatmul.mubr.f32.gmra.mrb[0].mxu0 %v992
  %v994 = vpop.f32.mrb[0].mxu0
  %v995 = vadd.f32 %v720, %v994
  %v996 = vpop.f32.mrb[0].mxu0
  %997 = vmatprep.mubr.f32.mxu0 0.0
  %v998 = vand.u32 %v124, 4294901760
  %v999 = vsub.f32 %v124, %v998
  %1000 = vmatmul.mubr.f32.gmra.mrb[0].mxu0 %v999
  %v1001 = vpop.f32.mrb[0].mxu0
  %v1002 = vadd.f32 %v726, %v1001
  %v1003 = vpop.f32.mrb[0].mxu0
  %1004 = vmatprep.mubr.f32.mxu0 0.0
  %v1005 = vand.u32 %v127, 4294901760
  %v1006 = vsub.f32 %v127, %v1005
  %1007 = vmatmul.mubr.f32.gmra.mrb[0].mxu0 %v1006
  %v1008 = vpop.f32.mrb[0].mxu0
  %v1009 = vadd.f32 %v732, %v1008
  %v1010 = vpop.f32.mrb[0].mxu0
  %1011 = vmatprep.mubr.f32.mxu0 0.0
  %v1012 = vand.u32 %v130, 4294901760
  %v1013 = vsub.f32 %v130, %v1012
  %1014 = vmatmul.mubr.f32.gmra.mrb[0].mxu0 %v1013
  %v1015 = vpop.f32.mrb[0].mxu0
  %v1016 = vadd.f32 %v738, %v1015
  %v1017 = vpop.f32.mrb[0].mxu0
  %1018 = vmatprep.mubr.f32.mxu0 0.0
  %v1019 = vand.u32 %v133, 4294901760
  %v1020 = vsub.f32 %v133, %v1019
  %1021 = vmatmul.mubr.f32.gmra.mrb[0].mxu0 %v1020
  %v1022 = vpop.f32.mrb[0].mxu0
  %v1023 = vadd.f32 %v744, %v1022
  %v1024 = vpop.f32.mrb[0].mxu0
  %1025 = vmatprep.mubr.f32.mxu0 0.0
  %v1026 = vand.u32 %v136, 4294901760
  %v1027 = vsub.f32 %v136, %v1026
  %1028 = vmatmul.mubr.f32.gmra.mrb[0].mxu0 %v1027
  %v1029 = vpop.f32.mrb[0].mxu0
  %v1030 = vadd.f32 %v750, %v1029
  %v1031 = vpop.f32.mrb[0].mxu0
  %1032 = vmatprep.mubr.f32.mxu0 0.0
  %v1033 = vand.u32 %v139, 4294901760
  %v1034 = vsub.f32 %v139, %v1033
  %1035 = vmatmul.mubr.f32.gmra.mrb[0].mxu0 %v1034
  %v1036 = vpop.f32.mrb[0].mxu0
  %v1037 = vadd.f32 %v756, %v1036
  %v1038 = vpop.f32.mrb[0].mxu0
  %1039 = vmatprep.mubr.f32.mxu0 0.0
  %v1040 = vand.u32 %v142, 4294901760
  %v1041 = vsub.f32 %v142, %v1040
  %1042 = vmatmul.mubr.f32.gmra.mrb[0].mxu0 %v1041
  %v1043 = vpop.f32.mrb[0].mxu0
  %v1044 = vadd.f32 %v762, %v1043
  %v1045 = vpop.f32.mrb[0].mxu0
  %1046 = vmatprep.mubr.f32.mxu0 0.0
  %v1047 = vand.u32 %v145, 4294901760
  %v1048 = vsub.f32 %v145, %v1047
  %1049 = vmatmul.mubr.f32.gmra.mrb[0].mxu0 %v1048
  %v1050 = vpop.f32.mrb[0].mxu0
  %v1051 = vadd.f32 %v768, %v1050
  %v1052 = vpop.f32.mrb[0].mxu0
  %1053 = vmatprep.mubr.f32.mxu0 0.0
  %v1054 = vand.u32 %v148, 4294901760
  %v1055 = vsub.f32 %v148, %v1054
  %1056 = vmatmul.mubr.f32.gmra.mrb[0].mxu0 %v1055
  %v1057 = vpop.f32.mrb[0].mxu0
  %v1058 = vadd.f32 %v774, %v1057
  %v1059 = vpop.f32.mrb[0].mxu0
  %1060 = vmatprep.mubr.f32.mxu0 0.0
  %v1061 = vand.u32 %v151, 4294901760
  %v1062 = vsub.f32 %v151, %v1061
  %1063 = vmatmul.mubr.f32.gmra.mrb[0].mxu0 %v1062
  %v1064 = vpop.f32.mrb[0].mxu0
  %v1065 = vadd.f32 %v780, %v1064
  %v1066 = vpop.f32.mrb[0].mxu0
  %1067 = vmatprep.mubr.f32.mxu0 0.0
  %v1068 = vand.u32 %v154, 4294901760
  %v1069 = vsub.f32 %v154, %v1068
  %1070 = vmatmul.mubr.f32.gmra.mrb[0].mxu0 %v1069
  %v1071 = vpop.f32.mrb[0].mxu0
  %v1072 = vadd.f32 %v786, %v1071
  %v1073 = vpop.f32.mrb[0].mxu0
  %1074 = vmatprep.mubr.f32.mxu0 0.0
  %v1075 = vand.u32 %v157, 4294901760
  %v1076 = vsub.f32 %v157, %v1075
  %1077 = vmatmul.mubr.f32.gmra.mrb[0].mxu0 %v1076
  %v1078 = vpop.f32.mrb[0].mxu0
  %v1079 = vadd.f32 %v792, %v1078
  %v1080 = vpop.f32.mrb[0].mxu0
  %1081 = vmatprep.mubr.f32.mxu0 0.0
  %v1082 = vand.u32 %v160, 4294901760
  %v1083 = vsub.f32 %v160, %v1082
  %1084 = vmatmul.mubr.f32.gmra.mrb[0].mxu0 %v1083
  %v1085 = vpop.f32.mrb[0].mxu0
  %v1086 = vadd.f32 %v798, %v1085
  %v1087 = vpop.f32.mrb[0].mxu0
  %1088 = vmatprep.mubr.f32.mxu0 0.0
  %v1089 = vand.u32 %v163, 4294901760
  %v1090 = vsub.f32 %v163, %v1089
  %1091 = vmatmul.mubr.f32.gmra.mrb[0].mxu0 %v1090
  %v1092 = vpop.f32.mrb[0].mxu0
  %v1093 = vadd.f32 %v804, %v1092
  %v1094 = vpop.f32.mrb[0].mxu0
  %1095 = vmatprep.mubr.f32.mxu0 0.0
  %v1096 = vand.u32 %v166, 4294901760
  %v1097 = vsub.f32 %v166, %v1096
  %1098 = vmatmul.mubr.f32.gmra.mrb[0].mxu0 %v1097
  %v1099 = vpop.f32.mrb[0].mxu0
  %v1100 = vadd.f32 %v810, %v1099
  %v1101 = vpop.f32.mrb[0].mxu0
  %1102 = vmatprep.mubr.f32.mxu0 0.0
  %v1103 = vand.u32 %v169, 4294901760
  %v1104 = vsub.f32 %v169, %v1103
  %1105 = vmatmul.mubr.f32.gmra.mrb[0].mxu0 %v1104
  %v1106 = vpop.f32.mrb[0].mxu0
  %v1107 = vadd.f32 %v816, %v1106
  %v1108 = vpop.f32.mrb[0].mxu0
  %1109 = vmatprep.mubr.f32.mxu0 0.0
  %v1110 = vand.u32 %v172, 4294901760
  %v1111 = vsub.f32 %v172, %v1110
  %1112 = vmatmul.mubr.f32.gmra.mrb[0].mxu0 %v1111
  %v1113 = vpop.f32.mrb[0].mxu0
  %v1114 = vadd.f32 %v822, %v1113
  %v1115 = vpop.f32.mrb[0].mxu0
  %1116 = vmatprep.mubr.f32.mxu0 0.0
  %v1117 = vand.u32 %v175, 4294901760
  %v1118 = vsub.f32 %v175, %v1117
  %1119 = vmatmul.mubr.f32.gmra.mrb[0].mxu0 %v1118
  %v1120 = vpop.f32.mrb[0].mxu0
  %v1121 = vadd.f32 %v828, %v1120
  %v1122 = vpop.f32.mrb[0].mxu0
  %1123 = vmatprep.mubr.f32.mxu0 0.0
  %v1124 = vand.u32 %v178, 4294901760
  %v1125 = vsub.f32 %v178, %v1124
  %1126 = vmatmul.mubr.f32.gmra.mrb[0].mxu0 %v1125
  %v1127 = vpop.f32.mrb[0].mxu0
  %v1128 = vadd.f32 %v834, %v1127
  %v1129 = vpop.f32.mrb[0].mxu0
  %1130 = vmatprep.mubr.f32.mxu0 0.0
  %v1131 = vand.u32 %v181, 4294901760
  %v1132 = vsub.f32 %v181, %v1131
  %1133 = vmatmul.mubr.f32.gmra.mrb[0].mxu0 %v1132
  %v1134 = vpop.f32.mrb[0].mxu0
  %v1135 = vadd.f32 %v840, %v1134
  %v1136 = vpop.f32.mrb[0].mxu0
  %1137 = vmatprep.mubr.f32.mxu0 0.0
  %v1138 = vand.u32 %v184, 4294901760
  %v1139 = vsub.f32 %v184, %v1138
  %1140 = vmatmul.mubr.f32.gmra.mrb[0].mxu0 %v1139
  %v1141 = vpop.f32.mrb[0].mxu0
  %v1142 = vadd.f32 %v846, %v1141
  %v1143 = vpop.f32.mrb[0].mxu0
  %1144 = vmatprep.mubr.f32.mxu0 0.0
  %v1145 = vand.u32 %v187, 4294901760
  %v1146 = vsub.f32 %v187, %v1145
  %1147 = vmatmul.mubr.f32.gmra.mrb[0].mxu0 %v1146
  %v1148 = vpop.f32.mrb[0].mxu0
  %v1149 = vadd.f32 %v852, %v1148
  %v1150 = vpop.f32.mrb[0].mxu0
  %1151 = vdwg.mxu0
  %1152 = vmatprep.subr.mxu0 0.0
  %v1153 = vand.u32 %v88, 4294901760
  %1154 = vmatpush1.msra.mxu0 %v1153
  %1155 = vmatprep.subr.mxu0 0.0
  %v1156 = vand.u32 %v89, 4294901760
  %1157 = vmatpush1.msra.mxu0 %v1156
  %1158 = vmatprep.subr.mxu0 0.0
  %v1159 = vand.u32 %v90, 4294901760
  %1160 = vmatpush1.msra.mxu0 %v1159
  %1161 = vmatprep.subr.mxu0 0.0
  %v1162 = vand.u32 %v91, 4294901760
  %1163 = vmatpush1.msra.mxu0 %v1162
  %1164 = vmatprep.subr.mxu0 0.0
  %1165 = vmatpush1.msra.mxu0 0.0
  %1166 = vmatprep.subr.mxu0 0.0
  %1167 = vmatpush1.msra.mxu0 0.0
  %1168 = vmatprep.subr.mxu0 0.0
  %1169 = vmatpush1.msra.mxu0 0.0
  %1170 = vmatprep.subr.mxu0 0.0
  %1171 = vmatpush1.msra.mxu0 0.0
  %1172 = vmatprep.subr.mxu0 0.0
  %1173 = vmatpush1.msra.mxu0 0.0
  %1174 = vmatprep.subr.mxu0 0.0
  %1175 = vmatpush1.msra.mxu0 0.0
  %1176 = vmatprep.subr.mxu0 0.0
  %1177 = vmatpush1.msra.mxu0 0.0
  %1178 = vmatprep.subr.mxu0 0.0
  %1179 = vmatpush1.msra.mxu0 0.0
  %1180 = vmatprep.subr.mxu0 0.0
  %1181 = vmatpush1.msra.mxu0 0.0
  %1182 = vmatprep.subr.mxu0 0.0
  %1183 = vmatpush1.msra.mxu0 0.0
  %1184 = vmatprep.subr.mxu0 0.0
  %1185 = vmatpush1.msra.mxu0 0.0
  %1186 = vmatprep.subr.mxu0 0.0
  %1187 = vmatpush1.msra.mxu0 0.0
  %1188 = vmatprep.subr.mxu0 0.0
  %1189 = vmatpush1.msra.mxu0 0.0
  %1190 = vmatprep.subr.mxu0 0.0
  %1191 = vmatpush1.msra.mxu0 0.0
  %1192 = vmatprep.subr.mxu0 0.0
  %1193 = vmatpush1.msra.mxu0 0.0
  %1194 = vmatprep.subr.mxu0 0.0
  %1195 = vmatpush1.msra.mxu0 0.0
  %1196 = vmatprep.subr.mxu0 0.0
  %1197 = vmatpush1.msra.mxu0 0.0
  %1198 = vmatprep.subr.mxu0 0.0
  %1199 = vmatpush1.msra.mxu0 0.0
  %1200 = vmatprep.subr.mxu0 0.0
  %1201 = vmatpush1.msra.mxu0 0.0
  %1202 = vmatprep.subr.mxu0 0.0
  %1203 = vmatpush1.msra.mxu0 0.0
  %1204 = vmatprep.subr.mxu0 0.0
  %1205 = vmatpush1.msra.mxu0 0.0
  %1206 = vmatprep.subr.mxu0 0.0
  %1207 = vmatpush1.msra.mxu0 0.0
  %1208 = vmatprep.subr.mxu0 0.0
  %1209 = vmatpush1.msra.mxu0 0.0
  %1210 = vmatprep.subr.mxu0 0.0
  %1211 = vmatpush1.msra.mxu0 0.0
  %1212 = vmatprep.subr.mxu0 0.0
  %1213 = vmatpush1.msra.mxu0 0.0
  %1214 = vmatprep.subr.mxu0 0.0
  %1215 = vmatpush1.msra.mxu0 0.0
  %1216 = vmatprep.subr.mxu0 0.0
  %1217 = vmatpush1.msra.mxu0 0.0
  %1218 = vmatprep.subr.mxu0 0.0
  %1219 = vmatpush1.msra.mxu0 0.0
  %1220 = vmatprep.mubr.f32.mxu0 0.0
  %v1221 = vand.u32 %v94, 4294901760
  %v1222 = vsub.f32 %v94, %v1221
  %v1223 = vand.u32 %v1222, 4294901760
  %1224 = vmatmul.mubr.f32.gmra.mrb[0].mxu0 %v1223
  %v1225 = vpop.f32.mrb[0].mxu0
  %v1226 = vadd.f32 %v932, %v1225
  %v1227 = vpop.f32.mrb[0].mxu0
  %1228 = vmatprep.mubr.f32.mxu0 0.0
  %v1229 = vand.u32 %v97, 4294901760
  %v1230 = vsub.f32 %v97, %v1229
  %v1231 = vand.u32 %v1230, 4294901760
  %1232 = vmatmul.mubr.f32.gmra.mrb[0].mxu0 %v1231
  %v1233 = vpop.f32.mrb[0].mxu0
  %v1234 = vadd.f32 %v939, %v1233
  %v1235 = vpop.f32.mrb[0].mxu0
  %1236 = vmatprep.mubr.f32.mxu0 0.0
  %v1237 = vand.u32 %v100, 4294901760
  %v1238 = vsub.f32 %v100, %v1237
  %v1239 = vand.u32 %v1238, 4294901760
  %1240 = vmatmul.mubr.f32.gmra.mrb[0].mxu0 %v1239
  %v1241 = vpop.f32.mrb[0].mxu0
  %v1242 = vadd.f32 %v946, %v1241
  %v1243 = vpop.f32.mrb[0].mxu0
  %1244 = vmatprep.mubr.f32.mxu0 0.0
  %v1245 = vand.u32 %v103, 4294901760
  %v1246 = vsub.f32 %v103, %v1245
  %v1247 = vand.u32 %v1246, 4294901760
  %1248 = vmatmul.mubr.f32.gmra.mrb[0].mxu0 %v1247
  %v1249 = vpop.f32.mrb[0].mxu0
  %v1250 = vadd.f32 %v953, %v1249
  %v1251 = vpop.f32.mrb[0].mxu0
  %1252 = vmatprep.mubr.f32.mxu0 0.0
  %v1253 = vand.u32 %v106, 4294901760
  %v1254 = vsub.f32 %v106, %v1253
  %v1255 = vand.u32 %v1254, 4294901760
  %1256 = vmatmul.mubr.f32.gmra.mrb[0].mxu0 %v1255
  %v1257 = vpop.f32.mrb[0].mxu0
  %v1258 = vadd.f32 %v960, %v1257
  %v1259 = vpop.f32.mrb[0].mxu0
  %1260 = vmatprep.mubr.f32.mxu0 0.0
  %v1261 = vand.u32 %v109, 4294901760
  %v1262 = vsub.f32 %v109, %v1261
  %v1263 = vand.u32 %v1262, 4294901760
  %1264 = vmatmul.mubr.f32.gmra.mrb[0].mxu0 %v1263
  %v1265 = vpop.f32.mrb[0].mxu0
  %v1266 = vadd.f32 %v967, %v1265
  %v1267 = vpop.f32.mrb[0].mxu0
  %1268 = vmatprep.mubr.f32.mxu0 0.0
  %v1269 = vand.u32 %v112, 4294901760
  %v1270 = vsub.f32 %v112, %v1269
  %v1271 = vand.u32 %v1270, 4294901760
  %1272 = vmatmul.mubr.f32.gmra.mrb[0].mxu0 %v1271
  %v1273 = vpop.f32.mrb[0].mxu0
  %v1274 = vadd.f32 %v974, %v1273
  %v1275 = vpop.f32.mrb[0].mxu0
  %1276 = vmatprep.mubr.f32.mxu0 0.0
  %v1277 = vand.u32 %v115, 4294901760
  %v1278 = vsub.f32 %v115, %v1277
  %v1279 = vand.u32 %v1278, 4294901760
  %1280 = vmatmul.mubr.f32.gmra.mrb[0].mxu0 %v1279
  %v1281 = vpop.f32.mrb[0].mxu0
  %v1282 = vadd.f32 %v981, %v1281
  %v1283 = vpop.f32.mrb[0].mxu0
  %1284 = vmatprep.mubr.f32.mxu0 0.0
  %v1285 = vand.u32 %v118, 4294901760
  %v1286 = vsub.f32 %v118, %v1285
  %v1287 = vand.u32 %v1286, 4294901760
  %1288 = vmatmul.mubr.f32.gmra.mrb[0].mxu0 %v1287
  %v1289 = vpop.f32.mrb[0].mxu0
  %v1290 = vadd.f32 %v988, %v1289
  %v1291 = vpop.f32.mrb[0].mxu0
  %1292 = vmatprep.mubr.f32.mxu0 0.0
  %v1293 = vand.u32 %v121, 4294901760
  %v1294 = vsub.f32 %v121, %v1293
  %v1295 = vand.u32 %v1294, 4294901760
  %1296 = vmatmul.mubr.f32.gmra.mrb[0].mxu0 %v1295
  %v1297 = vpop.f32.mrb[0].mxu0
  %v1298 = vadd.f32 %v995, %v1297
  %v1299 = vpop.f32.mrb[0].mxu0
  %1300 = vmatprep.mubr.f32.mxu0 0.0
  %v1301 = vand.u32 %v124, 4294901760
  %v1302 = vsub.f32 %v124, %v1301
  %v1303 = vand.u32 %v1302, 4294901760
  %1304 = vmatmul.mubr.f32.gmra.mrb[0].mxu0 %v1303
  %v1305 = vpop.f32.mrb[0].mxu0
  %v1306 = vadd.f32 %v1002, %v1305
  %v1307 = vpop.f32.mrb[0].mxu0
  %1308 = vmatprep.mubr.f32.mxu0 0.0
  %v1309 = vand.u32 %v127, 4294901760
  %v1310 = vsub.f32 %v127, %v1309
  %v1311 = vand.u32 %v1310, 4294901760
  %1312 = vmatmul.mubr.f32.gmra.mrb[0].mxu0 %v1311
  %v1313 = vpop.f32.mrb[0].mxu0
  %v1314 = vadd.f32 %v1009, %v1313
  %v1315 = vpop.f32.mrb[0].mxu0
  %1316 = vmatprep.mubr.f32.mxu0 0.0
  %v1317 = vand.u32 %v130, 4294901760
  %v1318 = vsub.f32 %v130, %v1317
  %v1319 = vand.u32 %v1318, 4294901760
  %1320 = vmatmul.mubr.f32.gmra.mrb[0].mxu0 %v1319
  %v1321 = vpop.f32.mrb[0].mxu0
  %v1322 = vadd.f32 %v1016, %v1321
  %v1323 = vpop.f32.mrb[0].mxu0
  %1324 = vmatprep.mubr.f32.mxu0 0.0
  %v1325 = vand.u32 %v133, 4294901760
  %v1326 = vsub.f32 %v133, %v1325
  %v1327 = vand.u32 %v1326, 4294901760
  %1328 = vmatmul.mubr.f32.gmra.mrb[0].mxu0 %v1327
  %v1329 = vpop.f32.mrb[0].mxu0
  %v1330 = vadd.f32 %v1023, %v1329
  %v1331 = vpop.f32.mrb[0].mxu0
  %1332 = vmatprep.mubr.f32.mxu0 0.0
  %v1333 = vand.u32 %v136, 4294901760
  %v1334 = vsub.f32 %v136, %v1333
  %v1335 = vand.u32 %v1334, 4294901760
  %1336 = vmatmul.mubr.f32.gmra.mrb[0].mxu0 %v1335
  %v1337 = vpop.f32.mrb[0].mxu0
  %v1338 = vadd.f32 %v1030, %v1337
  %v1339 = vpop.f32.mrb[0].mxu0
  %1340 = vmatprep.mubr.f32.mxu0 0.0
  %v1341 = vand.u32 %v139, 4294901760
  %v1342 = vsub.f32 %v139, %v1341
  %v1343 = vand.u32 %v1342, 4294901760
  %1344 = vmatmul.mubr.f32.gmra.mrb[0].mxu0 %v1343
  %v1345 = vpop.f32.mrb[0].mxu0
  %v1346 = vadd.f32 %v1037, %v1345
  %v1347 = vpop.f32.mrb[0].mxu0
  %1348 = vmatprep.mubr.f32.mxu0 0.0
  %v1349 = vand.u32 %v142, 4294901760
  %v1350 = vsub.f32 %v142, %v1349
  %v1351 = vand.u32 %v1350, 4294901760
  %1352 = vmatmul.mubr.f32.gmra.mrb[0].mxu0 %v1351
  %v1353 = vpop.f32.mrb[0].mxu0
  %v1354 = vadd.f32 %v1044, %v1353
  %v1355 = vpop.f32.mrb[0].mxu0
  %1356 = vmatprep.mubr.f32.mxu0 0.0
  %v1357 = vand.u32 %v145, 4294901760
  %v1358 = vsub.f32 %v145, %v1357
  %v1359 = vand.u32 %v1358, 4294901760
  %1360 = vmatmul.mubr.f32.gmra.mrb[0].mxu0 %v1359
  %v1361 = vpop.f32.mrb[0].mxu0
  %v1362 = vadd.f32 %v1051, %v1361
  %v1363 = vpop.f32.mrb[0].mxu0
  %1364 = vmatprep.mubr.f32.mxu0 0.0
  %v1365 = vand.u32 %v148, 4294901760
  %v1366 = vsub.f32 %v148, %v1365
  %v1367 = vand.u32 %v1366, 4294901760
  %1368 = vmatmul.mubr.f32.gmra.mrb[0].mxu0 %v1367
  %v1369 = vpop.f32.mrb[0].mxu0
  %v1370 = vadd.f32 %v1058, %v1369
  %v1371 = vpop.f32.mrb[0].mxu0
  %1372 = vmatprep.mubr.f32.mxu0 0.0
  %v1373 = vand.u32 %v151, 4294901760
  %v1374 = vsub.f32 %v151, %v1373
  %v1375 = vand.u32 %v1374, 4294901760
  %1376 = vmatmul.mubr.f32.gmra.mrb[0].mxu0 %v1375
  %v1377 = vpop.f32.mrb[0].mxu0
  %v1378 = vadd.f32 %v1065, %v1377
  %v1379 = vpop.f32.mrb[0].mxu0
  %1380 = vmatprep.mubr.f32.mxu0 0.0
  %v1381 = vand.u32 %v154, 4294901760
  %v1382 = vsub.f32 %v154, %v1381
  %v1383 = vand.u32 %v1382, 4294901760
  %1384 = vmatmul.mubr.f32.gmra.mrb[0].mxu0 %v1383
  %v1385 = vpop.f32.mrb[0].mxu0
  %v1386 = vadd.f32 %v1072, %v1385
  %v1387 = vpop.f32.mrb[0].mxu0
  %1388 = vmatprep.mubr.f32.mxu0 0.0
  %v1389 = vand.u32 %v157, 4294901760
  %v1390 = vsub.f32 %v157, %v1389
  %v1391 = vand.u32 %v1390, 4294901760
  %1392 = vmatmul.mubr.f32.gmra.mrb[0].mxu0 %v1391
  %v1393 = vpop.f32.mrb[0].mxu0
  %v1394 = vadd.f32 %v1079, %v1393
  %v1395 = vpop.f32.mrb[0].mxu0
  %1396 = vmatprep.mubr.f32.mxu0 0.0
  %v1397 = vand.u32 %v160, 4294901760
  %v1398 = vsub.f32 %v160, %v1397
  %v1399 = vand.u32 %v1398, 4294901760
  %1400 = vmatmul.mubr.f32.gmra.mrb[0].mxu0 %v1399
  %v1401 = vpop.f32.mrb[0].mxu0
  %v1402 = vadd.f32 %v1086, %v1401
  %v1403 = vpop.f32.mrb[0].mxu0
  %1404 = vmatprep.mubr.f32.mxu0 0.0
  %v1405 = vand.u32 %v163, 4294901760
  %v1406 = vsub.f32 %v163, %v1405
  %v1407 = vand.u32 %v1406, 4294901760
  %1408 = vmatmul.mubr.f32.gmra.mrb[0].mxu0 %v1407
  %v1409 = vpop.f32.mrb[0].mxu0
  %v1410 = vadd.f32 %v1093, %v1409
  %v1411 = vpop.f32.mrb[0].mxu0
  %1412 = vmatprep.mubr.f32.mxu0 0.0
  %v1413 = vand.u32 %v166, 4294901760
  %v1414 = vsub.f32 %v166, %v1413
  %v1415 = vand.u32 %v1414, 4294901760
  %1416 = vmatmul.mubr.f32.gmra.mrb[0].mxu0 %v1415
  %v1417 = vpop.f32.mrb[0].mxu0
  %v1418 = vadd.f32 %v1100, %v1417
  %v1419 = vpop.f32.mrb[0].mxu0
  %1420 = vmatprep.mubr.f32.mxu0 0.0
  %v1421 = vand.u32 %v169, 4294901760
  %v1422 = vsub.f32 %v169, %v1421
  %v1423 = vand.u32 %v1422, 4294901760
  %1424 = vmatmul.mubr.f32.gmra.mrb[0].mxu0 %v1423
  %v1425 = vpop.f32.mrb[0].mxu0
  %v1426 = vadd.f32 %v1107, %v1425
  %v1427 = vpop.f32.mrb[0].mxu0
  %1428 = vmatprep.mubr.f32.mxu0 0.0
  %v1429 = vand.u32 %v172, 4294901760
  %v1430 = vsub.f32 %v172, %v1429
  %v1431 = vand.u32 %v1430, 4294901760
  %1432 = vmatmul.mubr.f32.gmra.mrb[0].mxu0 %v1431
  %v1433 = vpop.f32.mrb[0].mxu0
  %v1434 = vadd.f32 %v1114, %v1433
  %v1435 = vpop.f32.mrb[0].mxu0
  %1436 = vmatprep.mubr.f32.mxu0 0.0
  %v1437 = vand.u32 %v175, 4294901760
  %v1438 = vsub.f32 %v175, %v1437
  %v1439 = vand.u32 %v1438, 4294901760
  %1440 = vmatmul.mubr.f32.gmra.mrb[0].mxu0 %v1439
  %v1441 = vpop.f32.mrb[0].mxu0
  %v1442 = vadd.f32 %v1121, %v1441
  %v1443 = vpop.f32.mrb[0].mxu0
  %1444 = vmatprep.mubr.f32.mxu0 0.0
  %v1445 = vand.u32 %v178, 4294901760
  %v1446 = vsub.f32 %v178, %v1445
  %v1447 = vand.u32 %v1446, 4294901760
  %1448 = vmatmul.mubr.f32.gmra.mrb[0].mxu0 %v1447
  %v1449 = vpop.f32.mrb[0].mxu0
  %v1450 = vadd.f32 %v1128, %v1449
  %v1451 = vpop.f32.mrb[0].mxu0
  %1452 = vmatprep.mubr.f32.mxu0 0.0
  %v1453 = vand.u32 %v181, 4294901760
  %v1454 = vsub.f32 %v181, %v1453
  %v1455 = vand.u32 %v1454, 4294901760
  %1456 = vmatmul.mubr.f32.gmra.mrb[0].mxu0 %v1455
  %v1457 = vpop.f32.mrb[0].mxu0
  %v1458 = vadd.f32 %v1135, %v1457
  %v1459 = vpop.f32.mrb[0].mxu0
  %1460 = vmatprep.mubr.f32.mxu0 0.0
  %v1461 = vand.u32 %v184, 4294901760
  %v1462 = vsub.f32 %v184, %v1461
  %v1463 = vand.u32 %v1462, 4294901760
  %1464 = vmatmul.mubr.f32.gmra.mrb[0].mxu0 %v1463
  %v1465 = vpop.f32.mrb[0].mxu0
  %v1466 = vadd.f32 %v1142, %v1465
  %v1467 = vpop.f32.mrb[0].mxu0
  %1468 = vmatprep.mubr.f32.mxu0 0.0
  %v1469 = vand.u32 %v187, 4294901760
  %v1470 = vsub.f32 %v187, %v1469
  %v1471 = vand.u32 %v1470, 4294901760
  %1472 = vmatmul.mubr.f32.gmra.mrb[0].mxu0 %v1471
  %v1473 = vpop.f32.mrb[0].mxu0
  %v1474 = vadd.f32 %v1149, %v1473
  %v1475 = vpop.f32.mrb[0].mxu0
  %1476 = vdwg.mxu0
  %1477 = vmatprep.subr.mxu0 0.0
  %v1478 = vand.u32 %v88, 4294901760
  %v1479 = vsub.f32 %v88, %v1478
  %v1480 = vand.u32 %v1479, 4294901760
  %1481 = vmatpush1.msra.mxu0 %v1480
  %1482 = vmatprep.subr.mxu0 0.0
  %v1483 = vand.u32 %v89, 4294901760
  %v1484 = vsub.f32 %v89, %v1483
  %v1485 = vand.u32 %v1484, 4294901760
  %1486 = vmatpush1.msra.mxu0 %v1485
  %1487 = vmatprep.subr.mxu0 0.0
  %v1488 = vand.u32 %v90, 4294901760
  %v1489 = vsub.f32 %v90, %v1488
  %v1490 = vand.u32 %v1489, 4294901760
  %1491 = vmatpush1.msra.mxu0 %v1490
  %1492 = vmatprep.subr.mxu0 0.0
  %v1493 = vand.u32 %v91, 4294901760
  %v1494 = vsub.f32 %v91, %v1493
  %v1495 = vand.u32 %v1494, 4294901760
  %1496 = vmatpush1.msra.mxu0 %v1495
  %1497 = vmatprep.subr.mxu0 0.0
  %1498 = vmatpush1.msra.mxu0 0.0
  %1499 = vmatprep.subr.mxu0 0.0
  %1500 = vmatpush1.msra.mxu0 0.0
  %1501 = vmatprep.subr.mxu0 0.0
  %1502 = vmatpush1.msra.mxu0 0.0
  %1503 = vmatprep.subr.mxu0 0.0
  %1504 = vmatpush1.msra.mxu0 0.0
  %1505 = vmatprep.subr.mxu0 0.0
  %1506 = vmatpush1.msra.mxu0 0.0
  %1507 = vmatprep.subr.mxu0 0.0
  %1508 = vmatpush1.msra.mxu0 0.0
  %1509 = vmatprep.subr.mxu0 0.0
  %1510 = vmatpush1.msra.mxu0 0.0
  %1511 = vmatprep.subr.mxu0 0.0
  %1512 = vmatpush1.msra.mxu0 0.0
  %1513 = vmatprep.subr.mxu0 0.0
  %1514 = vmatpush1.msra.mxu0 0.0
  %1515 = vmatprep.subr.mxu0 0.0
  %1516 = vmatpush1.msra.mxu0 0.0
  %1517 = vmatprep.subr.mxu0 0.0
  %1518 = vmatpush1.msra.mxu0 0.0
  %1519 = vmatprep.subr.mxu0 0.0
  %1520 = vmatpush1.msra.mxu0 0.0
  %1521 = vmatprep.subr.mxu0 0.0
  %1522 = vmatpush1.msra.mxu0 0.0
  %1523 = vmatprep.subr.mxu0 0.0
  %1524 = vmatpush1.msra.mxu0 0.0
  %1525 = vmatprep.subr.mxu0 0.0
  %1526 = vmatpush1.msra.mxu0 0.0
  %1527 = vmatprep.subr.mxu0 0.0
  %1528 = vmatpush1.msra.mxu0 0.0
  %1529 = vmatprep.subr.mxu0 0.0
  %1530 = vmatpush1.msra.mxu0 0.0
  %1531 = vmatprep.subr.mxu0 0.0
  %1532 = vmatpush1.msra.mxu0 0.0
  %1533 = vmatprep.subr.mxu0 0.0
  %1534 = vmatpush1.msra.mxu0 0.0
  %1535 = vmatprep.subr.mxu0 0.0
  %1536 = vmatpush1.msra.mxu0 0.0
  %1537 = vmatprep.subr.mxu0 0.0
  %1538 = vmatpush1.msra.mxu0 0.0
  %1539 = vmatprep.subr.mxu0 0.0
  %1540 = vmatpush1.msra.mxu0 0.0
  %1541 = vmatprep.subr.mxu0 0.0
  %1542 = vmatpush1.msra.mxu0 0.0
  %1543 = vmatprep.subr.mxu0 0.0
  %1544 = vmatpush1.msra.mxu0 0.0
  %1545 = vmatprep.subr.mxu0 0.0
  %1546 = vmatpush1.msra.mxu0 0.0
  %1547 = vmatprep.subr.mxu0 0.0
  %1548 = vmatpush1.msra.mxu0 0.0
  %1549 = vmatprep.subr.mxu0 0.0
  %1550 = vmatpush1.msra.mxu0 0.0
  %1551 = vmatprep.subr.mxu0 0.0
  %1552 = vmatpush1.msra.mxu0 0.0
  %1553 = vmatprep.mubr.f32.mxu0 0.0
  %v1554 = vand.u32 %v94, 4294901760
  %1555 = vmatmul.mubr.f32.gmra.mrb[0].mxu0 %v1554
  %v1556 = vpop.f32.mrb[0].mxu0
  %v1557 = vadd.f32 %v1226, %v1556
  %v1558 = vpop.f32.mrb[0].mxu0
  %1559 = vmatprep.mubr.f32.mxu0 0.0
  %v1560 = vand.u32 %v97, 4294901760
  %1561 = vmatmul.mubr.f32.gmra.mrb[0].mxu0 %v1560
  %v1562 = vpop.f32.mrb[0].mxu0
  %v1563 = vadd.f32 %v1234, %v1562
  %v1564 = vpop.f32.mrb[0].mxu0
  %1565 = vmatprep.mubr.f32.mxu0 0.0
  %v1566 = vand.u32 %v100, 4294901760
  %1567 = vmatmul.mubr.f32.gmra.mrb[0].mxu0 %v1566
  %v1568 = vpop.f32.mrb[0].mxu0
  %v1569 = vadd.f32 %v1242, %v1568
  %v1570 = vpop.f32.mrb[0].mxu0
  %1571 = vmatprep.mubr.f32.mxu0 0.0
  %v1572 = vand.u32 %v103, 4294901760
  %1573 = vmatmul.mubr.f32.gmra.mrb[0].mxu0 %v1572
  %v1574 = vpop.f32.mrb[0].mxu0
  %v1575 = vadd.f32 %v1250, %v1574
  %v1576 = vpop.f32.mrb[0].mxu0
  %1577 = vmatprep.mubr.f32.mxu0 0.0
  %v1578 = vand.u32 %v106, 4294901760
  %1579 = vmatmul.mubr.f32.gmra.mrb[0].mxu0 %v1578
  %v1580 = vpop.f32.mrb[0].mxu0
  %v1581 = vadd.f32 %v1258, %v1580
  %v1582 = vpop.f32.mrb[0].mxu0
  %1583 = vmatprep.mubr.f32.mxu0 0.0
  %v1584 = vand.u32 %v109, 4294901760
  %1585 = vmatmul.mubr.f32.gmra.mrb[0].mxu0 %v1584
  %v1586 = vpop.f32.mrb[0].mxu0
  %v1587 = vadd.f32 %v1266, %v1586
  %v1588 = vpop.f32.mrb[0].mxu0
  %1589 = vmatprep.mubr.f32.mxu0 0.0
  %v1590 = vand.u32 %v112, 4294901760
  %1591 = vmatmul.mubr.f32.gmra.mrb[0].mxu0 %v1590
  %v1592 = vpop.f32.mrb[0].mxu0
  %v1593 = vadd.f32 %v1274, %v1592
  %v1594 = vpop.f32.mrb[0].mxu0
  %1595 = vmatprep.mubr.f32.mxu0 0.0
  %v1596 = vand.u32 %v115, 4294901760
  %1597 = vmatmul.mubr.f32.gmra.mrb[0].mxu0 %v1596
  %v1598 = vpop.f32.mrb[0].mxu0
  %v1599 = vadd.f32 %v1282, %v1598
  %v1600 = vpop.f32.mrb[0].mxu0
  %1601 = vmatprep.mubr.f32.mxu0 0.0
  %v1602 = vand.u32 %v118, 4294901760
  %1603 = vmatmul.mubr.f32.gmra.mrb[0].mxu0 %v1602
  %v1604 = vpop.f32.mrb[0].mxu0
  %v1605 = vadd.f32 %v1290, %v1604
  %v1606 = vpop.f32.mrb[0].mxu0
  %1607 = vmatprep.mubr.f32.mxu0 0.0
  %v1608 = vand.u32 %v121, 4294901760
  %1609 = vmatmul.mubr.f32.gmra.mrb[0].mxu0 %v1608
  %v1610 = vpop.f32.mrb[0].mxu0
  %v1611 = vadd.f32 %v1298, %v1610
  %v1612 = vpop.f32.mrb[0].mxu0
  %1613 = vmatprep.mubr.f32.mxu0 0.0
  %v1614 = vand.u32 %v124, 4294901760
  %1615 = vmatmul.mubr.f32.gmra.mrb[0].mxu0 %v1614
  %v1616 = vpop.f32.mrb[0].mxu0
  %v1617 = vadd.f32 %v1306, %v1616
  %v1618 = vpop.f32.mrb[0].mxu0
  %1619 = vmatprep.mubr.f32.mxu0 0.0
  %v1620 = vand.u32 %v127, 4294901760
  %1621 = vmatmul.mubr.f32.gmra.mrb[0].mxu0 %v1620
  %v1622 = vpop.f32.mrb[0].mxu0
  %v1623 = vadd.f32 %v1314, %v1622
  %v1624 = vpop.f32.mrb[0].mxu0
  %1625 = vmatprep.mubr.f32.mxu0 0.0
  %v1626 = vand.u32 %v130, 4294901760
  %1627 = vmatmul.mubr.f32.gmra.mrb[0].mxu0 %v1626
  %v1628 = vpop.f32.mrb[0].mxu0
  %v1629 = vadd.f32 %v1322, %v1628
  %v1630 = vpop.f32.mrb[0].mxu0
  %1631 = vmatprep.mubr.f32.mxu0 0.0
  %v1632 = vand.u32 %v133, 4294901760
  %1633 = vmatmul.mubr.f32.gmra.mrb[0].mxu0 %v1632
  %v1634 = vpop.f32.mrb[0].mxu0
  %v1635 = vadd.f32 %v1330, %v1634
  %v1636 = vpop.f32.mrb[0].mxu0
  %1637 = vmatprep.mubr.f32.mxu0 0.0
  %v1638 = vand.u32 %v136, 4294901760
  %1639 = vmatmul.mubr.f32.gmra.mrb[0].mxu0 %v1638
  %v1640 = vpop.f32.mrb[0].mxu0
  %v1641 = vadd.f32 %v1338, %v1640
  %v1642 = vpop.f32.mrb[0].mxu0
  %1643 = vmatprep.mubr.f32.mxu0 0.0
  %v1644 = vand.u32 %v139, 4294901760
  %1645 = vmatmul.mubr.f32.gmra.mrb[0].mxu0 %v1644
  %v1646 = vpop.f32.mrb[0].mxu0
  %v1647 = vadd.f32 %v1346, %v1646
  %v1648 = vpop.f32.mrb[0].mxu0
  %1649 = vmatprep.mubr.f32.mxu0 0.0
  %v1650 = vand.u32 %v142, 4294901760
  %1651 = vmatmul.mubr.f32.gmra.mrb[0].mxu0 %v1650
  %v1652 = vpop.f32.mrb[0].mxu0
  %v1653 = vadd.f32 %v1354, %v1652
  %v1654 = vpop.f32.mrb[0].mxu0
  %1655 = vmatprep.mubr.f32.mxu0 0.0
  %v1656 = vand.u32 %v145, 4294901760
  %1657 = vmatmul.mubr.f32.gmra.mrb[0].mxu0 %v1656
  %v1658 = vpop.f32.mrb[0].mxu0
  %v1659 = vadd.f32 %v1362, %v1658
  %v1660 = vpop.f32.mrb[0].mxu0
  %1661 = vmatprep.mubr.f32.mxu0 0.0
  %v1662 = vand.u32 %v148, 4294901760
  %1663 = vmatmul.mubr.f32.gmra.mrb[0].mxu0 %v1662
  %v1664 = vpop.f32.mrb[0].mxu0
  %v1665 = vadd.f32 %v1370, %v1664
  %v1666 = vpop.f32.mrb[0].mxu0
  %1667 = vmatprep.mubr.f32.mxu0 0.0
  %v1668 = vand.u32 %v151, 4294901760
  %1669 = vmatmul.mubr.f32.gmra.mrb[0].mxu0 %v1668
  %v1670 = vpop.f32.mrb[0].mxu0
  %v1671 = vadd.f32 %v1378, %v1670
  %v1672 = vpop.f32.mrb[0].mxu0
  %1673 = vmatprep.mubr.f32.mxu0 0.0
  %v1674 = vand.u32 %v154, 4294901760
  %1675 = vmatmul.mubr.f32.gmra.mrb[0].mxu0 %v1674
  %v1676 = vpop.f32.mrb[0].mxu0
  %v1677 = vadd.f32 %v1386, %v1676
  %v1678 = vpop.f32.mrb[0].mxu0
  %1679 = vmatprep.mubr.f32.mxu0 0.0
  %v1680 = vand.u32 %v157, 4294901760
  %1681 = vmatmul.mubr.f32.gmra.mrb[0].mxu0 %v1680
  %v1682 = vpop.f32.mrb[0].mxu0
  %v1683 = vadd.f32 %v1394, %v1682
  %v1684 = vpop.f32.mrb[0].mxu0
  %1685 = vmatprep.mubr.f32.mxu0 0.0
  %v1686 = vand.u32 %v160, 4294901760
  %1687 = vmatmul.mubr.f32.gmra.mrb[0].mxu0 %v1686
  %v1688 = vpop.f32.mrb[0].mxu0
  %v1689 = vadd.f32 %v1402, %v1688
  %v1690 = vpop.f32.mrb[0].mxu0
  %1691 = vmatprep.mubr.f32.mxu0 0.0
  %v1692 = vand.u32 %v163, 4294901760
  %1693 = vmatmul.mubr.f32.gmra.mrb[0].mxu0 %v1692
  %v1694 = vpop.f32.mrb[0].mxu0
  %v1695 = vadd.f32 %v1410, %v1694
  %v1696 = vpop.f32.mrb[0].mxu0
  %1697 = vmatprep.mubr.f32.mxu0 0.0
  %v1698 = vand.u32 %v166, 4294901760
  %1699 = vmatmul.mubr.f32.gmra.mrb[0].mxu0 %v1698
  %v1700 = vpop.f32.mrb[0].mxu0
  %v1701 = vadd.f32 %v1418, %v1700
  %v1702 = vpop.f32.mrb[0].mxu0
  %1703 = vmatprep.mubr.f32.mxu0 0.0
  %v1704 = vand.u32 %v169, 4294901760
  %1705 = vmatmul.mubr.f32.gmra.mrb[0].mxu0 %v1704
  %v1706 = vpop.f32.mrb[0].mxu0
  %v1707 = vadd.f32 %v1426, %v1706
  %v1708 = vpop.f32.mrb[0].mxu0
  %1709 = vmatprep.mubr.f32.mxu0 0.0
  %v1710 = vand.u32 %v172, 4294901760
  %1711 = vmatmul.mubr.f32.gmra.mrb[0].mxu0 %v1710
  %v1712 = vpop.f32.mrb[0].mxu0
  %v1713 = vadd.f32 %v1434, %v1712
  %v1714 = vpop.f32.mrb[0].mxu0
  %1715 = vmatprep.mubr.f32.mxu0 0.0
  %v1716 = vand.u32 %v175, 4294901760
  %1717 = vmatmul.mubr.f32.gmra.mrb[0].mxu0 %v1716
  %v1718 = vpop.f32.mrb[0].mxu0
  %v1719 = vadd.f32 %v1442, %v1718
  %v1720 = vpop.f32.mrb[0].mxu0
  %1721 = vmatprep.mubr.f32.mxu0 0.0
  %v1722 = vand.u32 %v178, 4294901760
  %1723 = vmatmul.mubr.f32.gmra.mrb[0].mxu0 %v1722
  %v1724 = vpop.f32.mrb[0].mxu0
  %v1725 = vadd.f32 %v1450, %v1724
  %v1726 = vpop.f32.mrb[0].mxu0
  %1727 = vmatprep.mubr.f32.mxu0 0.0
  %v1728 = vand.u32 %v181, 4294901760
  %1729 = vmatmul.mubr.f32.gmra.mrb[0].mxu0 %v1728
  %v1730 = vpop.f32.mrb[0].mxu0
  %v1731 = vadd.f32 %v1458, %v1730
  %v1732 = vpop.f32.mrb[0].mxu0
  %1733 = vmatprep.mubr.f32.mxu0 0.0
  %v1734 = vand.u32 %v184, 4294901760
  %1735 = vmatmul.mubr.f32.gmra.mrb[0].mxu0 %v1734
  %v1736 = vpop.f32.mrb[0].mxu0
  %v1737 = vadd.f32 %v1466, %v1736
  %v1738 = vpop.f32.mrb[0].mxu0
  %1739 = vmatprep.mubr.f32.mxu0 0.0
  %v1740 = vand.u32 %v187, 4294901760
  %1741 = vmatmul.mubr.f32.gmra.mrb[0].mxu0 %v1740
  %v1742 = vpop.f32.mrb[0].mxu0
  %v1743 = vadd.f32 %v1474, %v1742
  %v1744 = vpop.f32.mrb[0].mxu0
  %1745 = vdwg.mxu0
  %1746 = vmatprep.subr.mxu0 0.0
  %v1747 = vand.u32 %v88, 4294901760
  %1748 = vmatpush1.msra.mxu0 %v1747
  %1749 = vmatprep.subr.mxu0 0.0
  %v1750 = vand.u32 %v89, 4294901760
  %1751 = vmatpush1.msra.mxu0 %v1750
  %1752 = vmatprep.subr.mxu0 0.0
  %v1753 = vand.u32 %v90, 4294901760
  %1754 = vmatpush1.msra.mxu0 %v1753
  %1755 = vmatprep.subr.mxu0 0.0
  %v1756 = vand.u32 %v91, 4294901760
  %1757 = vmatpush1.msra.mxu0 %v1756
  %1758 = vmatprep.subr.mxu0 0.0
  %1759 = vmatpush1.msra.mxu0 0.0
  %1760 = vmatprep.subr.mxu0 0.0
  %1761 = vmatpush1.msra.mxu0 0.0
  %1762 = vmatprep.subr.mxu0 0.0
  %1763 = vmatpush1.msra.mxu0 0.0
  %1764 = vmatprep.subr.mxu0 0.0
  %1765 = vmatpush1.msra.mxu0 0.0
  %1766 = vmatprep.subr.mxu0 0.0
  %1767 = vmatpush1.msra.mxu0 0.0
  %1768 = vmatprep.subr.mxu0 0.0
  %1769 = vmatpush1.msra.mxu0 0.0
  %1770 = vmatprep.subr.mxu0 0.0
  %1771 = vmatpush1.msra.mxu0 0.0
  %1772 = vmatprep.subr.mxu0 0.0
  %1773 = vmatpush1.msra.mxu0 0.0
  %1774 = vmatprep.subr.mxu0 0.0
  %1775 = vmatpush1.msra.mxu0 0.0
  %1776 = vmatprep.subr.mxu0 0.0
  %1777 = vmatpush1.msra.mxu0 0.0
  %1778 = vmatprep.subr.mxu0 0.0
  %1779 = vmatpush1.msra.mxu0 0.0
  %1780 = vmatprep.subr.mxu0 0.0
  %1781 = vmatpush1.msra.mxu0 0.0
  %1782 = vmatprep.subr.mxu0 0.0
  %1783 = vmatpush1.msra.mxu0 0.0
  %1784 = vmatprep.subr.mxu0 0.0
  %1785 = vmatpush1.msra.mxu0 0.0
  %1786 = vmatprep.subr.mxu0 0.0
  %1787 = vmatpush1.msra.mxu0 0.0
  %1788 = vmatprep.subr.mxu0 0.0
  %1789 = vmatpush1.msra.mxu0 0.0
  %1790 = vmatprep.subr.mxu0 0.0
  %1791 = vmatpush1.msra.mxu0 0.0
  %1792 = vmatprep.subr.mxu0 0.0
  %1793 = vmatpush1.msra.mxu0 0.0
  %1794 = vmatprep.subr.mxu0 0.0
  %1795 = vmatpush1.msra.mxu0 0.0
  %1796 = vmatprep.subr.mxu0 0.0
  %1797 = vmatpush1.msra.mxu0 0.0
  %1798 = vmatprep.subr.mxu0 0.0
  %1799 = vmatpush1.msra.mxu0 0.0
  %1800 = vmatprep.subr.mxu0 0.0
  %1801 = vmatpush1.msra.mxu0 0.0
  %1802 = vmatprep.subr.mxu0 0.0
  %1803 = vmatpush1.msra.mxu0 0.0
  %1804 = vmatprep.subr.mxu0 0.0
  %1805 = vmatpush1.msra.mxu0 0.0
  %1806 = vmatprep.subr.mxu0 0.0
  %1807 = vmatpush1.msra.mxu0 0.0
  %1808 = vmatprep.subr.mxu0 0.0
  %1809 = vmatpush1.msra.mxu0 0.0
  %1810 = vmatprep.subr.mxu0 0.0
  %1811 = vmatpush1.msra.mxu0 0.0
  %1812 = vmatprep.subr.mxu0 0.0
  %1813 = vmatpush1.msra.mxu0 0.0
  %1814 = vmatprep.mubr.f32.mxu0 0.0
  %v1815 = vand.u32 %v94, 4294901760
  %1816 = vmatmul.mubr.f32.gmra.mrb[0].mxu0 %v1815
  %v1817 = vpop.f32.mrb[0].mxu0
  %v1818 = vadd.f32 %v1557, %v1817
  %v1819 = vpop.f32.mrb[0].mxu0
  %1820 = vmatprep.mubr.f32.mxu0 0.0
  %v1821 = vand.u32 %v97, 4294901760
  %1822 = vmatmul.mubr.f32.gmra.mrb[0].mxu0 %v1821
  %v1823 = vpop.f32.mrb[0].mxu0
  %v1824 = vadd.f32 %v1563, %v1823
  %v1825 = vpop.f32.mrb[0].mxu0
  %1826 = vmatprep.mubr.f32.mxu0 0.0
  %v1827 = vand.u32 %v100, 4294901760
  %1828 = vmatmul.mubr.f32.gmra.mrb[0].mxu0 %v1827
  %v1829 = vpop.f32.mrb[0].mxu0
  %v1830 = vadd.f32 %v1569, %v1829
  %v1831 = vpop.f32.mrb[0].mxu0
  %1832 = vmatprep.mubr.f32.mxu0 0.0
  %v1833 = vand.u32 %v103, 4294901760
  %1834 = vmatmul.mubr.f32.gmra.mrb[0].mxu0 %v1833
  %v1835 = vpop.f32.mrb[0].mxu0
  %v1836 = vadd.f32 %v1575, %v1835
  %v1837 = vpop.f32.mrb[0].mxu0
  %1838 = vmatprep.mubr.f32.mxu0 0.0
  %v1839 = vand.u32 %v106, 4294901760
  %1840 = vmatmul.mubr.f32.gmra.mrb[0].mxu0 %v1839
  %v1841 = vpop.f32.mrb[0].mxu0
  %v1842 = vadd.f32 %v1581, %v1841
  %v1843 = vpop.f32.mrb[0].mxu0
  %1844 = vmatprep.mubr.f32.mxu0 0.0
  %v1845 = vand.u32 %v109, 4294901760
  %1846 = vmatmul.mubr.f32.gmra.mrb[0].mxu0 %v1845
  %v1847 = vpop.f32.mrb[0].mxu0
  %v1848 = vadd.f32 %v1587, %v1847
  %v1849 = vpop.f32.mrb[0].mxu0
  %1850 = vmatprep.mubr.f32.mxu0 0.0
  %v1851 = vand.u32 %v112, 4294901760
  %1852 = vmatmul.mubr.f32.gmra.mrb[0].mxu0 %v1851
  %v1853 = vpop.f32.mrb[0].mxu0
  %v1854 = vadd.f32 %v1593, %v1853
  %v1855 = vpop.f32.mrb[0].mxu0
  %1856 = vmatprep.mubr.f32.mxu0 0.0
  %v1857 = vand.u32 %v115, 4294901760
  %1858 = vmatmul.mubr.f32.gmra.mrb[0].mxu0 %v1857
  %v1859 = vpop.f32.mrb[0].mxu0
  %v1860 = vadd.f32 %v1599, %v1859
  %v1861 = vpop.f32.mrb[0].mxu0
  %1862 = vmatprep.mubr.f32.mxu0 0.0
  %v1863 = vand.u32 %v118, 4294901760
  %1864 = vmatmul.mubr.f32.gmra.mrb[0].mxu0 %v1863
  %v1865 = vpop.f32.mrb[0].mxu0
  %v1866 = vadd.f32 %v1605, %v1865
  %v1867 = vpop.f32.mrb[0].mxu0
  %1868 = vmatprep.mubr.f32.mxu0 0.0
  %v1869 = vand.u32 %v121, 4294901760
  %1870 = vmatmul.mubr.f32.gmra.mrb[0].mxu0 %v1869
  %v1871 = vpop.f32.mrb[0].mxu0
  %v1872 = vadd.f32 %v1611, %v1871
  %v1873 = vpop.f32.mrb[0].mxu0
  %1874 = vmatprep.mubr.f32.mxu0 0.0
  %v1875 = vand.u32 %v124, 4294901760
  %1876 = vmatmul.mubr.f32.gmra.mrb[0].mxu0 %v1875
  %v1877 = vpop.f32.mrb[0].mxu0
  %v1878 = vadd.f32 %v1617, %v1877
  %v1879 = vpop.f32.mrb[0].mxu0
  %1880 = vmatprep.mubr.f32.mxu0 0.0
  %v1881 = vand.u32 %v127, 4294901760
  %1882 = vmatmul.mubr.f32.gmra.mrb[0].mxu0 %v1881
  %v1883 = vpop.f32.mrb[0].mxu0
  %v1884 = vadd.f32 %v1623, %v1883
  %v1885 = vpop.f32.mrb[0].mxu0
  %1886 = vmatprep.mubr.f32.mxu0 0.0
  %v1887 = vand.u32 %v130, 4294901760
  %1888 = vmatmul.mubr.f32.gmra.mrb[0].mxu0 %v1887
  %v1889 = vpop.f32.mrb[0].mxu0
  %v1890 = vadd.f32 %v1629, %v1889
  %v1891 = vpop.f32.mrb[0].mxu0
  %1892 = vmatprep.mubr.f32.mxu0 0.0
  %v1893 = vand.u32 %v133, 4294901760
  %1894 = vmatmul.mubr.f32.gmra.mrb[0].mxu0 %v1893
  %v1895 = vpop.f32.mrb[0].mxu0
  %v1896 = vadd.f32 %v1635, %v1895
  %v1897 = vpop.f32.mrb[0].mxu0
  %1898 = vmatprep.mubr.f32.mxu0 0.0
  %v1899 = vand.u32 %v136, 4294901760
  %1900 = vmatmul.mubr.f32.gmra.mrb[0].mxu0 %v1899
  %v1901 = vpop.f32.mrb[0].mxu0
  %v1902 = vadd.f32 %v1641, %v1901
  %v1903 = vpop.f32.mrb[0].mxu0
  %1904 = vmatprep.mubr.f32.mxu0 0.0
  %v1905 = vand.u32 %v139, 4294901760
  %1906 = vmatmul.mubr.f32.gmra.mrb[0].mxu0 %v1905
  %v1907 = vpop.f32.mrb[0].mxu0
  %v1908 = vadd.f32 %v1647, %v1907
  %v1909 = vpop.f32.mrb[0].mxu0
  %1910 = vmatprep.mubr.f32.mxu0 0.0
  %v1911 = vand.u32 %v142, 4294901760
  %1912 = vmatmul.mubr.f32.gmra.mrb[0].mxu0 %v1911
  %v1913 = vpop.f32.mrb[0].mxu0
  %v1914 = vadd.f32 %v1653, %v1913
  %v1915 = vpop.f32.mrb[0].mxu0
  %1916 = vmatprep.mubr.f32.mxu0 0.0
  %v1917 = vand.u32 %v145, 4294901760
  %1918 = vmatmul.mubr.f32.gmra.mrb[0].mxu0 %v1917
  %v1919 = vpop.f32.mrb[0].mxu0
  %v1920 = vadd.f32 %v1659, %v1919
  %v1921 = vpop.f32.mrb[0].mxu0
  %1922 = vmatprep.mubr.f32.mxu0 0.0
  %v1923 = vand.u32 %v148, 4294901760
  %1924 = vmatmul.mubr.f32.gmra.mrb[0].mxu0 %v1923
  %v1925 = vpop.f32.mrb[0].mxu0
  %v1926 = vadd.f32 %v1665, %v1925
  %v1927 = vpop.f32.mrb[0].mxu0
  %1928 = vmatprep.mubr.f32.mxu0 0.0
  %v1929 = vand.u32 %v151, 4294901760
  %1930 = vmatmul.mubr.f32.gmra.mrb[0].mxu0 %v1929
  %v1931 = vpop.f32.mrb[0].mxu0
  %v1932 = vadd.f32 %v1671, %v1931
  %v1933 = vpop.f32.mrb[0].mxu0
  %1934 = vmatprep.mubr.f32.mxu0 0.0
  %v1935 = vand.u32 %v154, 4294901760
  %1936 = vmatmul.mubr.f32.gmra.mrb[0].mxu0 %v1935
  %v1937 = vpop.f32.mrb[0].mxu0
  %v1938 = vadd.f32 %v1677, %v1937
  %v1939 = vpop.f32.mrb[0].mxu0
  %1940 = vmatprep.mubr.f32.mxu0 0.0
  %v1941 = vand.u32 %v157, 4294901760
  %1942 = vmatmul.mubr.f32.gmra.mrb[0].mxu0 %v1941
  %v1943 = vpop.f32.mrb[0].mxu0
  %v1944 = vadd.f32 %v1683, %v1943
  %v1945 = vpop.f32.mrb[0].mxu0
  %1946 = vmatprep.mubr.f32.mxu0 0.0
  %v1947 = vand.u32 %v160, 4294901760
  %1948 = vmatmul.mubr.f32.gmra.mrb[0].mxu0 %v1947
  %v1949 = vpop.f32.mrb[0].mxu0
  %v1950 = vadd.f32 %v1689, %v1949
  %v1951 = vpop.f32.mrb[0].mxu0
  %1952 = vmatprep.mubr.f32.mxu0 0.0
  %v1953 = vand.u32 %v163, 4294901760
  %1954 = vmatmul.mubr.f32.gmra.mrb[0].mxu0 %v1953
  %v1955 = vpop.f32.mrb[0].mxu0
  %v1956 = vadd.f32 %v1695, %v1955
  %v1957 = vpop.f32.mrb[0].mxu0
  %1958 = vmatprep.mubr.f32.mxu0 0.0
  %v1959 = vand.u32 %v166, 4294901760
  %1960 = vmatmul.mubr.f32.gmra.mrb[0].mxu0 %v1959
  %v1961 = vpop.f32.mrb[0].mxu0
  %v1962 = vadd.f32 %v1701, %v1961
  %v1963 = vpop.f32.mrb[0].mxu0
  %1964 = vmatprep.mubr.f32.mxu0 0.0
  %v1965 = vand.u32 %v169, 4294901760
  %1966 = vmatmul.mubr.f32.gmra.mrb[0].mxu0 %v1965
  %v1967 = vpop.f32.mrb[0].mxu0
  %v1968 = vadd.f32 %v1707, %v1967
  %v1969 = vpop.f32.mrb[0].mxu0
  %1970 = vmatprep.mubr.f32.mxu0 0.0
  %v1971 = vand.u32 %v172, 4294901760
  %1972 = vmatmul.mubr.f32.gmra.mrb[0].mxu0 %v1971
  %v1973 = vpop.f32.mrb[0].mxu0
  %v1974 = vadd.f32 %v1713, %v1973
  %v1975 = vpop.f32.mrb[0].mxu0
  %1976 = vmatprep.mubr.f32.mxu0 0.0
  %v1977 = vand.u32 %v175, 4294901760
  %1978 = vmatmul.mubr.f32.gmra.mrb[0].mxu0 %v1977
  %v1979 = vpop.f32.mrb[0].mxu0
  %v1980 = vadd.f32 %v1719, %v1979
  %v1981 = vpop.f32.mrb[0].mxu0
  %1982 = vmatprep.mubr.f32.mxu0 0.0
  %v1983 = vand.u32 %v178, 4294901760
  %1984 = vmatmul.mubr.f32.gmra.mrb[0].mxu0 %v1983
  %v1985 = vpop.f32.mrb[0].mxu0
  %v1986 = vadd.f32 %v1725, %v1985
  %v1987 = vpop.f32.mrb[0].mxu0
  %1988 = vmatprep.mubr.f32.mxu0 0.0
  %v1989 = vand.u32 %v181, 4294901760
  %1990 = vmatmul.mubr.f32.gmra.mrb[0].mxu0 %v1989
  %v1991 = vpop.f32.mrb[0].mxu0
  %v1992 = vadd.f32 %v1731, %v1991
  %v1993 = vpop.f32.mrb[0].mxu0
  %1994 = vmatprep.mubr.f32.mxu0 0.0
  %v1995 = vand.u32 %v184, 4294901760
  %1996 = vmatmul.mubr.f32.gmra.mrb[0].mxu0 %v1995
  %v1997 = vpop.f32.mrb[0].mxu0
  %v1998 = vadd.f32 %v1737, %v1997
  %v1999 = vpop.f32.mrb[0].mxu0
  %2000 = vmatprep.mubr.f32.mxu0 0.0
  %v2001 = vand.u32 %v187, 4294901760
  %2002 = vmatmul.mubr.f32.gmra.mrb[0].mxu0 %v2001
  %v2003 = vpop.f32.mrb[0].mxu0
  %v2004 = vadd.f32 %v1743, %v2003
  %v2005 = vpop.f32.mrb[0].mxu0
  %2006 = vdwg.mxu0
  %v2008 = vsel %vm92, %v20, 0
  %v2011 = vsel %vm92, %v21, 0
  %v2014 = vsel %vm92, %v22, 0
  %v2017 = vsel %vm92, %v23, 0
  %v2020 = vsel %vm92, %v24, 0
  %v2023 = vsel %vm92, %v25, 0
  %v2026 = vsel %vm92, %v26, 0
  %v2029 = vsel %vm92, %v27, 0
  %v2032 = vsel %vm92, %v28, 0
  %v2035 = vsel %vm92, %v29, 0
  %v2038 = vsel %vm92, %v30, 0
  %v2041 = vsel %vm92, %v31, 0
  %v2044 = vsel %vm92, %v32, 0
  %v2047 = vsel %vm92, %v33, 0
  %v2050 = vsel %vm92, %v34, 0
  %v2053 = vsel %vm92, %v35, 0
  %v2056 = vsel %vm92, %v36, 0
  %v2059 = vsel %vm92, %v37, 0
  %v2062 = vsel %vm92, %v38, 0
  %v2065 = vsel %vm92, %v39, 0
  %v2068 = vsel %vm92, %v40, 0
  %v2071 = vsel %vm92, %v41, 0
  %v2074 = vsel %vm92, %v42, 0
  %v2077 = vsel %vm92, %v43, 0
  %v2080 = vsel %vm92, %v44, 0
  %v2083 = vsel %vm92, %v45, 0
  %v2086 = vsel %vm92, %v46, 0
  %v2089 = vsel %vm92, %v47, 0
  %v2092 = vsel %vm92, %v48, 0
  %v2095 = vsel %vm92, %v49, 0
  %v2098 = vsel %vm92, %v50, 0
  %v2101 = vsel %vm92, %v51, 0
  %2103 = vmatprep.subr.mxu0 0.0
  %v2104 = vand.u32 %v52, 4294901760
  %2105 = vmatpush1.msra.mxu0 %v2104
  %2106 = vmatprep.subr.mxu0 0.0
  %v2107 = vand.u32 %v53, 4294901760
  %2108 = vmatpush1.msra.mxu0 %v2107
  %2109 = vmatprep.subr.mxu0 0.0
  %v2110 = vand.u32 %v54, 4294901760
  %2111 = vmatpush1.msra.mxu0 %v2110
  %2112 = vmatprep.subr.mxu0 0.0
  %v2113 = vand.u32 %v55, 4294901760
  %2114 = vmatpush1.msra.mxu0 %v2113
  %2115 = vmatprep.subr.mxu0 0.0
  %2116 = vmatpush1.msra.mxu0 0.0
  %2117 = vmatprep.subr.mxu0 0.0
  %2118 = vmatpush1.msra.mxu0 0.0
  %2119 = vmatprep.subr.mxu0 0.0
  %2120 = vmatpush1.msra.mxu0 0.0
  %2121 = vmatprep.subr.mxu0 0.0
  %2122 = vmatpush1.msra.mxu0 0.0
  %2123 = vmatprep.subr.mxu0 0.0
  %2124 = vmatpush1.msra.mxu0 0.0
  %2125 = vmatprep.subr.mxu0 0.0
  %2126 = vmatpush1.msra.mxu0 0.0
  %2127 = vmatprep.subr.mxu0 0.0
  %2128 = vmatpush1.msra.mxu0 0.0
  %2129 = vmatprep.subr.mxu0 0.0
  %2130 = vmatpush1.msra.mxu0 0.0
  %2131 = vmatprep.subr.mxu0 0.0
  %2132 = vmatpush1.msra.mxu0 0.0
  %2133 = vmatprep.subr.mxu0 0.0
  %2134 = vmatpush1.msra.mxu0 0.0
  %2135 = vmatprep.subr.mxu0 0.0
  %2136 = vmatpush1.msra.mxu0 0.0
  %2137 = vmatprep.subr.mxu0 0.0
  %2138 = vmatpush1.msra.mxu0 0.0
  %2139 = vmatprep.subr.mxu0 0.0
  %2140 = vmatpush1.msra.mxu0 0.0
  %2141 = vmatprep.subr.mxu0 0.0
  %2142 = vmatpush1.msra.mxu0 0.0
  %2143 = vmatprep.subr.mxu0 0.0
  %2144 = vmatpush1.msra.mxu0 0.0
  %2145 = vmatprep.subr.mxu0 0.0
  %2146 = vmatpush1.msra.mxu0 0.0
  %2147 = vmatprep.subr.mxu0 0.0
  %2148 = vmatpush1.msra.mxu0 0.0
  %2149 = vmatprep.subr.mxu0 0.0
  %2150 = vmatpush1.msra.mxu0 0.0
  %2151 = vmatprep.subr.mxu0 0.0
  %2152 = vmatpush1.msra.mxu0 0.0
  %2153 = vmatprep.subr.mxu0 0.0
  %2154 = vmatpush1.msra.mxu0 0.0
  %2155 = vmatprep.subr.mxu0 0.0
  %2156 = vmatpush1.msra.mxu0 0.0
  %2157 = vmatprep.subr.mxu0 0.0
  %2158 = vmatpush1.msra.mxu0 0.0
  %2159 = vmatprep.subr.mxu0 0.0
  %2160 = vmatpush1.msra.mxu0 0.0
  %2161 = vmatprep.subr.mxu0 0.0
  %2162 = vmatpush1.msra.mxu0 0.0
  %2163 = vmatprep.subr.mxu0 0.0
  %2164 = vmatpush1.msra.mxu0 0.0
  %2165 = vmatprep.subr.mxu0 0.0
  %2166 = vmatpush1.msra.mxu0 0.0
  %2167 = vmatprep.subr.mxu0 0.0
  %2168 = vmatpush1.msra.mxu0 0.0
  %2169 = vmatprep.subr.mxu0 0.0
  %2170 = vmatpush1.msra.mxu0 0.0
  %2171 = vmatprep.mubr.f32.mxu0 0.0
  %v2172 = vand.u32 %v2008, 4294901760
  %v2173 = vsub.f32 %v2008, %v2172
  %v2174 = vand.u32 %v2173, 4294901760
  %v2175 = vsub.f32 %v2173, %v2174
  %v2176 = vand.u32 %v2175, 4294901760
  %2177 = vmatmul.mubr.f32.gmra.mrb[0].mxu0 %v2176
  %v2178 = vpop.f32.mrb[0].mxu0
  %v2179 = vadd.f32 %v1818, %v2178
  %v2180 = vpop.f32.mrb[0].mxu0
  %2181 = vmatprep.mubr.f32.mxu0 0.0
  %v2182 = vand.u32 %v2011, 4294901760
  %v2183 = vsub.f32 %v2011, %v2182
  %v2184 = vand.u32 %v2183, 4294901760
  %v2185 = vsub.f32 %v2183, %v2184
  %v2186 = vand.u32 %v2185, 4294901760
  %2187 = vmatmul.mubr.f32.gmra.mrb[0].mxu0 %v2186
  %v2188 = vpop.f32.mrb[0].mxu0
  %v2189 = vadd.f32 %v1824, %v2188
  %v2190 = vpop.f32.mrb[0].mxu0
  %2191 = vmatprep.mubr.f32.mxu0 0.0
  %v2192 = vand.u32 %v2014, 4294901760
  %v2193 = vsub.f32 %v2014, %v2192
  %v2194 = vand.u32 %v2193, 4294901760
  %v2195 = vsub.f32 %v2193, %v2194
  %v2196 = vand.u32 %v2195, 4294901760
  %2197 = vmatmul.mubr.f32.gmra.mrb[0].mxu0 %v2196
  %v2198 = vpop.f32.mrb[0].mxu0
  %v2199 = vadd.f32 %v1830, %v2198
  %v2200 = vpop.f32.mrb[0].mxu0
  %2201 = vmatprep.mubr.f32.mxu0 0.0
  %v2202 = vand.u32 %v2017, 4294901760
  %v2203 = vsub.f32 %v2017, %v2202
  %v2204 = vand.u32 %v2203, 4294901760
  %v2205 = vsub.f32 %v2203, %v2204
  %v2206 = vand.u32 %v2205, 4294901760
  %2207 = vmatmul.mubr.f32.gmra.mrb[0].mxu0 %v2206
  %v2208 = vpop.f32.mrb[0].mxu0
  %v2209 = vadd.f32 %v1836, %v2208
  %v2210 = vpop.f32.mrb[0].mxu0
  %2211 = vmatprep.mubr.f32.mxu0 0.0
  %v2212 = vand.u32 %v2020, 4294901760
  %v2213 = vsub.f32 %v2020, %v2212
  %v2214 = vand.u32 %v2213, 4294901760
  %v2215 = vsub.f32 %v2213, %v2214
  %v2216 = vand.u32 %v2215, 4294901760
  %2217 = vmatmul.mubr.f32.gmra.mrb[0].mxu0 %v2216
  %v2218 = vpop.f32.mrb[0].mxu0
  %v2219 = vadd.f32 %v1842, %v2218
  %v2220 = vpop.f32.mrb[0].mxu0
  %2221 = vmatprep.mubr.f32.mxu0 0.0
  %v2222 = vand.u32 %v2023, 4294901760
  %v2223 = vsub.f32 %v2023, %v2222
  %v2224 = vand.u32 %v2223, 4294901760
  %v2225 = vsub.f32 %v2223, %v2224
  %v2226 = vand.u32 %v2225, 4294901760
  %2227 = vmatmul.mubr.f32.gmra.mrb[0].mxu0 %v2226
  %v2228 = vpop.f32.mrb[0].mxu0
  %v2229 = vadd.f32 %v1848, %v2228
  %v2230 = vpop.f32.mrb[0].mxu0
  %2231 = vmatprep.mubr.f32.mxu0 0.0
  %v2232 = vand.u32 %v2026, 4294901760
  %v2233 = vsub.f32 %v2026, %v2232
  %v2234 = vand.u32 %v2233, 4294901760
  %v2235 = vsub.f32 %v2233, %v2234
  %v2236 = vand.u32 %v2235, 4294901760
  %2237 = vmatmul.mubr.f32.gmra.mrb[0].mxu0 %v2236
  %v2238 = vpop.f32.mrb[0].mxu0
  %v2239 = vadd.f32 %v1854, %v2238
  %v2240 = vpop.f32.mrb[0].mxu0
  %2241 = vmatprep.mubr.f32.mxu0 0.0
  %v2242 = vand.u32 %v2029, 4294901760
  %v2243 = vsub.f32 %v2029, %v2242
  %v2244 = vand.u32 %v2243, 4294901760
  %v2245 = vsub.f32 %v2243, %v2244
  %v2246 = vand.u32 %v2245, 4294901760
  %2247 = vmatmul.mubr.f32.gmra.mrb[0].mxu0 %v2246
  %v2248 = vpop.f32.mrb[0].mxu0
  %v2249 = vadd.f32 %v1860, %v2248
  %v2250 = vpop.f32.mrb[0].mxu0
  %2251 = vmatprep.mubr.f32.mxu0 0.0
  %v2252 = vand.u32 %v2032, 4294901760
  %v2253 = vsub.f32 %v2032, %v2252
  %v2254 = vand.u32 %v2253, 4294901760
  %v2255 = vsub.f32 %v2253, %v2254
  %v2256 = vand.u32 %v2255, 4294901760
  %2257 = vmatmul.mubr.f32.gmra.mrb[0].mxu0 %v2256
  %v2258 = vpop.f32.mrb[0].mxu0
  %v2259 = vadd.f32 %v1866, %v2258
  %v2260 = vpop.f32.mrb[0].mxu0
  %2261 = vmatprep.mubr.f32.mxu0 0.0
  %v2262 = vand.u32 %v2035, 4294901760
  %v2263 = vsub.f32 %v2035, %v2262
  %v2264 = vand.u32 %v2263, 4294901760
  %v2265 = vsub.f32 %v2263, %v2264
  %v2266 = vand.u32 %v2265, 4294901760
  %2267 = vmatmul.mubr.f32.gmra.mrb[0].mxu0 %v2266
  %v2268 = vpop.f32.mrb[0].mxu0
  %v2269 = vadd.f32 %v1872, %v2268
  %v2270 = vpop.f32.mrb[0].mxu0
  %2271 = vmatprep.mubr.f32.mxu0 0.0
  %v2272 = vand.u32 %v2038, 4294901760
  %v2273 = vsub.f32 %v2038, %v2272
  %v2274 = vand.u32 %v2273, 4294901760
  %v2275 = vsub.f32 %v2273, %v2274
  %v2276 = vand.u32 %v2275, 4294901760
  %2277 = vmatmul.mubr.f32.gmra.mrb[0].mxu0 %v2276
  %v2278 = vpop.f32.mrb[0].mxu0
  %v2279 = vadd.f32 %v1878, %v2278
  %v2280 = vpop.f32.mrb[0].mxu0
  %2281 = vmatprep.mubr.f32.mxu0 0.0
  %v2282 = vand.u32 %v2041, 4294901760
  %v2283 = vsub.f32 %v2041, %v2282
  %v2284 = vand.u32 %v2283, 4294901760
  %v2285 = vsub.f32 %v2283, %v2284
  %v2286 = vand.u32 %v2285, 4294901760
  %2287 = vmatmul.mubr.f32.gmra.mrb[0].mxu0 %v2286
  %v2288 = vpop.f32.mrb[0].mxu0
  %v2289 = vadd.f32 %v1884, %v2288
  %v2290 = vpop.f32.mrb[0].mxu0
  %2291 = vmatprep.mubr.f32.mxu0 0.0
  %v2292 = vand.u32 %v2044, 4294901760
  %v2293 = vsub.f32 %v2044, %v2292
  %v2294 = vand.u32 %v2293, 4294901760
  %v2295 = vsub.f32 %v2293, %v2294
  %v2296 = vand.u32 %v2295, 4294901760
  %2297 = vmatmul.mubr.f32.gmra.mrb[0].mxu0 %v2296
  %v2298 = vpop.f32.mrb[0].mxu0
  %v2299 = vadd.f32 %v1890, %v2298
  %v2300 = vpop.f32.mrb[0].mxu0
  %2301 = vmatprep.mubr.f32.mxu0 0.0
  %v2302 = vand.u32 %v2047, 4294901760
  %v2303 = vsub.f32 %v2047, %v2302
  %v2304 = vand.u32 %v2303, 4294901760
  %v2305 = vsub.f32 %v2303, %v2304
  %v2306 = vand.u32 %v2305, 4294901760
  %2307 = vmatmul.mubr.f32.gmra.mrb[0].mxu0 %v2306
  %v2308 = vpop.f32.mrb[0].mxu0
  %v2309 = vadd.f32 %v1896, %v2308
  %v2310 = vpop.f32.mrb[0].mxu0
  %2311 = vmatprep.mubr.f32.mxu0 0.0
  %v2312 = vand.u32 %v2050, 4294901760
  %v2313 = vsub.f32 %v2050, %v2312
  %v2314 = vand.u32 %v2313, 4294901760
  %v2315 = vsub.f32 %v2313, %v2314
  %v2316 = vand.u32 %v2315, 4294901760
  %2317 = vmatmul.mubr.f32.gmra.mrb[0].mxu0 %v2316
  %v2318 = vpop.f32.mrb[0].mxu0
  %v2319 = vadd.f32 %v1902, %v2318
  %v2320 = vpop.f32.mrb[0].mxu0
  %2321 = vmatprep.mubr.f32.mxu0 0.0
  %v2322 = vand.u32 %v2053, 4294901760
  %v2323 = vsub.f32 %v2053, %v2322
  %v2324 = vand.u32 %v2323, 4294901760
  %v2325 = vsub.f32 %v2323, %v2324
  %v2326 = vand.u32 %v2325, 4294901760
  %2327 = vmatmul.mubr.f32.gmra.mrb[0].mxu0 %v2326
  %v2328 = vpop.f32.mrb[0].mxu0
  %v2329 = vadd.f32 %v1908, %v2328
  %v2330 = vpop.f32.mrb[0].mxu0
  %2331 = vmatprep.mubr.f32.mxu0 0.0
  %v2332 = vand.u32 %v2056, 4294901760
  %v2333 = vsub.f32 %v2056, %v2332
  %v2334 = vand.u32 %v2333, 4294901760
  %v2335 = vsub.f32 %v2333, %v2334
  %v2336 = vand.u32 %v2335, 4294901760
  %2337 = vmatmul.mubr.f32.gmra.mrb[0].mxu0 %v2336
  %v2338 = vpop.f32.mrb[0].mxu0
  %v2339 = vadd.f32 %v1914, %v2338
  %v2340 = vpop.f32.mrb[0].mxu0
  %2341 = vmatprep.mubr.f32.mxu0 0.0
  %v2342 = vand.u32 %v2059, 4294901760
  %v2343 = vsub.f32 %v2059, %v2342
  %v2344 = vand.u32 %v2343, 4294901760
  %v2345 = vsub.f32 %v2343, %v2344
  %v2346 = vand.u32 %v2345, 4294901760
  %2347 = vmatmul.mubr.f32.gmra.mrb[0].mxu0 %v2346
  %v2348 = vpop.f32.mrb[0].mxu0
  %v2349 = vadd.f32 %v1920, %v2348
  %v2350 = vpop.f32.mrb[0].mxu0
  %2351 = vmatprep.mubr.f32.mxu0 0.0
  %v2352 = vand.u32 %v2062, 4294901760
  %v2353 = vsub.f32 %v2062, %v2352
  %v2354 = vand.u32 %v2353, 4294901760
  %v2355 = vsub.f32 %v2353, %v2354
  %v2356 = vand.u32 %v2355, 4294901760
  %2357 = vmatmul.mubr.f32.gmra.mrb[0].mxu0 %v2356
  %v2358 = vpop.f32.mrb[0].mxu0
  %v2359 = vadd.f32 %v1926, %v2358
  %v2360 = vpop.f32.mrb[0].mxu0
  %2361 = vmatprep.mubr.f32.mxu0 0.0
  %v2362 = vand.u32 %v2065, 4294901760
  %v2363 = vsub.f32 %v2065, %v2362
  %v2364 = vand.u32 %v2363, 4294901760
  %v2365 = vsub.f32 %v2363, %v2364
  %v2366 = vand.u32 %v2365, 4294901760
  %2367 = vmatmul.mubr.f32.gmra.mrb[0].mxu0 %v2366
  %v2368 = vpop.f32.mrb[0].mxu0
  %v2369 = vadd.f32 %v1932, %v2368
  %v2370 = vpop.f32.mrb[0].mxu0
  %2371 = vmatprep.mubr.f32.mxu0 0.0
  %v2372 = vand.u32 %v2068, 4294901760
  %v2373 = vsub.f32 %v2068, %v2372
  %v2374 = vand.u32 %v2373, 4294901760
  %v2375 = vsub.f32 %v2373, %v2374
  %v2376 = vand.u32 %v2375, 4294901760
  %2377 = vmatmul.mubr.f32.gmra.mrb[0].mxu0 %v2376
  %v2378 = vpop.f32.mrb[0].mxu0
  %v2379 = vadd.f32 %v1938, %v2378
  %v2380 = vpop.f32.mrb[0].mxu0
  %2381 = vmatprep.mubr.f32.mxu0 0.0
  %v2382 = vand.u32 %v2071, 4294901760
  %v2383 = vsub.f32 %v2071, %v2382
  %v2384 = vand.u32 %v2383, 4294901760
  %v2385 = vsub.f32 %v2383, %v2384
  %v2386 = vand.u32 %v2385, 4294901760
  %2387 = vmatmul.mubr.f32.gmra.mrb[0].mxu0 %v2386
  %v2388 = vpop.f32.mrb[0].mxu0
  %v2389 = vadd.f32 %v1944, %v2388
  %v2390 = vpop.f32.mrb[0].mxu0
  %2391 = vmatprep.mubr.f32.mxu0 0.0
  %v2392 = vand.u32 %v2074, 4294901760
  %v2393 = vsub.f32 %v2074, %v2392
  %v2394 = vand.u32 %v2393, 4294901760
  %v2395 = vsub.f32 %v2393, %v2394
  %v2396 = vand.u32 %v2395, 4294901760
  %2397 = vmatmul.mubr.f32.gmra.mrb[0].mxu0 %v2396
  %v2398 = vpop.f32.mrb[0].mxu0
  %v2399 = vadd.f32 %v1950, %v2398
  %v2400 = vpop.f32.mrb[0].mxu0
  %2401 = vmatprep.mubr.f32.mxu0 0.0
  %v2402 = vand.u32 %v2077, 4294901760
  %v2403 = vsub.f32 %v2077, %v2402
  %v2404 = vand.u32 %v2403, 4294901760
  %v2405 = vsub.f32 %v2403, %v2404
  %v2406 = vand.u32 %v2405, 4294901760
  %2407 = vmatmul.mubr.f32.gmra.mrb[0].mxu0 %v2406
  %v2408 = vpop.f32.mrb[0].mxu0
  %v2409 = vadd.f32 %v1956, %v2408
  %v2410 = vpop.f32.mrb[0].mxu0
  %2411 = vmatprep.mubr.f32.mxu0 0.0
  %v2412 = vand.u32 %v2080, 4294901760
  %v2413 = vsub.f32 %v2080, %v2412
  %v2414 = vand.u32 %v2413, 4294901760
  %v2415 = vsub.f32 %v2413, %v2414
  %v2416 = vand.u32 %v2415, 4294901760
  %2417 = vmatmul.mubr.f32.gmra.mrb[0].mxu0 %v2416
  %v2418 = vpop.f32.mrb[0].mxu0
  %v2419 = vadd.f32 %v1962, %v2418
  %v2420 = vpop.f32.mrb[0].mxu0
  %2421 = vmatprep.mubr.f32.mxu0 0.0
  %v2422 = vand.u32 %v2083, 4294901760
  %v2423 = vsub.f32 %v2083, %v2422
  %v2424 = vand.u32 %v2423, 4294901760
  %v2425 = vsub.f32 %v2423, %v2424
  %v2426 = vand.u32 %v2425, 4294901760
  %2427 = vmatmul.mubr.f32.gmra.mrb[0].mxu0 %v2426
  %v2428 = vpop.f32.mrb[0].mxu0
  %v2429 = vadd.f32 %v1968, %v2428
  %v2430 = vpop.f32.mrb[0].mxu0
  %2431 = vmatprep.mubr.f32.mxu0 0.0
  %v2432 = vand.u32 %v2086, 4294901760
  %v2433 = vsub.f32 %v2086, %v2432
  %v2434 = vand.u32 %v2433, 4294901760
  %v2435 = vsub.f32 %v2433, %v2434
  %v2436 = vand.u32 %v2435, 4294901760
  %2437 = vmatmul.mubr.f32.gmra.mrb[0].mxu0 %v2436
  %v2438 = vpop.f32.mrb[0].mxu0
  %v2439 = vadd.f32 %v1974, %v2438
  %v2440 = vpop.f32.mrb[0].mxu0
  %2441 = vmatprep.mubr.f32.mxu0 0.0
  %v2442 = vand.u32 %v2089, 4294901760
  %v2443 = vsub.f32 %v2089, %v2442
  %v2444 = vand.u32 %v2443, 4294901760
  %v2445 = vsub.f32 %v2443, %v2444
  %v2446 = vand.u32 %v2445, 4294901760
  %2447 = vmatmul.mubr.f32.gmra.mrb[0].mxu0 %v2446
  %v2448 = vpop.f32.mrb[0].mxu0
  %v2449 = vadd.f32 %v1980, %v2448
  %v2450 = vpop.f32.mrb[0].mxu0
  %2451 = vmatprep.mubr.f32.mxu0 0.0
  %v2452 = vand.u32 %v2092, 4294901760
  %v2453 = vsub.f32 %v2092, %v2452
  %v2454 = vand.u32 %v2453, 4294901760
  %v2455 = vsub.f32 %v2453, %v2454
  %v2456 = vand.u32 %v2455, 4294901760
  %2457 = vmatmul.mubr.f32.gmra.mrb[0].mxu0 %v2456
  %v2458 = vpop.f32.mrb[0].mxu0
  %v2459 = vadd.f32 %v1986, %v2458
  %v2460 = vpop.f32.mrb[0].mxu0
  %2461 = vmatprep.mubr.f32.mxu0 0.0
  %v2462 = vand.u32 %v2095, 4294901760
  %v2463 = vsub.f32 %v2095, %v2462
  %v2464 = vand.u32 %v2463, 4294901760
  %v2465 = vsub.f32 %v2463, %v2464
  %v2466 = vand.u32 %v2465, 4294901760
  %2467 = vmatmul.mubr.f32.gmra.mrb[0].mxu0 %v2466
  %v2468 = vpop.f32.mrb[0].mxu0
  %v2469 = vadd.f32 %v1992, %v2468
  %v2470 = vpop.f32.mrb[0].mxu0
  %2471 = vmatprep.mubr.f32.mxu0 0.0
  %v2472 = vand.u32 %v2098, 4294901760
  %v2473 = vsub.f32 %v2098, %v2472
  %v2474 = vand.u32 %v2473, 4294901760
  %v2475 = vsub.f32 %v2473, %v2474
  %v2476 = vand.u32 %v2475, 4294901760
  %2477 = vmatmul.mubr.f32.gmra.mrb[0].mxu0 %v2476
  %v2478 = vpop.f32.mrb[0].mxu0
  %v2479 = vadd.f32 %v1998, %v2478
  %v2480 = vpop.f32.mrb[0].mxu0
  %2481 = vmatprep.mubr.f32.mxu0 0.0
  %v2482 = vand.u32 %v2101, 4294901760
  %v2483 = vsub.f32 %v2101, %v2482
  %v2484 = vand.u32 %v2483, 4294901760
  %v2485 = vsub.f32 %v2483, %v2484
  %v2486 = vand.u32 %v2485, 4294901760
  %2487 = vmatmul.mubr.f32.gmra.mrb[0].mxu0 %v2486
  %v2488 = vpop.f32.mrb[0].mxu0
  %v2489 = vadd.f32 %v2004, %v2488
  %v2490 = vpop.f32.mrb[0].mxu0
  %2491 = vdwg.mxu0
  %2492 = vmatprep.subr.mxu0 0.0
  %v2493 = vand.u32 %v52, 4294901760
  %v2494 = vsub.f32 %v52, %v2493
  %v2495 = vand.u32 %v2494, 4294901760
  %v2496 = vsub.f32 %v2494, %v2495
  %v2497 = vand.u32 %v2496, 4294901760
  %2498 = vmatpush1.msra.mxu0 %v2497
  %2499 = vmatprep.subr.mxu0 0.0
  %v2500 = vand.u32 %v53, 4294901760
  %v2501 = vsub.f32 %v53, %v2500
  %v2502 = vand.u32 %v2501, 4294901760
  %v2503 = vsub.f32 %v2501, %v2502
  %v2504 = vand.u32 %v2503, 4294901760
  %2505 = vmatpush1.msra.mxu0 %v2504
  %2506 = vmatprep.subr.mxu0 0.0
  %v2507 = vand.u32 %v54, 4294901760
  %v2508 = vsub.f32 %v54, %v2507
  %v2509 = vand.u32 %v2508, 4294901760
  %v2510 = vsub.f32 %v2508, %v2509
  %v2511 = vand.u32 %v2510, 4294901760
  %2512 = vmatpush1.msra.mxu0 %v2511
  %2513 = vmatprep.subr.mxu0 0.0
  %v2514 = vand.u32 %v55, 4294901760
  %v2515 = vsub.f32 %v55, %v2514
  %v2516 = vand.u32 %v2515, 4294901760
  %v2517 = vsub.f32 %v2515, %v2516
  %v2518 = vand.u32 %v2517, 4294901760
  %2519 = vmatpush1.msra.mxu0 %v2518
  %2520 = vmatprep.subr.mxu0 0.0
  %2521 = vmatpush1.msra.mxu0 0.0
  %2522 = vmatprep.subr.mxu0 0.0
  %2523 = vmatpush1.msra.mxu0 0.0
  %2524 = vmatprep.subr.mxu0 0.0
  %2525 = vmatpush1.msra.mxu0 0.0
  %2526 = vmatprep.subr.mxu0 0.0
  %2527 = vmatpush1.msra.mxu0 0.0
  %2528 = vmatprep.subr.mxu0 0.0
  %2529 = vmatpush1.msra.mxu0 0.0
  %2530 = vmatprep.subr.mxu0 0.0
  %2531 = vmatpush1.msra.mxu0 0.0
  %2532 = vmatprep.subr.mxu0 0.0
  %2533 = vmatpush1.msra.mxu0 0.0
  %2534 = vmatprep.subr.mxu0 0.0
  %2535 = vmatpush1.msra.mxu0 0.0
  %2536 = vmatprep.subr.mxu0 0.0
  %2537 = vmatpush1.msra.mxu0 0.0
  %2538 = vmatprep.subr.mxu0 0.0
  %2539 = vmatpush1.msra.mxu0 0.0
  %2540 = vmatprep.subr.mxu0 0.0
  %2541 = vmatpush1.msra.mxu0 0.0
  %2542 = vmatprep.subr.mxu0 0.0
  %2543 = vmatpush1.msra.mxu0 0.0
  %2544 = vmatprep.subr.mxu0 0.0
  %2545 = vmatpush1.msra.mxu0 0.0
  %2546 = vmatprep.subr.mxu0 0.0
  %2547 = vmatpush1.msra.mxu0 0.0
  %2548 = vmatprep.subr.mxu0 0.0
  %2549 = vmatpush1.msra.mxu0 0.0
  %2550 = vmatprep.subr.mxu0 0.0
  %2551 = vmatpush1.msra.mxu0 0.0
  %2552 = vmatprep.subr.mxu0 0.0
  %2553 = vmatpush1.msra.mxu0 0.0
  %2554 = vmatprep.subr.mxu0 0.0
  %2555 = vmatpush1.msra.mxu0 0.0
  %2556 = vmatprep.subr.mxu0 0.0
  %2557 = vmatpush1.msra.mxu0 0.0
  %2558 = vmatprep.subr.mxu0 0.0
  %2559 = vmatpush1.msra.mxu0 0.0
  %2560 = vmatprep.subr.mxu0 0.0
  %2561 = vmatpush1.msra.mxu0 0.0
  %2562 = vmatprep.subr.mxu0 0.0
  %2563 = vmatpush1.msra.mxu0 0.0
  %2564 = vmatprep.subr.mxu0 0.0
  %2565 = vmatpush1.msra.mxu0 0.0
  %2566 = vmatprep.subr.mxu0 0.0
  %2567 = vmatpush1.msra.mxu0 0.0
  %2568 = vmatprep.subr.mxu0 0.0
  %2569 = vmatpush1.msra.mxu0 0.0
  %2570 = vmatprep.subr.mxu0 0.0
  %2571 = vmatpush1.msra.mxu0 0.0
  %2572 = vmatprep.subr.mxu0 0.0
  %2573 = vmatpush1.msra.mxu0 0.0
  %2574 = vmatprep.subr.mxu0 0.0
  %2575 = vmatpush1.msra.mxu0 0.0
  %2576 = vmatprep.mubr.f32.mxu0 0.0
  %v2577 = vand.u32 %v2008, 4294901760
  %2578 = vmatmul.mubr.f32.gmra.mrb[0].mxu0 %v2577
  %v2579 = vpop.f32.mrb[0].mxu0
  %v2580 = vadd.f32 %v2179, %v2579
  %v2581 = vpop.f32.mrb[0].mxu0
  %2582 = vmatprep.mubr.f32.mxu0 0.0
  %v2583 = vand.u32 %v2011, 4294901760
  %2584 = vmatmul.mubr.f32.gmra.mrb[0].mxu0 %v2583
  %v2585 = vpop.f32.mrb[0].mxu0
  %v2586 = vadd.f32 %v2189, %v2585
  %v2587 = vpop.f32.mrb[0].mxu0
  %2588 = vmatprep.mubr.f32.mxu0 0.0
  %v2589 = vand.u32 %v2014, 4294901760
  %2590 = vmatmul.mubr.f32.gmra.mrb[0].mxu0 %v2589
  %v2591 = vpop.f32.mrb[0].mxu0
  %v2592 = vadd.f32 %v2199, %v2591
  %v2593 = vpop.f32.mrb[0].mxu0
  %2594 = vmatprep.mubr.f32.mxu0 0.0
  %v2595 = vand.u32 %v2017, 4294901760
  %2596 = vmatmul.mubr.f32.gmra.mrb[0].mxu0 %v2595
  %v2597 = vpop.f32.mrb[0].mxu0
  %v2598 = vadd.f32 %v2209, %v2597
  %v2599 = vpop.f32.mrb[0].mxu0
  %2600 = vmatprep.mubr.f32.mxu0 0.0
  %v2601 = vand.u32 %v2020, 4294901760
  %2602 = vmatmul.mubr.f32.gmra.mrb[0].mxu0 %v2601
  %v2603 = vpop.f32.mrb[0].mxu0
  %v2604 = vadd.f32 %v2219, %v2603
  %v2605 = vpop.f32.mrb[0].mxu0
  %2606 = vmatprep.mubr.f32.mxu0 0.0
  %v2607 = vand.u32 %v2023, 4294901760
  %2608 = vmatmul.mubr.f32.gmra.mrb[0].mxu0 %v2607
  %v2609 = vpop.f32.mrb[0].mxu0
  %v2610 = vadd.f32 %v2229, %v2609
  %v2611 = vpop.f32.mrb[0].mxu0
  %2612 = vmatprep.mubr.f32.mxu0 0.0
  %v2613 = vand.u32 %v2026, 4294901760
  %2614 = vmatmul.mubr.f32.gmra.mrb[0].mxu0 %v2613
  %v2615 = vpop.f32.mrb[0].mxu0
  %v2616 = vadd.f32 %v2239, %v2615
  %v2617 = vpop.f32.mrb[0].mxu0
  %2618 = vmatprep.mubr.f32.mxu0 0.0
  %v2619 = vand.u32 %v2029, 4294901760
  %2620 = vmatmul.mubr.f32.gmra.mrb[0].mxu0 %v2619
  %v2621 = vpop.f32.mrb[0].mxu0
  %v2622 = vadd.f32 %v2249, %v2621
  %v2623 = vpop.f32.mrb[0].mxu0
  %2624 = vmatprep.mubr.f32.mxu0 0.0
  %v2625 = vand.u32 %v2032, 4294901760
  %2626 = vmatmul.mubr.f32.gmra.mrb[0].mxu0 %v2625
  %v2627 = vpop.f32.mrb[0].mxu0
  %v2628 = vadd.f32 %v2259, %v2627
  %v2629 = vpop.f32.mrb[0].mxu0
  %2630 = vmatprep.mubr.f32.mxu0 0.0
  %v2631 = vand.u32 %v2035, 4294901760
  %2632 = vmatmul.mubr.f32.gmra.mrb[0].mxu0 %v2631
  %v2633 = vpop.f32.mrb[0].mxu0
  %v2634 = vadd.f32 %v2269, %v2633
  %v2635 = vpop.f32.mrb[0].mxu0
  %2636 = vmatprep.mubr.f32.mxu0 0.0
  %v2637 = vand.u32 %v2038, 4294901760
  %2638 = vmatmul.mubr.f32.gmra.mrb[0].mxu0 %v2637
  %v2639 = vpop.f32.mrb[0].mxu0
  %v2640 = vadd.f32 %v2279, %v2639
  %v2641 = vpop.f32.mrb[0].mxu0
  %2642 = vmatprep.mubr.f32.mxu0 0.0
  %v2643 = vand.u32 %v2041, 4294901760
  %2644 = vmatmul.mubr.f32.gmra.mrb[0].mxu0 %v2643
  %v2645 = vpop.f32.mrb[0].mxu0
  %v2646 = vadd.f32 %v2289, %v2645
  %v2647 = vpop.f32.mrb[0].mxu0
  %2648 = vmatprep.mubr.f32.mxu0 0.0
  %v2649 = vand.u32 %v2044, 4294901760
  %2650 = vmatmul.mubr.f32.gmra.mrb[0].mxu0 %v2649
  %v2651 = vpop.f32.mrb[0].mxu0
  %v2652 = vadd.f32 %v2299, %v2651
  %v2653 = vpop.f32.mrb[0].mxu0
  %2654 = vmatprep.mubr.f32.mxu0 0.0
  %v2655 = vand.u32 %v2047, 4294901760
  %2656 = vmatmul.mubr.f32.gmra.mrb[0].mxu0 %v2655
  %v2657 = vpop.f32.mrb[0].mxu0
  %v2658 = vadd.f32 %v2309, %v2657
  %v2659 = vpop.f32.mrb[0].mxu0
  %2660 = vmatprep.mubr.f32.mxu0 0.0
  %v2661 = vand.u32 %v2050, 4294901760
  %2662 = vmatmul.mubr.f32.gmra.mrb[0].mxu0 %v2661
  %v2663 = vpop.f32.mrb[0].mxu0
  %v2664 = vadd.f32 %v2319, %v2663
  %v2665 = vpop.f32.mrb[0].mxu0
  %2666 = vmatprep.mubr.f32.mxu0 0.0
  %v2667 = vand.u32 %v2053, 4294901760
  %2668 = vmatmul.mubr.f32.gmra.mrb[0].mxu0 %v2667
  %v2669 = vpop.f32.mrb[0].mxu0
  %v2670 = vadd.f32 %v2329, %v2669
  %v2671 = vpop.f32.mrb[0].mxu0
  %2672 = vmatprep.mubr.f32.mxu0 0.0
  %v2673 = vand.u32 %v2056, 4294901760
  %2674 = vmatmul.mubr.f32.gmra.mrb[0].mxu0 %v2673
  %v2675 = vpop.f32.mrb[0].mxu0
  %v2676 = vadd.f32 %v2339, %v2675
  %v2677 = vpop.f32.mrb[0].mxu0
  %2678 = vmatprep.mubr.f32.mxu0 0.0
  %v2679 = vand.u32 %v2059, 4294901760
  %2680 = vmatmul.mubr.f32.gmra.mrb[0].mxu0 %v2679
  %v2681 = vpop.f32.mrb[0].mxu0
  %v2682 = vadd.f32 %v2349, %v2681
  %v2683 = vpop.f32.mrb[0].mxu0
  %2684 = vmatprep.mubr.f32.mxu0 0.0
  %v2685 = vand.u32 %v2062, 4294901760
  %2686 = vmatmul.mubr.f32.gmra.mrb[0].mxu0 %v2685
  %v2687 = vpop.f32.mrb[0].mxu0
  %v2688 = vadd.f32 %v2359, %v2687
  %v2689 = vpop.f32.mrb[0].mxu0
  %2690 = vmatprep.mubr.f32.mxu0 0.0
  %v2691 = vand.u32 %v2065, 4294901760
  %2692 = vmatmul.mubr.f32.gmra.mrb[0].mxu0 %v2691
  %v2693 = vpop.f32.mrb[0].mxu0
  %v2694 = vadd.f32 %v2369, %v2693
  %v2695 = vpop.f32.mrb[0].mxu0
  %2696 = vmatprep.mubr.f32.mxu0 0.0
  %v2697 = vand.u32 %v2068, 4294901760
  %2698 = vmatmul.mubr.f32.gmra.mrb[0].mxu0 %v2697
  %v2699 = vpop.f32.mrb[0].mxu0
  %v2700 = vadd.f32 %v2379, %v2699
  %v2701 = vpop.f32.mrb[0].mxu0
  %2702 = vmatprep.mubr.f32.mxu0 0.0
  %v2703 = vand.u32 %v2071, 4294901760
  %2704 = vmatmul.mubr.f32.gmra.mrb[0].mxu0 %v2703
  %v2705 = vpop.f32.mrb[0].mxu0
  %v2706 = vadd.f32 %v2389, %v2705
  %v2707 = vpop.f32.mrb[0].mxu0
  %2708 = vmatprep.mubr.f32.mxu0 0.0
  %v2709 = vand.u32 %v2074, 4294901760
  %2710 = vmatmul.mubr.f32.gmra.mrb[0].mxu0 %v2709
  %v2711 = vpop.f32.mrb[0].mxu0
  %v2712 = vadd.f32 %v2399, %v2711
  %v2713 = vpop.f32.mrb[0].mxu0
  %2714 = vmatprep.mubr.f32.mxu0 0.0
  %v2715 = vand.u32 %v2077, 4294901760
  %2716 = vmatmul.mubr.f32.gmra.mrb[0].mxu0 %v2715
  %v2717 = vpop.f32.mrb[0].mxu0
  %v2718 = vadd.f32 %v2409, %v2717
  %v2719 = vpop.f32.mrb[0].mxu0
  %2720 = vmatprep.mubr.f32.mxu0 0.0
  %v2721 = vand.u32 %v2080, 4294901760
  %2722 = vmatmul.mubr.f32.gmra.mrb[0].mxu0 %v2721
  %v2723 = vpop.f32.mrb[0].mxu0
  %v2724 = vadd.f32 %v2419, %v2723
  %v2725 = vpop.f32.mrb[0].mxu0
  %2726 = vmatprep.mubr.f32.mxu0 0.0
  %v2727 = vand.u32 %v2083, 4294901760
  %2728 = vmatmul.mubr.f32.gmra.mrb[0].mxu0 %v2727
  %v2729 = vpop.f32.mrb[0].mxu0
  %v2730 = vadd.f32 %v2429, %v2729
  %v2731 = vpop.f32.mrb[0].mxu0
  %2732 = vmatprep.mubr.f32.mxu0 0.0
  %v2733 = vand.u32 %v2086, 4294901760
  %2734 = vmatmul.mubr.f32.gmra.mrb[0].mxu0 %v2733
  %v2735 = vpop.f32.mrb[0].mxu0
  %v2736 = vadd.f32 %v2439, %v2735
  %v2737 = vpop.f32.mrb[0].mxu0
  %2738 = vmatprep.mubr.f32.mxu0 0.0
  %v2739 = vand.u32 %v2089, 4294901760
  %2740 = vmatmul.mubr.f32.gmra.mrb[0].mxu0 %v2739
  %v2741 = vpop.f32.mrb[0].mxu0
  %v2742 = vadd.f32 %v2449, %v2741
  %v2743 = vpop.f32.mrb[0].mxu0
  %2744 = vmatprep.mubr.f32.mxu0 0.0
  %v2745 = vand.u32 %v2092, 4294901760
  %2746 = vmatmul.mubr.f32.gmra.mrb[0].mxu0 %v2745
  %v2747 = vpop.f32.mrb[0].mxu0
  %v2748 = vadd.f32 %v2459, %v2747
  %v2749 = vpop.f32.mrb[0].mxu0
  %2750 = vmatprep.mubr.f32.mxu0 0.0
  %v2751 = vand.u32 %v2095, 4294901760
  %2752 = vmatmul.mubr.f32.gmra.mrb[0].mxu0 %v2751
  %v2753 = vpop.f32.mrb[0].mxu0
  %v2754 = vadd.f32 %v2469, %v2753
  %v2755 = vpop.f32.mrb[0].mxu0
  %2756 = vmatprep.mubr.f32.mxu0 0.0
  %v2757 = vand.u32 %v2098, 4294901760
  %2758 = vmatmul.mubr.f32.gmra.mrb[0].mxu0 %v2757
  %v2759 = vpop.f32.mrb[0].mxu0
  %v2760 = vadd.f32 %v2479, %v2759
  %v2761 = vpop.f32.mrb[0].mxu0
  %2762 = vmatprep.mubr.f32.mxu0 0.0
  %v2763 = vand.u32 %v2101, 4294901760
  %2764 = vmatmul.mubr.f32.gmra.mrb[0].mxu0 %v2763
  %v2765 = vpop.f32.mrb[0].mxu0
  %v2766 = vadd.f32 %v2489, %v2765
  %v2767 = vpop.f32.mrb[0].mxu0
  %2768 = vdwg.mxu0
  %2769 = vmatprep.subr.mxu0 0.0
  %v2770 = vand.u32 %v52, 4294901760
  %v2771 = vsub.f32 %v52, %v2770
  %2772 = vmatpush1.msra.mxu0 %v2771
  %2773 = vmatprep.subr.mxu0 0.0
  %v2774 = vand.u32 %v53, 4294901760
  %v2775 = vsub.f32 %v53, %v2774
  %2776 = vmatpush1.msra.mxu0 %v2775
  %2777 = vmatprep.subr.mxu0 0.0
  %v2778 = vand.u32 %v54, 4294901760
  %v2779 = vsub.f32 %v54, %v2778
  %2780 = vmatpush1.msra.mxu0 %v2779
  %2781 = vmatprep.subr.mxu0 0.0
  %v2782 = vand.u32 %v55, 4294901760
  %v2783 = vsub.f32 %v55, %v2782
  %2784 = vmatpush1.msra.mxu0 %v2783
  %2785 = vmatprep.subr.mxu0 0.0
  %2786 = vmatpush1.msra.mxu0 0.0
  %2787 = vmatprep.subr.mxu0 0.0
  %2788 = vmatpush1.msra.mxu0 0.0
  %2789 = vmatprep.subr.mxu0 0.0
  %2790 = vmatpush1.msra.mxu0 0.0
  %2791 = vmatprep.subr.mxu0 0.0
  %2792 = vmatpush1.msra.mxu0 0.0
  %2793 = vmatprep.subr.mxu0 0.0
  %2794 = vmatpush1.msra.mxu0 0.0
  %2795 = vmatprep.subr.mxu0 0.0
  %2796 = vmatpush1.msra.mxu0 0.0
  %2797 = vmatprep.subr.mxu0 0.0
  %2798 = vmatpush1.msra.mxu0 0.0
  %2799 = vmatprep.subr.mxu0 0.0
  %2800 = vmatpush1.msra.mxu0 0.0
  %2801 = vmatprep.subr.mxu0 0.0
  %2802 = vmatpush1.msra.mxu0 0.0
  %2803 = vmatprep.subr.mxu0 0.0
  %2804 = vmatpush1.msra.mxu0 0.0
  %2805 = vmatprep.subr.mxu0 0.0
  %2806 = vmatpush1.msra.mxu0 0.0
  %2807 = vmatprep.subr.mxu0 0.0
  %2808 = vmatpush1.msra.mxu0 0.0
  %2809 = vmatprep.subr.mxu0 0.0
  %2810 = vmatpush1.msra.mxu0 0.0
  %2811 = vmatprep.subr.mxu0 0.0
  %2812 = vmatpush1.msra.mxu0 0.0
  %2813 = vmatprep.subr.mxu0 0.0
  %2814 = vmatpush1.msra.mxu0 0.0
  %2815 = vmatprep.subr.mxu0 0.0
  %2816 = vmatpush1.msra.mxu0 0.0
  %2817 = vmatprep.subr.mxu0 0.0
  %2818 = vmatpush1.msra.mxu0 0.0
  %2819 = vmatprep.subr.mxu0 0.0
  %2820 = vmatpush1.msra.mxu0 0.0
  %2821 = vmatprep.subr.mxu0 0.0
  %2822 = vmatpush1.msra.mxu0 0.0
  %2823 = vmatprep.subr.mxu0 0.0
  %2824 = vmatpush1.msra.mxu0 0.0
  %2825 = vmatprep.subr.mxu0 0.0
  %2826 = vmatpush1.msra.mxu0 0.0
  %2827 = vmatprep.subr.mxu0 0.0
  %2828 = vmatpush1.msra.mxu0 0.0
  %2829 = vmatprep.subr.mxu0 0.0
  %2830 = vmatpush1.msra.mxu0 0.0
  %2831 = vmatprep.subr.mxu0 0.0
  %2832 = vmatpush1.msra.mxu0 0.0
  %2833 = vmatprep.subr.mxu0 0.0
  %2834 = vmatpush1.msra.mxu0 0.0
  %2835 = vmatprep.subr.mxu0 0.0
  %2836 = vmatpush1.msra.mxu0 0.0
  %2837 = vmatprep.subr.mxu0 0.0
  %2838 = vmatpush1.msra.mxu0 0.0
  %2839 = vmatprep.subr.mxu0 0.0
  %2840 = vmatpush1.msra.mxu0 0.0
  %2841 = vmatprep.mubr.f32.mxu0 0.0
  %v2842 = vand.u32 %v2008, 4294901760
  %v2843 = vsub.f32 %v2008, %v2842
  %2844 = vmatmul.mubr.f32.gmra.mrb[0].mxu0 %v2843
  %v2845 = vpop.f32.mrb[0].mxu0
  %v2846 = vadd.f32 %v2580, %v2845
  %v2847 = vpop.f32.mrb[0].mxu0
  %2848 = vmatprep.mubr.f32.mxu0 0.0
  %v2849 = vand.u32 %v2011, 4294901760
  %v2850 = vsub.f32 %v2011, %v2849
  %2851 = vmatmul.mubr.f32.gmra.mrb[0].mxu0 %v2850
  %v2852 = vpop.f32.mrb[0].mxu0
  %v2853 = vadd.f32 %v2586, %v2852
  %v2854 = vpop.f32.mrb[0].mxu0
  %2855 = vmatprep.mubr.f32.mxu0 0.0
  %v2856 = vand.u32 %v2014, 4294901760
  %v2857 = vsub.f32 %v2014, %v2856
  %2858 = vmatmul.mubr.f32.gmra.mrb[0].mxu0 %v2857
  %v2859 = vpop.f32.mrb[0].mxu0
  %v2860 = vadd.f32 %v2592, %v2859
  %v2861 = vpop.f32.mrb[0].mxu0
  %2862 = vmatprep.mubr.f32.mxu0 0.0
  %v2863 = vand.u32 %v2017, 4294901760
  %v2864 = vsub.f32 %v2017, %v2863
  %2865 = vmatmul.mubr.f32.gmra.mrb[0].mxu0 %v2864
  %v2866 = vpop.f32.mrb[0].mxu0
  %v2867 = vadd.f32 %v2598, %v2866
  %v2868 = vpop.f32.mrb[0].mxu0
  %2869 = vmatprep.mubr.f32.mxu0 0.0
  %v2870 = vand.u32 %v2020, 4294901760
  %v2871 = vsub.f32 %v2020, %v2870
  %2872 = vmatmul.mubr.f32.gmra.mrb[0].mxu0 %v2871
  %v2873 = vpop.f32.mrb[0].mxu0
  %v2874 = vadd.f32 %v2604, %v2873
  %v2875 = vpop.f32.mrb[0].mxu0
  %2876 = vmatprep.mubr.f32.mxu0 0.0
  %v2877 = vand.u32 %v2023, 4294901760
  %v2878 = vsub.f32 %v2023, %v2877
  %2879 = vmatmul.mubr.f32.gmra.mrb[0].mxu0 %v2878
  %v2880 = vpop.f32.mrb[0].mxu0
  %v2881 = vadd.f32 %v2610, %v2880
  %v2882 = vpop.f32.mrb[0].mxu0
  %2883 = vmatprep.mubr.f32.mxu0 0.0
  %v2884 = vand.u32 %v2026, 4294901760
  %v2885 = vsub.f32 %v2026, %v2884
  %2886 = vmatmul.mubr.f32.gmra.mrb[0].mxu0 %v2885
  %v2887 = vpop.f32.mrb[0].mxu0
  %v2888 = vadd.f32 %v2616, %v2887
  %v2889 = vpop.f32.mrb[0].mxu0
  %2890 = vmatprep.mubr.f32.mxu0 0.0
  %v2891 = vand.u32 %v2029, 4294901760
  %v2892 = vsub.f32 %v2029, %v2891
  %2893 = vmatmul.mubr.f32.gmra.mrb[0].mxu0 %v2892
  %v2894 = vpop.f32.mrb[0].mxu0
  %v2895 = vadd.f32 %v2622, %v2894
  %v2896 = vpop.f32.mrb[0].mxu0
  %2897 = vmatprep.mubr.f32.mxu0 0.0
  %v2898 = vand.u32 %v2032, 4294901760
  %v2899 = vsub.f32 %v2032, %v2898
  %2900 = vmatmul.mubr.f32.gmra.mrb[0].mxu0 %v2899
  %v2901 = vpop.f32.mrb[0].mxu0
  %v2902 = vadd.f32 %v2628, %v2901
  %v2903 = vpop.f32.mrb[0].mxu0
  %2904 = vmatprep.mubr.f32.mxu0 0.0
  %v2905 = vand.u32 %v2035, 4294901760
  %v2906 = vsub.f32 %v2035, %v2905
  %2907 = vmatmul.mubr.f32.gmra.mrb[0].mxu0 %v2906
  %v2908 = vpop.f32.mrb[0].mxu0
  %v2909 = vadd.f32 %v2634, %v2908
  %v2910 = vpop.f32.mrb[0].mxu0
  %2911 = vmatprep.mubr.f32.mxu0 0.0
  %v2912 = vand.u32 %v2038, 4294901760
  %v2913 = vsub.f32 %v2038, %v2912
  %2914 = vmatmul.mubr.f32.gmra.mrb[0].mxu0 %v2913
  %v2915 = vpop.f32.mrb[0].mxu0
  %v2916 = vadd.f32 %v2640, %v2915
  %v2917 = vpop.f32.mrb[0].mxu0
  %2918 = vmatprep.mubr.f32.mxu0 0.0
  %v2919 = vand.u32 %v2041, 4294901760
  %v2920 = vsub.f32 %v2041, %v2919
  %2921 = vmatmul.mubr.f32.gmra.mrb[0].mxu0 %v2920
  %v2922 = vpop.f32.mrb[0].mxu0
  %v2923 = vadd.f32 %v2646, %v2922
  %v2924 = vpop.f32.mrb[0].mxu0
  %2925 = vmatprep.mubr.f32.mxu0 0.0
  %v2926 = vand.u32 %v2044, 4294901760
  %v2927 = vsub.f32 %v2044, %v2926
  %2928 = vmatmul.mubr.f32.gmra.mrb[0].mxu0 %v2927
  %v2929 = vpop.f32.mrb[0].mxu0
  %v2930 = vadd.f32 %v2652, %v2929
  %v2931 = vpop.f32.mrb[0].mxu0
  %2932 = vmatprep.mubr.f32.mxu0 0.0
  %v2933 = vand.u32 %v2047, 4294901760
  %v2934 = vsub.f32 %v2047, %v2933
  %2935 = vmatmul.mubr.f32.gmra.mrb[0].mxu0 %v2934
  %v2936 = vpop.f32.mrb[0].mxu0
  %v2937 = vadd.f32 %v2658, %v2936
  %v2938 = vpop.f32.mrb[0].mxu0
  %2939 = vmatprep.mubr.f32.mxu0 0.0
  %v2940 = vand.u32 %v2050, 4294901760
  %v2941 = vsub.f32 %v2050, %v2940
  %2942 = vmatmul.mubr.f32.gmra.mrb[0].mxu0 %v2941
  %v2943 = vpop.f32.mrb[0].mxu0
  %v2944 = vadd.f32 %v2664, %v2943
  %v2945 = vpop.f32.mrb[0].mxu0
  %2946 = vmatprep.mubr.f32.mxu0 0.0
  %v2947 = vand.u32 %v2053, 4294901760
  %v2948 = vsub.f32 %v2053, %v2947
  %2949 = vmatmul.mubr.f32.gmra.mrb[0].mxu0 %v2948
  %v2950 = vpop.f32.mrb[0].mxu0
  %v2951 = vadd.f32 %v2670, %v2950
  %v2952 = vpop.f32.mrb[0].mxu0
  %2953 = vmatprep.mubr.f32.mxu0 0.0
  %v2954 = vand.u32 %v2056, 4294901760
  %v2955 = vsub.f32 %v2056, %v2954
  %2956 = vmatmul.mubr.f32.gmra.mrb[0].mxu0 %v2955
  %v2957 = vpop.f32.mrb[0].mxu0
  %v2958 = vadd.f32 %v2676, %v2957
  %v2959 = vpop.f32.mrb[0].mxu0
  %2960 = vmatprep.mubr.f32.mxu0 0.0
  %v2961 = vand.u32 %v2059, 4294901760
  %v2962 = vsub.f32 %v2059, %v2961
  %2963 = vmatmul.mubr.f32.gmra.mrb[0].mxu0 %v2962
  %v2964 = vpop.f32.mrb[0].mxu0
  %v2965 = vadd.f32 %v2682, %v2964
  %v2966 = vpop.f32.mrb[0].mxu0
  %2967 = vmatprep.mubr.f32.mxu0 0.0
  %v2968 = vand.u32 %v2062, 4294901760
  %v2969 = vsub.f32 %v2062, %v2968
  %2970 = vmatmul.mubr.f32.gmra.mrb[0].mxu0 %v2969
  %v2971 = vpop.f32.mrb[0].mxu0
  %v2972 = vadd.f32 %v2688, %v2971
  %v2973 = vpop.f32.mrb[0].mxu0
  %2974 = vmatprep.mubr.f32.mxu0 0.0
  %v2975 = vand.u32 %v2065, 4294901760
  %v2976 = vsub.f32 %v2065, %v2975
  %2977 = vmatmul.mubr.f32.gmra.mrb[0].mxu0 %v2976
  %v2978 = vpop.f32.mrb[0].mxu0
  %v2979 = vadd.f32 %v2694, %v2978
  %v2980 = vpop.f32.mrb[0].mxu0
  %2981 = vmatprep.mubr.f32.mxu0 0.0
  %v2982 = vand.u32 %v2068, 4294901760
  %v2983 = vsub.f32 %v2068, %v2982
  %2984 = vmatmul.mubr.f32.gmra.mrb[0].mxu0 %v2983
  %v2985 = vpop.f32.mrb[0].mxu0
  %v2986 = vadd.f32 %v2700, %v2985
  %v2987 = vpop.f32.mrb[0].mxu0
  %2988 = vmatprep.mubr.f32.mxu0 0.0
  %v2989 = vand.u32 %v2071, 4294901760
  %v2990 = vsub.f32 %v2071, %v2989
  %2991 = vmatmul.mubr.f32.gmra.mrb[0].mxu0 %v2990
  %v2992 = vpop.f32.mrb[0].mxu0
  %v2993 = vadd.f32 %v2706, %v2992
  %v2994 = vpop.f32.mrb[0].mxu0
  %2995 = vmatprep.mubr.f32.mxu0 0.0
  %v2996 = vand.u32 %v2074, 4294901760
  %v2997 = vsub.f32 %v2074, %v2996
  %2998 = vmatmul.mubr.f32.gmra.mrb[0].mxu0 %v2997
  %v2999 = vpop.f32.mrb[0].mxu0
  %v3000 = vadd.f32 %v2712, %v2999
  %v3001 = vpop.f32.mrb[0].mxu0
  %3002 = vmatprep.mubr.f32.mxu0 0.0
  %v3003 = vand.u32 %v2077, 4294901760
  %v3004 = vsub.f32 %v2077, %v3003
  %3005 = vmatmul.mubr.f32.gmra.mrb[0].mxu0 %v3004
  %v3006 = vpop.f32.mrb[0].mxu0
  %v3007 = vadd.f32 %v2718, %v3006
  %v3008 = vpop.f32.mrb[0].mxu0
  %3009 = vmatprep.mubr.f32.mxu0 0.0
  %v3010 = vand.u32 %v2080, 4294901760
  %v3011 = vsub.f32 %v2080, %v3010
  %3012 = vmatmul.mubr.f32.gmra.mrb[0].mxu0 %v3011
  %v3013 = vpop.f32.mrb[0].mxu0
  %v3014 = vadd.f32 %v2724, %v3013
  %v3015 = vpop.f32.mrb[0].mxu0
  %3016 = vmatprep.mubr.f32.mxu0 0.0
  %v3017 = vand.u32 %v2083, 4294901760
  %v3018 = vsub.f32 %v2083, %v3017
  %3019 = vmatmul.mubr.f32.gmra.mrb[0].mxu0 %v3018
  %v3020 = vpop.f32.mrb[0].mxu0
  %v3021 = vadd.f32 %v2730, %v3020
  %v3022 = vpop.f32.mrb[0].mxu0
  %3023 = vmatprep.mubr.f32.mxu0 0.0
  %v3024 = vand.u32 %v2086, 4294901760
  %v3025 = vsub.f32 %v2086, %v3024
  %3026 = vmatmul.mubr.f32.gmra.mrb[0].mxu0 %v3025
  %v3027 = vpop.f32.mrb[0].mxu0
  %v3028 = vadd.f32 %v2736, %v3027
  %v3029 = vpop.f32.mrb[0].mxu0
  %3030 = vmatprep.mubr.f32.mxu0 0.0
  %v3031 = vand.u32 %v2089, 4294901760
  %v3032 = vsub.f32 %v2089, %v3031
  %3033 = vmatmul.mubr.f32.gmra.mrb[0].mxu0 %v3032
  %v3034 = vpop.f32.mrb[0].mxu0
  %v3035 = vadd.f32 %v2742, %v3034
  %v3036 = vpop.f32.mrb[0].mxu0
  %3037 = vmatprep.mubr.f32.mxu0 0.0
  %v3038 = vand.u32 %v2092, 4294901760
  %v3039 = vsub.f32 %v2092, %v3038
  %3040 = vmatmul.mubr.f32.gmra.mrb[0].mxu0 %v3039
  %v3041 = vpop.f32.mrb[0].mxu0
  %v3042 = vadd.f32 %v2748, %v3041
  %v3043 = vpop.f32.mrb[0].mxu0
  %3044 = vmatprep.mubr.f32.mxu0 0.0
  %v3045 = vand.u32 %v2095, 4294901760
  %v3046 = vsub.f32 %v2095, %v3045
  %3047 = vmatmul.mubr.f32.gmra.mrb[0].mxu0 %v3046
  %v3048 = vpop.f32.mrb[0].mxu0
  %v3049 = vadd.f32 %v2754, %v3048
  %v3050 = vpop.f32.mrb[0].mxu0
  %3051 = vmatprep.mubr.f32.mxu0 0.0
  %v3052 = vand.u32 %v2098, 4294901760
  %v3053 = vsub.f32 %v2098, %v3052
  %3054 = vmatmul.mubr.f32.gmra.mrb[0].mxu0 %v3053
  %v3055 = vpop.f32.mrb[0].mxu0
  %v3056 = vadd.f32 %v2760, %v3055
  %v3057 = vpop.f32.mrb[0].mxu0
  %3058 = vmatprep.mubr.f32.mxu0 0.0
  %v3059 = vand.u32 %v2101, 4294901760
  %v3060 = vsub.f32 %v2101, %v3059
  %3061 = vmatmul.mubr.f32.gmra.mrb[0].mxu0 %v3060
  %v3062 = vpop.f32.mrb[0].mxu0
  %v3063 = vadd.f32 %v2766, %v3062
  %v3064 = vpop.f32.mrb[0].mxu0
  %3065 = vdwg.mxu0
  %3066 = vmatprep.subr.mxu0 0.0
  %v3067 = vand.u32 %v52, 4294901760
  %3068 = vmatpush1.msra.mxu0 %v3067
  %3069 = vmatprep.subr.mxu0 0.0
  %v3070 = vand.u32 %v53, 4294901760
  %3071 = vmatpush1.msra.mxu0 %v3070
  %3072 = vmatprep.subr.mxu0 0.0
  %v3073 = vand.u32 %v54, 4294901760
  %3074 = vmatpush1.msra.mxu0 %v3073
  %3075 = vmatprep.subr.mxu0 0.0
  %v3076 = vand.u32 %v55, 4294901760
  %3077 = vmatpush1.msra.mxu0 %v3076
  %3078 = vmatprep.subr.mxu0 0.0
  %3079 = vmatpush1.msra.mxu0 0.0
  %3080 = vmatprep.subr.mxu0 0.0
  %3081 = vmatpush1.msra.mxu0 0.0
  %3082 = vmatprep.subr.mxu0 0.0
  %3083 = vmatpush1.msra.mxu0 0.0
  %3084 = vmatprep.subr.mxu0 0.0
  %3085 = vmatpush1.msra.mxu0 0.0
  %3086 = vmatprep.subr.mxu0 0.0
  %3087 = vmatpush1.msra.mxu0 0.0
  %3088 = vmatprep.subr.mxu0 0.0
  %3089 = vmatpush1.msra.mxu0 0.0
  %3090 = vmatprep.subr.mxu0 0.0
  %3091 = vmatpush1.msra.mxu0 0.0
  %3092 = vmatprep.subr.mxu0 0.0
  %3093 = vmatpush1.msra.mxu0 0.0
  %3094 = vmatprep.subr.mxu0 0.0
  %3095 = vmatpush1.msra.mxu0 0.0
  %3096 = vmatprep.subr.mxu0 0.0
  %3097 = vmatpush1.msra.mxu0 0.0
  %3098 = vmatprep.subr.mxu0 0.0
  %3099 = vmatpush1.msra.mxu0 0.0
  %3100 = vmatprep.subr.mxu0 0.0
  %3101 = vmatpush1.msra.mxu0 0.0
  %3102 = vmatprep.subr.mxu0 0.0
  %3103 = vmatpush1.msra.mxu0 0.0
  %3104 = vmatprep.subr.mxu0 0.0
  %3105 = vmatpush1.msra.mxu0 0.0
  %3106 = vmatprep.subr.mxu0 0.0
  %3107 = vmatpush1.msra.mxu0 0.0
  %3108 = vmatprep.subr.mxu0 0.0
  %3109 = vmatpush1.msra.mxu0 0.0
  %3110 = vmatprep.subr.mxu0 0.0
  %3111 = vmatpush1.msra.mxu0 0.0
  %3112 = vmatprep.subr.mxu0 0.0
  %3113 = vmatpush1.msra.mxu0 0.0
  %3114 = vmatprep.subr.mxu0 0.0
  %3115 = vmatpush1.msra.mxu0 0.0
  %3116 = vmatprep.subr.mxu0 0.0
  %3117 = vmatpush1.msra.mxu0 0.0
  %3118 = vmatprep.subr.mxu0 0.0
  %3119 = vmatpush1.msra.mxu0 0.0
  %3120 = vmatprep.subr.mxu0 0.0
  %3121 = vmatpush1.msra.mxu0 0.0
  %3122 = vmatprep.subr.mxu0 0.0
  %3123 = vmatpush1.msra.mxu0 0.0
  %3124 = vmatprep.subr.mxu0 0.0
  %3125 = vmatpush1.msra.mxu0 0.0
  %3126 = vmatprep.subr.mxu0 0.0
  %3127 = vmatpush1.msra.mxu0 0.0
  %3128 = vmatprep.subr.mxu0 0.0
  %3129 = vmatpush1.msra.mxu0 0.0
  %3130 = vmatprep.subr.mxu0 0.0
  %3131 = vmatpush1.msra.mxu0 0.0
  %3132 = vmatprep.subr.mxu0 0.0
  %3133 = vmatpush1.msra.mxu0 0.0
  %3134 = vmatprep.mubr.f32.mxu0 0.0
  %v3135 = vand.u32 %v2008, 4294901760
  %v3136 = vsub.f32 %v2008, %v3135
  %v3137 = vand.u32 %v3136, 4294901760
  %3138 = vmatmul.mubr.f32.gmra.mrb[0].mxu0 %v3137
  %v3139 = vpop.f32.mrb[0].mxu0
  %v3140 = vadd.f32 %v2846, %v3139
  %v3141 = vpop.f32.mrb[0].mxu0
  %3142 = vmatprep.mubr.f32.mxu0 0.0
  %v3143 = vand.u32 %v2011, 4294901760
  %v3144 = vsub.f32 %v2011, %v3143
  %v3145 = vand.u32 %v3144, 4294901760
  %3146 = vmatmul.mubr.f32.gmra.mrb[0].mxu0 %v3145
  %v3147 = vpop.f32.mrb[0].mxu0
  %v3148 = vadd.f32 %v2853, %v3147
  %v3149 = vpop.f32.mrb[0].mxu0
  %3150 = vmatprep.mubr.f32.mxu0 0.0
  %v3151 = vand.u32 %v2014, 4294901760
  %v3152 = vsub.f32 %v2014, %v3151
  %v3153 = vand.u32 %v3152, 4294901760
  %3154 = vmatmul.mubr.f32.gmra.mrb[0].mxu0 %v3153
  %v3155 = vpop.f32.mrb[0].mxu0
  %v3156 = vadd.f32 %v2860, %v3155
  %v3157 = vpop.f32.mrb[0].mxu0
  %3158 = vmatprep.mubr.f32.mxu0 0.0
  %v3159 = vand.u32 %v2017, 4294901760
  %v3160 = vsub.f32 %v2017, %v3159
  %v3161 = vand.u32 %v3160, 4294901760
  %3162 = vmatmul.mubr.f32.gmra.mrb[0].mxu0 %v3161
  %v3163 = vpop.f32.mrb[0].mxu0
  %v3164 = vadd.f32 %v2867, %v3163
  %v3165 = vpop.f32.mrb[0].mxu0
  %3166 = vmatprep.mubr.f32.mxu0 0.0
  %v3167 = vand.u32 %v2020, 4294901760
  %v3168 = vsub.f32 %v2020, %v3167
  %v3169 = vand.u32 %v3168, 4294901760
  %3170 = vmatmul.mubr.f32.gmra.mrb[0].mxu0 %v3169
  %v3171 = vpop.f32.mrb[0].mxu0
  %v3172 = vadd.f32 %v2874, %v3171
  %v3173 = vpop.f32.mrb[0].mxu0
  %3174 = vmatprep.mubr.f32.mxu0 0.0
  %v3175 = vand.u32 %v2023, 4294901760
  %v3176 = vsub.f32 %v2023, %v3175
  %v3177 = vand.u32 %v3176, 4294901760
  %3178 = vmatmul.mubr.f32.gmra.mrb[0].mxu0 %v3177
  %v3179 = vpop.f32.mrb[0].mxu0
  %v3180 = vadd.f32 %v2881, %v3179
  %v3181 = vpop.f32.mrb[0].mxu0
  %3182 = vmatprep.mubr.f32.mxu0 0.0
  %v3183 = vand.u32 %v2026, 4294901760
  %v3184 = vsub.f32 %v2026, %v3183
  %v3185 = vand.u32 %v3184, 4294901760
  %3186 = vmatmul.mubr.f32.gmra.mrb[0].mxu0 %v3185
  %v3187 = vpop.f32.mrb[0].mxu0
  %v3188 = vadd.f32 %v2888, %v3187
  %v3189 = vpop.f32.mrb[0].mxu0
  %3190 = vmatprep.mubr.f32.mxu0 0.0
  %v3191 = vand.u32 %v2029, 4294901760
  %v3192 = vsub.f32 %v2029, %v3191
  %v3193 = vand.u32 %v3192, 4294901760
  %3194 = vmatmul.mubr.f32.gmra.mrb[0].mxu0 %v3193
  %v3195 = vpop.f32.mrb[0].mxu0
  %v3196 = vadd.f32 %v2895, %v3195
  %v3197 = vpop.f32.mrb[0].mxu0
  %3198 = vmatprep.mubr.f32.mxu0 0.0
  %v3199 = vand.u32 %v2032, 4294901760
  %v3200 = vsub.f32 %v2032, %v3199
  %v3201 = vand.u32 %v3200, 4294901760
  %3202 = vmatmul.mubr.f32.gmra.mrb[0].mxu0 %v3201
  %v3203 = vpop.f32.mrb[0].mxu0
  %v3204 = vadd.f32 %v2902, %v3203
  %v3205 = vpop.f32.mrb[0].mxu0
  %3206 = vmatprep.mubr.f32.mxu0 0.0
  %v3207 = vand.u32 %v2035, 4294901760
  %v3208 = vsub.f32 %v2035, %v3207
  %v3209 = vand.u32 %v3208, 4294901760
  %3210 = vmatmul.mubr.f32.gmra.mrb[0].mxu0 %v3209
  %v3211 = vpop.f32.mrb[0].mxu0
  %v3212 = vadd.f32 %v2909, %v3211
  %v3213 = vpop.f32.mrb[0].mxu0
  %3214 = vmatprep.mubr.f32.mxu0 0.0
  %v3215 = vand.u32 %v2038, 4294901760
  %v3216 = vsub.f32 %v2038, %v3215
  %v3217 = vand.u32 %v3216, 4294901760
  %3218 = vmatmul.mubr.f32.gmra.mrb[0].mxu0 %v3217
  %v3219 = vpop.f32.mrb[0].mxu0
  %v3220 = vadd.f32 %v2916, %v3219
  %v3221 = vpop.f32.mrb[0].mxu0
  %3222 = vmatprep.mubr.f32.mxu0 0.0
  %v3223 = vand.u32 %v2041, 4294901760
  %v3224 = vsub.f32 %v2041, %v3223
  %v3225 = vand.u32 %v3224, 4294901760
  %3226 = vmatmul.mubr.f32.gmra.mrb[0].mxu0 %v3225
  %v3227 = vpop.f32.mrb[0].mxu0
  %v3228 = vadd.f32 %v2923, %v3227
  %v3229 = vpop.f32.mrb[0].mxu0
  %3230 = vmatprep.mubr.f32.mxu0 0.0
  %v3231 = vand.u32 %v2044, 4294901760
  %v3232 = vsub.f32 %v2044, %v3231
  %v3233 = vand.u32 %v3232, 4294901760
  %3234 = vmatmul.mubr.f32.gmra.mrb[0].mxu0 %v3233
  %v3235 = vpop.f32.mrb[0].mxu0
  %v3236 = vadd.f32 %v2930, %v3235
  %v3237 = vpop.f32.mrb[0].mxu0
  %3238 = vmatprep.mubr.f32.mxu0 0.0
  %v3239 = vand.u32 %v2047, 4294901760
  %v3240 = vsub.f32 %v2047, %v3239
  %v3241 = vand.u32 %v3240, 4294901760
  %3242 = vmatmul.mubr.f32.gmra.mrb[0].mxu0 %v3241
  %v3243 = vpop.f32.mrb[0].mxu0
  %v3244 = vadd.f32 %v2937, %v3243
  %v3245 = vpop.f32.mrb[0].mxu0
  %3246 = vmatprep.mubr.f32.mxu0 0.0
  %v3247 = vand.u32 %v2050, 4294901760
  %v3248 = vsub.f32 %v2050, %v3247
  %v3249 = vand.u32 %v3248, 4294901760
  %3250 = vmatmul.mubr.f32.gmra.mrb[0].mxu0 %v3249
  %v3251 = vpop.f32.mrb[0].mxu0
  %v3252 = vadd.f32 %v2944, %v3251
  %v3253 = vpop.f32.mrb[0].mxu0
  %3254 = vmatprep.mubr.f32.mxu0 0.0
  %v3255 = vand.u32 %v2053, 4294901760
  %v3256 = vsub.f32 %v2053, %v3255
  %v3257 = vand.u32 %v3256, 4294901760
  %3258 = vmatmul.mubr.f32.gmra.mrb[0].mxu0 %v3257
  %v3259 = vpop.f32.mrb[0].mxu0
  %v3260 = vadd.f32 %v2951, %v3259
  %v3261 = vpop.f32.mrb[0].mxu0
  %3262 = vmatprep.mubr.f32.mxu0 0.0
  %v3263 = vand.u32 %v2056, 4294901760
  %v3264 = vsub.f32 %v2056, %v3263
  %v3265 = vand.u32 %v3264, 4294901760
  %3266 = vmatmul.mubr.f32.gmra.mrb[0].mxu0 %v3265
  %v3267 = vpop.f32.mrb[0].mxu0
  %v3268 = vadd.f32 %v2958, %v3267
  %v3269 = vpop.f32.mrb[0].mxu0
  %3270 = vmatprep.mubr.f32.mxu0 0.0
  %v3271 = vand.u32 %v2059, 4294901760
  %v3272 = vsub.f32 %v2059, %v3271
  %v3273 = vand.u32 %v3272, 4294901760
  %3274 = vmatmul.mubr.f32.gmra.mrb[0].mxu0 %v3273
  %v3275 = vpop.f32.mrb[0].mxu0
  %v3276 = vadd.f32 %v2965, %v3275
  %v3277 = vpop.f32.mrb[0].mxu0
  %3278 = vmatprep.mubr.f32.mxu0 0.0
  %v3279 = vand.u32 %v2062, 4294901760
  %v3280 = vsub.f32 %v2062, %v3279
  %v3281 = vand.u32 %v3280, 4294901760
  %3282 = vmatmul.mubr.f32.gmra.mrb[0].mxu0 %v3281
  %v3283 = vpop.f32.mrb[0].mxu0
  %v3284 = vadd.f32 %v2972, %v3283
  %v3285 = vpop.f32.mrb[0].mxu0
  %3286 = vmatprep.mubr.f32.mxu0 0.0
  %v3287 = vand.u32 %v2065, 4294901760
  %v3288 = vsub.f32 %v2065, %v3287
  %v3289 = vand.u32 %v3288, 4294901760
  %3290 = vmatmul.mubr.f32.gmra.mrb[0].mxu0 %v3289
  %v3291 = vpop.f32.mrb[0].mxu0
  %v3292 = vadd.f32 %v2979, %v3291
  %v3293 = vpop.f32.mrb[0].mxu0
  %3294 = vmatprep.mubr.f32.mxu0 0.0
  %v3295 = vand.u32 %v2068, 4294901760
  %v3296 = vsub.f32 %v2068, %v3295
  %v3297 = vand.u32 %v3296, 4294901760
  %3298 = vmatmul.mubr.f32.gmra.mrb[0].mxu0 %v3297
  %v3299 = vpop.f32.mrb[0].mxu0
  %v3300 = vadd.f32 %v2986, %v3299
  %v3301 = vpop.f32.mrb[0].mxu0
  %3302 = vmatprep.mubr.f32.mxu0 0.0
  %v3303 = vand.u32 %v2071, 4294901760
  %v3304 = vsub.f32 %v2071, %v3303
  %v3305 = vand.u32 %v3304, 4294901760
  %3306 = vmatmul.mubr.f32.gmra.mrb[0].mxu0 %v3305
  %v3307 = vpop.f32.mrb[0].mxu0
  %v3308 = vadd.f32 %v2993, %v3307
  %v3309 = vpop.f32.mrb[0].mxu0
  %3310 = vmatprep.mubr.f32.mxu0 0.0
  %v3311 = vand.u32 %v2074, 4294901760
  %v3312 = vsub.f32 %v2074, %v3311
  %v3313 = vand.u32 %v3312, 4294901760
  %3314 = vmatmul.mubr.f32.gmra.mrb[0].mxu0 %v3313
  %v3315 = vpop.f32.mrb[0].mxu0
  %v3316 = vadd.f32 %v3000, %v3315
  %v3317 = vpop.f32.mrb[0].mxu0
  %3318 = vmatprep.mubr.f32.mxu0 0.0
  %v3319 = vand.u32 %v2077, 4294901760
  %v3320 = vsub.f32 %v2077, %v3319
  %v3321 = vand.u32 %v3320, 4294901760
  %3322 = vmatmul.mubr.f32.gmra.mrb[0].mxu0 %v3321
  %v3323 = vpop.f32.mrb[0].mxu0
  %v3324 = vadd.f32 %v3007, %v3323
  %v3325 = vpop.f32.mrb[0].mxu0
  %3326 = vmatprep.mubr.f32.mxu0 0.0
  %v3327 = vand.u32 %v2080, 4294901760
  %v3328 = vsub.f32 %v2080, %v3327
  %v3329 = vand.u32 %v3328, 4294901760
  %3330 = vmatmul.mubr.f32.gmra.mrb[0].mxu0 %v3329
  %v3331 = vpop.f32.mrb[0].mxu0
  %v3332 = vadd.f32 %v3014, %v3331
  %v3333 = vpop.f32.mrb[0].mxu0
  %3334 = vmatprep.mubr.f32.mxu0 0.0
  %v3335 = vand.u32 %v2083, 4294901760
  %v3336 = vsub.f32 %v2083, %v3335
  %v3337 = vand.u32 %v3336, 4294901760
  %3338 = vmatmul.mubr.f32.gmra.mrb[0].mxu0 %v3337
  %v3339 = vpop.f32.mrb[0].mxu0
  %v3340 = vadd.f32 %v3021, %v3339
  %v3341 = vpop.f32.mrb[0].mxu0
  %3342 = vmatprep.mubr.f32.mxu0 0.0
  %v3343 = vand.u32 %v2086, 4294901760
  %v3344 = vsub.f32 %v2086, %v3343
  %v3345 = vand.u32 %v3344, 4294901760
  %3346 = vmatmul.mubr.f32.gmra.mrb[0].mxu0 %v3345
  %v3347 = vpop.f32.mrb[0].mxu0
  %v3348 = vadd.f32 %v3028, %v3347
  %v3349 = vpop.f32.mrb[0].mxu0
  %3350 = vmatprep.mubr.f32.mxu0 0.0
  %v3351 = vand.u32 %v2089, 4294901760
  %v3352 = vsub.f32 %v2089, %v3351
  %v3353 = vand.u32 %v3352, 4294901760
  %3354 = vmatmul.mubr.f32.gmra.mrb[0].mxu0 %v3353
  %v3355 = vpop.f32.mrb[0].mxu0
  %v3356 = vadd.f32 %v3035, %v3355
  %v3357 = vpop.f32.mrb[0].mxu0
  %3358 = vmatprep.mubr.f32.mxu0 0.0
  %v3359 = vand.u32 %v2092, 4294901760
  %v3360 = vsub.f32 %v2092, %v3359
  %v3361 = vand.u32 %v3360, 4294901760
  %3362 = vmatmul.mubr.f32.gmra.mrb[0].mxu0 %v3361
  %v3363 = vpop.f32.mrb[0].mxu0
  %v3364 = vadd.f32 %v3042, %v3363
  %v3365 = vpop.f32.mrb[0].mxu0
  %3366 = vmatprep.mubr.f32.mxu0 0.0
  %v3367 = vand.u32 %v2095, 4294901760
  %v3368 = vsub.f32 %v2095, %v3367
  %v3369 = vand.u32 %v3368, 4294901760
  %3370 = vmatmul.mubr.f32.gmra.mrb[0].mxu0 %v3369
  %v3371 = vpop.f32.mrb[0].mxu0
  %v3372 = vadd.f32 %v3049, %v3371
  %v3373 = vpop.f32.mrb[0].mxu0
  %3374 = vmatprep.mubr.f32.mxu0 0.0
  %v3375 = vand.u32 %v2098, 4294901760
  %v3376 = vsub.f32 %v2098, %v3375
  %v3377 = vand.u32 %v3376, 4294901760
  %3378 = vmatmul.mubr.f32.gmra.mrb[0].mxu0 %v3377
  %v3379 = vpop.f32.mrb[0].mxu0
  %v3380 = vadd.f32 %v3056, %v3379
  %v3381 = vpop.f32.mrb[0].mxu0
  %3382 = vmatprep.mubr.f32.mxu0 0.0
  %v3383 = vand.u32 %v2101, 4294901760
  %v3384 = vsub.f32 %v2101, %v3383
  %v3385 = vand.u32 %v3384, 4294901760
  %3386 = vmatmul.mubr.f32.gmra.mrb[0].mxu0 %v3385
  %v3387 = vpop.f32.mrb[0].mxu0
  %v3388 = vadd.f32 %v3063, %v3387
  %v3389 = vpop.f32.mrb[0].mxu0
  %3390 = vdwg.mxu0
  %3391 = vmatprep.subr.mxu0 0.0
  %v3392 = vand.u32 %v52, 4294901760
  %v3393 = vsub.f32 %v52, %v3392
  %v3394 = vand.u32 %v3393, 4294901760
  %3395 = vmatpush1.msra.mxu0 %v3394
  %3396 = vmatprep.subr.mxu0 0.0
  %v3397 = vand.u32 %v53, 4294901760
  %v3398 = vsub.f32 %v53, %v3397
  %v3399 = vand.u32 %v3398, 4294901760
  %3400 = vmatpush1.msra.mxu0 %v3399
  %3401 = vmatprep.subr.mxu0 0.0
  %v3402 = vand.u32 %v54, 4294901760
  %v3403 = vsub.f32 %v54, %v3402
  %v3404 = vand.u32 %v3403, 4294901760
  %3405 = vmatpush1.msra.mxu0 %v3404
  %3406 = vmatprep.subr.mxu0 0.0
  %v3407 = vand.u32 %v55, 4294901760
  %v3408 = vsub.f32 %v55, %v3407
  %v3409 = vand.u32 %v3408, 4294901760
  %3410 = vmatpush1.msra.mxu0 %v3409
  %3411 = vmatprep.subr.mxu0 0.0
  %3412 = vmatpush1.msra.mxu0 0.0
  %3413 = vmatprep.subr.mxu0 0.0
  %3414 = vmatpush1.msra.mxu0 0.0
  %3415 = vmatprep.subr.mxu0 0.0
  %3416 = vmatpush1.msra.mxu0 0.0
  %3417 = vmatprep.subr.mxu0 0.0
  %3418 = vmatpush1.msra.mxu0 0.0
  %3419 = vmatprep.subr.mxu0 0.0
  %3420 = vmatpush1.msra.mxu0 0.0
  %3421 = vmatprep.subr.mxu0 0.0
  %3422 = vmatpush1.msra.mxu0 0.0
  %3423 = vmatprep.subr.mxu0 0.0
  %3424 = vmatpush1.msra.mxu0 0.0
  %3425 = vmatprep.subr.mxu0 0.0
  %3426 = vmatpush1.msra.mxu0 0.0
  %3427 = vmatprep.subr.mxu0 0.0
  %3428 = vmatpush1.msra.mxu0 0.0
  %3429 = vmatprep.subr.mxu0 0.0
  %3430 = vmatpush1.msra.mxu0 0.0
  %3431 = vmatprep.subr.mxu0 0.0
  %3432 = vmatpush1.msra.mxu0 0.0
  %3433 = vmatprep.subr.mxu0 0.0
  %3434 = vmatpush1.msra.mxu0 0.0
  %3435 = vmatprep.subr.mxu0 0.0
  %3436 = vmatpush1.msra.mxu0 0.0
  %3437 = vmatprep.subr.mxu0 0.0
  %3438 = vmatpush1.msra.mxu0 0.0
  %3439 = vmatprep.subr.mxu0 0.0
  %3440 = vmatpush1.msra.mxu0 0.0
  %3441 = vmatprep.subr.mxu0 0.0
  %3442 = vmatpush1.msra.mxu0 0.0
  %3443 = vmatprep.subr.mxu0 0.0
  %3444 = vmatpush1.msra.mxu0 0.0
  %3445 = vmatprep.subr.mxu0 0.0
  %3446 = vmatpush1.msra.mxu0 0.0
  %3447 = vmatprep.subr.mxu0 0.0
  %3448 = vmatpush1.msra.mxu0 0.0
  %3449 = vmatprep.subr.mxu0 0.0
  %3450 = vmatpush1.msra.mxu0 0.0
  %3451 = vmatprep.subr.mxu0 0.0
  %3452 = vmatpush1.msra.mxu0 0.0
  %3453 = vmatprep.subr.mxu0 0.0
  %3454 = vmatpush1.msra.mxu0 0.0
  %3455 = vmatprep.subr.mxu0 0.0
  %3456 = vmatpush1.msra.mxu0 0.0
  %3457 = vmatprep.subr.mxu0 0.0
  %3458 = vmatpush1.msra.mxu0 0.0
  %3459 = vmatprep.subr.mxu0 0.0
  %3460 = vmatpush1.msra.mxu0 0.0
  %3461 = vmatprep.subr.mxu0 0.0
  %3462 = vmatpush1.msra.mxu0 0.0
  %3463 = vmatprep.subr.mxu0 0.0
  %3464 = vmatpush1.msra.mxu0 0.0
  %3465 = vmatprep.subr.mxu0 0.0
  %3466 = vmatpush1.msra.mxu0 0.0
  %3467 = vmatprep.mubr.f32.mxu0 0.0
  %v3468 = vand.u32 %v2008, 4294901760
  %3469 = vmatmul.mubr.f32.gmra.mrb[0].mxu0 %v3468
  %v3470 = vpop.f32.mrb[0].mxu0
  %v3471 = vadd.f32 %v3140, %v3470
  %v3472 = vpop.f32.mrb[0].mxu0
  %3473 = vmatprep.mubr.f32.mxu0 0.0
  %v3474 = vand.u32 %v2011, 4294901760
  %3475 = vmatmul.mubr.f32.gmra.mrb[0].mxu0 %v3474
  %v3476 = vpop.f32.mrb[0].mxu0
  %v3477 = vadd.f32 %v3148, %v3476
  %v3478 = vpop.f32.mrb[0].mxu0
  %3479 = vmatprep.mubr.f32.mxu0 0.0
  %v3480 = vand.u32 %v2014, 4294901760
  %3481 = vmatmul.mubr.f32.gmra.mrb[0].mxu0 %v3480
  %v3482 = vpop.f32.mrb[0].mxu0
  %v3483 = vadd.f32 %v3156, %v3482
  %v3484 = vpop.f32.mrb[0].mxu0
  %3485 = vmatprep.mubr.f32.mxu0 0.0
  %v3486 = vand.u32 %v2017, 4294901760
  %3487 = vmatmul.mubr.f32.gmra.mrb[0].mxu0 %v3486
  %v3488 = vpop.f32.mrb[0].mxu0
  %v3489 = vadd.f32 %v3164, %v3488
  %v3490 = vpop.f32.mrb[0].mxu0
  %3491 = vmatprep.mubr.f32.mxu0 0.0
  %v3492 = vand.u32 %v2020, 4294901760
  %3493 = vmatmul.mubr.f32.gmra.mrb[0].mxu0 %v3492
  %v3494 = vpop.f32.mrb[0].mxu0
  %v3495 = vadd.f32 %v3172, %v3494
  %v3496 = vpop.f32.mrb[0].mxu0
  %3497 = vmatprep.mubr.f32.mxu0 0.0
  %v3498 = vand.u32 %v2023, 4294901760
  %3499 = vmatmul.mubr.f32.gmra.mrb[0].mxu0 %v3498
  %v3500 = vpop.f32.mrb[0].mxu0
  %v3501 = vadd.f32 %v3180, %v3500
  %v3502 = vpop.f32.mrb[0].mxu0
  %3503 = vmatprep.mubr.f32.mxu0 0.0
  %v3504 = vand.u32 %v2026, 4294901760
  %3505 = vmatmul.mubr.f32.gmra.mrb[0].mxu0 %v3504
  %v3506 = vpop.f32.mrb[0].mxu0
  %v3507 = vadd.f32 %v3188, %v3506
  %v3508 = vpop.f32.mrb[0].mxu0
  %3509 = vmatprep.mubr.f32.mxu0 0.0
  %v3510 = vand.u32 %v2029, 4294901760
  %3511 = vmatmul.mubr.f32.gmra.mrb[0].mxu0 %v3510
  %v3512 = vpop.f32.mrb[0].mxu0
  %v3513 = vadd.f32 %v3196, %v3512
  %v3514 = vpop.f32.mrb[0].mxu0
  %3515 = vmatprep.mubr.f32.mxu0 0.0
  %v3516 = vand.u32 %v2032, 4294901760
  %3517 = vmatmul.mubr.f32.gmra.mrb[0].mxu0 %v3516
  %v3518 = vpop.f32.mrb[0].mxu0
  %v3519 = vadd.f32 %v3204, %v3518
  %v3520 = vpop.f32.mrb[0].mxu0
  %3521 = vmatprep.mubr.f32.mxu0 0.0
  %v3522 = vand.u32 %v2035, 4294901760
  %3523 = vmatmul.mubr.f32.gmra.mrb[0].mxu0 %v3522
  %v3524 = vpop.f32.mrb[0].mxu0
  %v3525 = vadd.f32 %v3212, %v3524
  %v3526 = vpop.f32.mrb[0].mxu0
  %3527 = vmatprep.mubr.f32.mxu0 0.0
  %v3528 = vand.u32 %v2038, 4294901760
  %3529 = vmatmul.mubr.f32.gmra.mrb[0].mxu0 %v3528
  %v3530 = vpop.f32.mrb[0].mxu0
  %v3531 = vadd.f32 %v3220, %v3530
  %v3532 = vpop.f32.mrb[0].mxu0
  %3533 = vmatprep.mubr.f32.mxu0 0.0
  %v3534 = vand.u32 %v2041, 4294901760
  %3535 = vmatmul.mubr.f32.gmra.mrb[0].mxu0 %v3534
  %v3536 = vpop.f32.mrb[0].mxu0
  %v3537 = vadd.f32 %v3228, %v3536
  %v3538 = vpop.f32.mrb[0].mxu0
  %3539 = vmatprep.mubr.f32.mxu0 0.0
  %v3540 = vand.u32 %v2044, 4294901760
  %3541 = vmatmul.mubr.f32.gmra.mrb[0].mxu0 %v3540
  %v3542 = vpop.f32.mrb[0].mxu0
  %v3543 = vadd.f32 %v3236, %v3542
  %v3544 = vpop.f32.mrb[0].mxu0
  %3545 = vmatprep.mubr.f32.mxu0 0.0
  %v3546 = vand.u32 %v2047, 4294901760
  %3547 = vmatmul.mubr.f32.gmra.mrb[0].mxu0 %v3546
  %v3548 = vpop.f32.mrb[0].mxu0
  %v3549 = vadd.f32 %v3244, %v3548
  %v3550 = vpop.f32.mrb[0].mxu0
  %3551 = vmatprep.mubr.f32.mxu0 0.0
  %v3552 = vand.u32 %v2050, 4294901760
  %3553 = vmatmul.mubr.f32.gmra.mrb[0].mxu0 %v3552
  %v3554 = vpop.f32.mrb[0].mxu0
  %v3555 = vadd.f32 %v3252, %v3554
  %v3556 = vpop.f32.mrb[0].mxu0
  %3557 = vmatprep.mubr.f32.mxu0 0.0
  %v3558 = vand.u32 %v2053, 4294901760
  %3559 = vmatmul.mubr.f32.gmra.mrb[0].mxu0 %v3558
  %v3560 = vpop.f32.mrb[0].mxu0
  %v3561 = vadd.f32 %v3260, %v3560
  %v3562 = vpop.f32.mrb[0].mxu0
  %3563 = vmatprep.mubr.f32.mxu0 0.0
  %v3564 = vand.u32 %v2056, 4294901760
  %3565 = vmatmul.mubr.f32.gmra.mrb[0].mxu0 %v3564
  %v3566 = vpop.f32.mrb[0].mxu0
  %v3567 = vadd.f32 %v3268, %v3566
  %v3568 = vpop.f32.mrb[0].mxu0
  %3569 = vmatprep.mubr.f32.mxu0 0.0
  %v3570 = vand.u32 %v2059, 4294901760
  %3571 = vmatmul.mubr.f32.gmra.mrb[0].mxu0 %v3570
  %v3572 = vpop.f32.mrb[0].mxu0
  %v3573 = vadd.f32 %v3276, %v3572
  %v3574 = vpop.f32.mrb[0].mxu0
  %3575 = vmatprep.mubr.f32.mxu0 0.0
  %v3576 = vand.u32 %v2062, 4294901760
  %3577 = vmatmul.mubr.f32.gmra.mrb[0].mxu0 %v3576
  %v3578 = vpop.f32.mrb[0].mxu0
  %v3579 = vadd.f32 %v3284, %v3578
  %v3580 = vpop.f32.mrb[0].mxu0
  %3581 = vmatprep.mubr.f32.mxu0 0.0
  %v3582 = vand.u32 %v2065, 4294901760
  %3583 = vmatmul.mubr.f32.gmra.mrb[0].mxu0 %v3582
  %v3584 = vpop.f32.mrb[0].mxu0
  %v3585 = vadd.f32 %v3292, %v3584
  %v3586 = vpop.f32.mrb[0].mxu0
  %3587 = vmatprep.mubr.f32.mxu0 0.0
  %v3588 = vand.u32 %v2068, 4294901760
  %3589 = vmatmul.mubr.f32.gmra.mrb[0].mxu0 %v3588
  %v3590 = vpop.f32.mrb[0].mxu0
  %v3591 = vadd.f32 %v3300, %v3590
  %v3592 = vpop.f32.mrb[0].mxu0
  %3593 = vmatprep.mubr.f32.mxu0 0.0
  %v3594 = vand.u32 %v2071, 4294901760
  %3595 = vmatmul.mubr.f32.gmra.mrb[0].mxu0 %v3594
  %v3596 = vpop.f32.mrb[0].mxu0
  %v3597 = vadd.f32 %v3308, %v3596
  %v3598 = vpop.f32.mrb[0].mxu0
  %3599 = vmatprep.mubr.f32.mxu0 0.0
  %v3600 = vand.u32 %v2074, 4294901760
  %3601 = vmatmul.mubr.f32.gmra.mrb[0].mxu0 %v3600
  %v3602 = vpop.f32.mrb[0].mxu0
  %v3603 = vadd.f32 %v3316, %v3602
  %v3604 = vpop.f32.mrb[0].mxu0
  %3605 = vmatprep.mubr.f32.mxu0 0.0
  %v3606 = vand.u32 %v2077, 4294901760
  %3607 = vmatmul.mubr.f32.gmra.mrb[0].mxu0 %v3606
  %v3608 = vpop.f32.mrb[0].mxu0
  %v3609 = vadd.f32 %v3324, %v3608
  %v3610 = vpop.f32.mrb[0].mxu0
  %3611 = vmatprep.mubr.f32.mxu0 0.0
  %v3612 = vand.u32 %v2080, 4294901760
  %3613 = vmatmul.mubr.f32.gmra.mrb[0].mxu0 %v3612
  %v3614 = vpop.f32.mrb[0].mxu0
  %v3615 = vadd.f32 %v3332, %v3614
  %v3616 = vpop.f32.mrb[0].mxu0
  %3617 = vmatprep.mubr.f32.mxu0 0.0
  %v3618 = vand.u32 %v2083, 4294901760
  %3619 = vmatmul.mubr.f32.gmra.mrb[0].mxu0 %v3618
  %v3620 = vpop.f32.mrb[0].mxu0
  %v3621 = vadd.f32 %v3340, %v3620
  %v3622 = vpop.f32.mrb[0].mxu0
  %3623 = vmatprep.mubr.f32.mxu0 0.0
  %v3624 = vand.u32 %v2086, 4294901760
  %3625 = vmatmul.mubr.f32.gmra.mrb[0].mxu0 %v3624
  %v3626 = vpop.f32.mrb[0].mxu0
  %v3627 = vadd.f32 %v3348, %v3626
  %v3628 = vpop.f32.mrb[0].mxu0
  %3629 = vmatprep.mubr.f32.mxu0 0.0
  %v3630 = vand.u32 %v2089, 4294901760
  %3631 = vmatmul.mubr.f32.gmra.mrb[0].mxu0 %v3630
  %v3632 = vpop.f32.mrb[0].mxu0
  %v3633 = vadd.f32 %v3356, %v3632
  %v3634 = vpop.f32.mrb[0].mxu0
  %3635 = vmatprep.mubr.f32.mxu0 0.0
  %v3636 = vand.u32 %v2092, 4294901760
  %3637 = vmatmul.mubr.f32.gmra.mrb[0].mxu0 %v3636
  %v3638 = vpop.f32.mrb[0].mxu0
  %v3639 = vadd.f32 %v3364, %v3638
  %v3640 = vpop.f32.mrb[0].mxu0
  %3641 = vmatprep.mubr.f32.mxu0 0.0
  %v3642 = vand.u32 %v2095, 4294901760
  %3643 = vmatmul.mubr.f32.gmra.mrb[0].mxu0 %v3642
  %v3644 = vpop.f32.mrb[0].mxu0
  %v3645 = vadd.f32 %v3372, %v3644
  %v3646 = vpop.f32.mrb[0].mxu0
  %3647 = vmatprep.mubr.f32.mxu0 0.0
  %v3648 = vand.u32 %v2098, 4294901760
  %3649 = vmatmul.mubr.f32.gmra.mrb[0].mxu0 %v3648
  %v3650 = vpop.f32.mrb[0].mxu0
  %v3651 = vadd.f32 %v3380, %v3650
  %v3652 = vpop.f32.mrb[0].mxu0
  %3653 = vmatprep.mubr.f32.mxu0 0.0
  %v3654 = vand.u32 %v2101, 4294901760
  %3655 = vmatmul.mubr.f32.gmra.mrb[0].mxu0 %v3654
  %v3656 = vpop.f32.mrb[0].mxu0
  %v3657 = vadd.f32 %v3388, %v3656
  %v3658 = vpop.f32.mrb[0].mxu0
  %3659 = vdwg.mxu0
  %3660 = vmatprep.subr.mxu0 0.0
  %v3661 = vand.u32 %v52, 4294901760
  %3662 = vmatpush1.msra.mxu0 %v3661
  %3663 = vmatprep.subr.mxu0 0.0
  %v3664 = vand.u32 %v53, 4294901760
  %3665 = vmatpush1.msra.mxu0 %v3664
  %3666 = vmatprep.subr.mxu0 0.0
  %v3667 = vand.u32 %v54, 4294901760
  %3668 = vmatpush1.msra.mxu0 %v3667
  %3669 = vmatprep.subr.mxu0 0.0
  %v3670 = vand.u32 %v55, 4294901760
  %3671 = vmatpush1.msra.mxu0 %v3670
  %3672 = vmatprep.subr.mxu0 0.0
  %3673 = vmatpush1.msra.mxu0 0.0
  %3674 = vmatprep.subr.mxu0 0.0
  %3675 = vmatpush1.msra.mxu0 0.0
  %3676 = vmatprep.subr.mxu0 0.0
  %3677 = vmatpush1.msra.mxu0 0.0
  %3678 = vmatprep.subr.mxu0 0.0
  %3679 = vmatpush1.msra.mxu0 0.0
  %3680 = vmatprep.subr.mxu0 0.0
  %3681 = vmatpush1.msra.mxu0 0.0
  %3682 = vmatprep.subr.mxu0 0.0
  %3683 = vmatpush1.msra.mxu0 0.0
  %3684 = vmatprep.subr.mxu0 0.0
  %3685 = vmatpush1.msra.mxu0 0.0
  %3686 = vmatprep.subr.mxu0 0.0
  %3687 = vmatpush1.msra.mxu0 0.0
  %3688 = vmatprep.subr.mxu0 0.0
  %3689 = vmatpush1.msra.mxu0 0.0
  %3690 = vmatprep.subr.mxu0 0.0
  %3691 = vmatpush1.msra.mxu0 0.0
  %3692 = vmatprep.subr.mxu0 0.0
  %3693 = vmatpush1.msra.mxu0 0.0
  %3694 = vmatprep.subr.mxu0 0.0
  %3695 = vmatpush1.msra.mxu0 0.0
  %3696 = vmatprep.subr.mxu0 0.0
  %3697 = vmatpush1.msra.mxu0 0.0
  %3698 = vmatprep.subr.mxu0 0.0
  %3699 = vmatpush1.msra.mxu0 0.0
  %3700 = vmatprep.subr.mxu0 0.0
  %3701 = vmatpush1.msra.mxu0 0.0
  %3702 = vmatprep.subr.mxu0 0.0
  %3703 = vmatpush1.msra.mxu0 0.0
  %3704 = vmatprep.subr.mxu0 0.0
  %3705 = vmatpush1.msra.mxu0 0.0
  %3706 = vmatprep.subr.mxu0 0.0
  %3707 = vmatpush1.msra.mxu0 0.0
  %3708 = vmatprep.subr.mxu0 0.0
  %3709 = vmatpush1.msra.mxu0 0.0
  %3710 = vmatprep.subr.mxu0 0.0
  %3711 = vmatpush1.msra.mxu0 0.0
  %3712 = vmatprep.subr.mxu0 0.0
  %3713 = vmatpush1.msra.mxu0 0.0
  %3714 = vmatprep.subr.mxu0 0.0
  %3715 = vmatpush1.msra.mxu0 0.0
  %3716 = vmatprep.subr.mxu0 0.0
  %3717 = vmatpush1.msra.mxu0 0.0
  %3718 = vmatprep.subr.mxu0 0.0
  %3719 = vmatpush1.msra.mxu0 0.0
  %3720 = vmatprep.subr.mxu0 0.0
  %3721 = vmatpush1.msra.mxu0 0.0
  %3722 = vmatprep.subr.mxu0 0.0
  %3723 = vmatpush1.msra.mxu0 0.0
  %3724 = vmatprep.subr.mxu0 0.0
  %3725 = vmatpush1.msra.mxu0 0.0
  %3726 = vmatprep.subr.mxu0 0.0
  %3727 = vmatpush1.msra.mxu0 0.0
  %3728 = vmatprep.mubr.f32.mxu0 0.0
  %v3729 = vand.u32 %v2008, 4294901760
  %3730 = vmatmul.mubr.f32.gmra.mrb[0].mxu0 %v3729
  %v3731 = vpop.f32.mrb[0].mxu0
  %v3732 = vadd.f32 %v3471, %v3731
  %v3733 = vpop.f32.mrb[0].mxu0
  %3734 = vmatprep.mubr.f32.mxu0 0.0
  %v3735 = vand.u32 %v2011, 4294901760
  %3736 = vmatmul.mubr.f32.gmra.mrb[0].mxu0 %v3735
  %v3737 = vpop.f32.mrb[0].mxu0
  %v3738 = vadd.f32 %v3477, %v3737
  %v3739 = vpop.f32.mrb[0].mxu0
  %3740 = vmatprep.mubr.f32.mxu0 0.0
  %v3741 = vand.u32 %v2014, 4294901760
  %3742 = vmatmul.mubr.f32.gmra.mrb[0].mxu0 %v3741
  %v3743 = vpop.f32.mrb[0].mxu0
  %v3744 = vadd.f32 %v3483, %v3743
  %v3745 = vpop.f32.mrb[0].mxu0
  %3746 = vmatprep.mubr.f32.mxu0 0.0
  %v3747 = vand.u32 %v2017, 4294901760
  %3748 = vmatmul.mubr.f32.gmra.mrb[0].mxu0 %v3747
  %v3749 = vpop.f32.mrb[0].mxu0
  %v3750 = vadd.f32 %v3489, %v3749
  %v3751 = vpop.f32.mrb[0].mxu0
  %3752 = vmatprep.mubr.f32.mxu0 0.0
  %v3753 = vand.u32 %v2020, 4294901760
  %3754 = vmatmul.mubr.f32.gmra.mrb[0].mxu0 %v3753
  %v3755 = vpop.f32.mrb[0].mxu0
  %v3756 = vadd.f32 %v3495, %v3755
  %v3757 = vpop.f32.mrb[0].mxu0
  %3758 = vmatprep.mubr.f32.mxu0 0.0
  %v3759 = vand.u32 %v2023, 4294901760
  %3760 = vmatmul.mubr.f32.gmra.mrb[0].mxu0 %v3759
  %v3761 = vpop.f32.mrb[0].mxu0
  %v3762 = vadd.f32 %v3501, %v3761
  %v3763 = vpop.f32.mrb[0].mxu0
  %3764 = vmatprep.mubr.f32.mxu0 0.0
  %v3765 = vand.u32 %v2026, 4294901760
  %3766 = vmatmul.mubr.f32.gmra.mrb[0].mxu0 %v3765
  %v3767 = vpop.f32.mrb[0].mxu0
  %v3768 = vadd.f32 %v3507, %v3767
  %v3769 = vpop.f32.mrb[0].mxu0
  %3770 = vmatprep.mubr.f32.mxu0 0.0
  %v3771 = vand.u32 %v2029, 4294901760
  %3772 = vmatmul.mubr.f32.gmra.mrb[0].mxu0 %v3771
  %v3773 = vpop.f32.mrb[0].mxu0
  %v3774 = vadd.f32 %v3513, %v3773
  %v3775 = vpop.f32.mrb[0].mxu0
  %3776 = vmatprep.mubr.f32.mxu0 0.0
  %v3777 = vand.u32 %v2032, 4294901760
  %3778 = vmatmul.mubr.f32.gmra.mrb[0].mxu0 %v3777
  %v3779 = vpop.f32.mrb[0].mxu0
  %v3780 = vadd.f32 %v3519, %v3779
  %v3781 = vpop.f32.mrb[0].mxu0
  %3782 = vmatprep.mubr.f32.mxu0 0.0
  %v3783 = vand.u32 %v2035, 4294901760
  %3784 = vmatmul.mubr.f32.gmra.mrb[0].mxu0 %v3783
  %v3785 = vpop.f32.mrb[0].mxu0
  %v3786 = vadd.f32 %v3525, %v3785
  %v3787 = vpop.f32.mrb[0].mxu0
  %3788 = vmatprep.mubr.f32.mxu0 0.0
  %v3789 = vand.u32 %v2038, 4294901760
  %3790 = vmatmul.mubr.f32.gmra.mrb[0].mxu0 %v3789
  %v3791 = vpop.f32.mrb[0].mxu0
  %v3792 = vadd.f32 %v3531, %v3791
  %v3793 = vpop.f32.mrb[0].mxu0
  %3794 = vmatprep.mubr.f32.mxu0 0.0
  %v3795 = vand.u32 %v2041, 4294901760
  %3796 = vmatmul.mubr.f32.gmra.mrb[0].mxu0 %v3795
  %v3797 = vpop.f32.mrb[0].mxu0
  %v3798 = vadd.f32 %v3537, %v3797
  %v3799 = vpop.f32.mrb[0].mxu0
  %3800 = vmatprep.mubr.f32.mxu0 0.0
  %v3801 = vand.u32 %v2044, 4294901760
  %3802 = vmatmul.mubr.f32.gmra.mrb[0].mxu0 %v3801
  %v3803 = vpop.f32.mrb[0].mxu0
  %v3804 = vadd.f32 %v3543, %v3803
  %v3805 = vpop.f32.mrb[0].mxu0
  %3806 = vmatprep.mubr.f32.mxu0 0.0
  %v3807 = vand.u32 %v2047, 4294901760
  %3808 = vmatmul.mubr.f32.gmra.mrb[0].mxu0 %v3807
  %v3809 = vpop.f32.mrb[0].mxu0
  %v3810 = vadd.f32 %v3549, %v3809
  %v3811 = vpop.f32.mrb[0].mxu0
  %3812 = vmatprep.mubr.f32.mxu0 0.0
  %v3813 = vand.u32 %v2050, 4294901760
  %3814 = vmatmul.mubr.f32.gmra.mrb[0].mxu0 %v3813
  %v3815 = vpop.f32.mrb[0].mxu0
  %v3816 = vadd.f32 %v3555, %v3815
  %v3817 = vpop.f32.mrb[0].mxu0
  %3818 = vmatprep.mubr.f32.mxu0 0.0
  %v3819 = vand.u32 %v2053, 4294901760
  %3820 = vmatmul.mubr.f32.gmra.mrb[0].mxu0 %v3819
  %v3821 = vpop.f32.mrb[0].mxu0
  %v3822 = vadd.f32 %v3561, %v3821
  %v3823 = vpop.f32.mrb[0].mxu0
  %3824 = vmatprep.mubr.f32.mxu0 0.0
  %v3825 = vand.u32 %v2056, 4294901760
  %3826 = vmatmul.mubr.f32.gmra.mrb[0].mxu0 %v3825
  %v3827 = vpop.f32.mrb[0].mxu0
  %v3828 = vadd.f32 %v3567, %v3827
  %v3829 = vpop.f32.mrb[0].mxu0
  %3830 = vmatprep.mubr.f32.mxu0 0.0
  %v3831 = vand.u32 %v2059, 4294901760
  %3832 = vmatmul.mubr.f32.gmra.mrb[0].mxu0 %v3831
  %v3833 = vpop.f32.mrb[0].mxu0
  %v3834 = vadd.f32 %v3573, %v3833
  %v3835 = vpop.f32.mrb[0].mxu0
  %3836 = vmatprep.mubr.f32.mxu0 0.0
  %v3837 = vand.u32 %v2062, 4294901760
  %3838 = vmatmul.mubr.f32.gmra.mrb[0].mxu0 %v3837
  %v3839 = vpop.f32.mrb[0].mxu0
  %v3840 = vadd.f32 %v3579, %v3839
  %v3841 = vpop.f32.mrb[0].mxu0
  %3842 = vmatprep.mubr.f32.mxu0 0.0
  %v3843 = vand.u32 %v2065, 4294901760
  %3844 = vmatmul.mubr.f32.gmra.mrb[0].mxu0 %v3843
  %v3845 = vpop.f32.mrb[0].mxu0
  %v3846 = vadd.f32 %v3585, %v3845
  %v3847 = vpop.f32.mrb[0].mxu0
  %3848 = vmatprep.mubr.f32.mxu0 0.0
  %v3849 = vand.u32 %v2068, 4294901760
  %3850 = vmatmul.mubr.f32.gmra.mrb[0].mxu0 %v3849
  %v3851 = vpop.f32.mrb[0].mxu0
  %v3852 = vadd.f32 %v3591, %v3851
  %v3853 = vpop.f32.mrb[0].mxu0
  %3854 = vmatprep.mubr.f32.mxu0 0.0
  %v3855 = vand.u32 %v2071, 4294901760
  %3856 = vmatmul.mubr.f32.gmra.mrb[0].mxu0 %v3855
  %v3857 = vpop.f32.mrb[0].mxu0
  %v3858 = vadd.f32 %v3597, %v3857
  %v3859 = vpop.f32.mrb[0].mxu0
  %3860 = vmatprep.mubr.f32.mxu0 0.0
  %v3861 = vand.u32 %v2074, 4294901760
  %3862 = vmatmul.mubr.f32.gmra.mrb[0].mxu0 %v3861
  %v3863 = vpop.f32.mrb[0].mxu0
  %v3864 = vadd.f32 %v3603, %v3863
  %v3865 = vpop.f32.mrb[0].mxu0
  %3866 = vmatprep.mubr.f32.mxu0 0.0
  %v3867 = vand.u32 %v2077, 4294901760
  %3868 = vmatmul.mubr.f32.gmra.mrb[0].mxu0 %v3867
  %v3869 = vpop.f32.mrb[0].mxu0
  %v3870 = vadd.f32 %v3609, %v3869
  %v3871 = vpop.f32.mrb[0].mxu0
  %3872 = vmatprep.mubr.f32.mxu0 0.0
  %v3873 = vand.u32 %v2080, 4294901760
  %3874 = vmatmul.mubr.f32.gmra.mrb[0].mxu0 %v3873
  %v3875 = vpop.f32.mrb[0].mxu0
  %v3876 = vadd.f32 %v3615, %v3875
  %v3877 = vpop.f32.mrb[0].mxu0
  %3878 = vmatprep.mubr.f32.mxu0 0.0
  %v3879 = vand.u32 %v2083, 4294901760
  %3880 = vmatmul.mubr.f32.gmra.mrb[0].mxu0 %v3879
  %v3881 = vpop.f32.mrb[0].mxu0
  %v3882 = vadd.f32 %v3621, %v3881
  %v3883 = vpop.f32.mrb[0].mxu0
  %3884 = vmatprep.mubr.f32.mxu0 0.0
  %v3885 = vand.u32 %v2086, 4294901760
  %3886 = vmatmul.mubr.f32.gmra.mrb[0].mxu0 %v3885
  %v3887 = vpop.f32.mrb[0].mxu0
  %v3888 = vadd.f32 %v3627, %v3887
  %v3889 = vpop.f32.mrb[0].mxu0
  %3890 = vmatprep.mubr.f32.mxu0 0.0
  %v3891 = vand.u32 %v2089, 4294901760
  %3892 = vmatmul.mubr.f32.gmra.mrb[0].mxu0 %v3891
  %v3893 = vpop.f32.mrb[0].mxu0
  %v3894 = vadd.f32 %v3633, %v3893
  %v3895 = vpop.f32.mrb[0].mxu0
  %3896 = vmatprep.mubr.f32.mxu0 0.0
  %v3897 = vand.u32 %v2092, 4294901760
  %3898 = vmatmul.mubr.f32.gmra.mrb[0].mxu0 %v3897
  %v3899 = vpop.f32.mrb[0].mxu0
  %v3900 = vadd.f32 %v3639, %v3899
  %v3901 = vpop.f32.mrb[0].mxu0
  %3902 = vmatprep.mubr.f32.mxu0 0.0
  %v3903 = vand.u32 %v2095, 4294901760
  %3904 = vmatmul.mubr.f32.gmra.mrb[0].mxu0 %v3903
  %v3905 = vpop.f32.mrb[0].mxu0
  %v3906 = vadd.f32 %v3645, %v3905
  %v3907 = vpop.f32.mrb[0].mxu0
  %3908 = vmatprep.mubr.f32.mxu0 0.0
  %v3909 = vand.u32 %v2098, 4294901760
  %3910 = vmatmul.mubr.f32.gmra.mrb[0].mxu0 %v3909
  %v3911 = vpop.f32.mrb[0].mxu0
  %v3912 = vadd.f32 %v3651, %v3911
  %v3913 = vpop.f32.mrb[0].mxu0
  %3914 = vmatprep.mubr.f32.mxu0 0.0
  %v3915 = vand.u32 %v2101, 4294901760
  %3916 = vmatmul.mubr.f32.gmra.mrb[0].mxu0 %v3915
  %v3917 = vpop.f32.mrb[0].mxu0
  %v3918 = vadd.f32 %v3657, %v3917
  %v3919 = vpop.f32.mrb[0].mxu0
  %3920 = vdwg.mxu0
  %v3921 = vld [vmem:[%s4] sm:$0x1]
  %v3923 = vlaneseq
  %v3924 = vshrl.u32 %v3923, 7
  %v3925 = vsub.s32 0, %v3924
  %v3926 = vrot.slane %v3921, %v3925
  %v3928 = vadd.f32 %v3732, %v3926
  %v3929 = vadd.f32 %v3738, %v3926
  %v3930 = vadd.f32 %v3744, %v3926
  %v3931 = vadd.f32 %v3750, %v3926
  %v3932 = vadd.f32 %v3756, %v3926
  %v3933 = vadd.f32 %v3762, %v3926
  %v3934 = vadd.f32 %v3768, %v3926
  %v3935 = vadd.f32 %v3774, %v3926
  %v3936 = vadd.f32 %v3780, %v3926
  %v3937 = vadd.f32 %v3786, %v3926
  %v3938 = vadd.f32 %v3792, %v3926
  %v3939 = vadd.f32 %v3798, %v3926
  %v3940 = vadd.f32 %v3804, %v3926
  %v3941 = vadd.f32 %v3810, %v3926
  %v3942 = vadd.f32 %v3816, %v3926
  %v3943 = vadd.f32 %v3822, %v3926
  %v3944 = vadd.f32 %v3828, %v3926
  %v3945 = vadd.f32 %v3834, %v3926
  %v3946 = vadd.f32 %v3840, %v3926
  %v3947 = vadd.f32 %v3846, %v3926
  %v3948 = vadd.f32 %v3852, %v3926
  %v3949 = vadd.f32 %v3858, %v3926
  %v3950 = vadd.f32 %v3864, %v3926
  %v3951 = vadd.f32 %v3870, %v3926
  %v3952 = vadd.f32 %v3876, %v3926
  %v3953 = vadd.f32 %v3882, %v3926
  %v3954 = vadd.f32 %v3888, %v3926
  %v3955 = vadd.f32 %v3894, %v3926
  %v3956 = vadd.f32 %v3900, %v3926
  %v3957 = vadd.f32 %v3906, %v3926
  %v3958 = vadd.f32 %v3912, %v3926
  %v3959 = vadd.f32 %v3918, %v3926
  %vm3960 = vcmask 130048
  %v3961 = vsel %vm3960, %v3928, -inf
  %3962 = vmax.xlane.f32.xlu0 %v3961
  %v3963 = vpop.xlane.xlu0 %3962
  %v3964 = vsel %vm3960, %v3929, -inf
  %3965 = vmax.xlane.f32.xlu0 %v3964
  %v3966 = vpop.xlane.xlu0 %3965
  %v3967 = vsel %vm3960, %v3930, -inf
  %3968 = vmax.xlane.f32.xlu0 %v3967
  %v3969 = vpop.xlane.xlu0 %3968
  %v3970 = vsel %vm3960, %v3931, -inf
  %3971 = vmax.xlane.f32.xlu0 %v3970
  %v3972 = vpop.xlane.xlu0 %3971
  %v3973 = vsel %vm3960, %v3932, -inf
  %3974 = vmax.xlane.f32.xlu0 %v3973
  %v3975 = vpop.xlane.xlu0 %3974
  %v3976 = vsel %vm3960, %v3933, -inf
  %3977 = vmax.xlane.f32.xlu0 %v3976
  %v3978 = vpop.xlane.xlu0 %3977
  %v3979 = vsel %vm3960, %v3934, -inf
  %3980 = vmax.xlane.f32.xlu0 %v3979
  %v3981 = vpop.xlane.xlu0 %3980
  %v3982 = vsel %vm3960, %v3935, -inf
  %3983 = vmax.xlane.f32.xlu0 %v3982
  %v3984 = vpop.xlane.xlu0 %3983
  %v3985 = vsel %vm3960, %v3936, -inf
  %3986 = vmax.xlane.f32.xlu0 %v3985
  %v3987 = vpop.xlane.xlu0 %3986
  %v3988 = vsel %vm3960, %v3937, -inf
  %3989 = vmax.xlane.f32.xlu0 %v3988
  %v3990 = vpop.xlane.xlu0 %3989
  %v3991 = vsel %vm3960, %v3938, -inf
  %3992 = vmax.xlane.f32.xlu0 %v3991
  %v3993 = vpop.xlane.xlu0 %3992
  %v3994 = vsel %vm3960, %v3939, -inf
  %3995 = vmax.xlane.f32.xlu0 %v3994
  %v3996 = vpop.xlane.xlu0 %3995
  %v3997 = vsel %vm3960, %v3940, -inf
  %3998 = vmax.xlane.f32.xlu0 %v3997
  %v3999 = vpop.xlane.xlu0 %3998
  %v4000 = vsel %vm3960, %v3941, -inf
  %4001 = vmax.xlane.f32.xlu0 %v4000
  %v4002 = vpop.xlane.xlu0 %4001
  %v4003 = vsel %vm3960, %v3942, -inf
  %4004 = vmax.xlane.f32.xlu0 %v4003
  %v4005 = vpop.xlane.xlu0 %4004
  %v4006 = vsel %vm3960, %v3943, -inf
  %4007 = vmax.xlane.f32.xlu0 %v4006
  %v4008 = vpop.xlane.xlu0 %4007
  %v4009 = vsel %vm3960, %v3944, -inf
  %4010 = vmax.xlane.f32.xlu0 %v4009
  %v4011 = vpop.xlane.xlu0 %4010
  %v4012 = vsel %vm3960, %v3945, -inf
  %4013 = vmax.xlane.f32.xlu0 %v4012
  %v4014 = vpop.xlane.xlu0 %4013
  %v4015 = vsel %vm3960, %v3946, -inf
  %4016 = vmax.xlane.f32.xlu0 %v4015
  %v4017 = vpop.xlane.xlu0 %4016
  %v4018 = vsel %vm3960, %v3947, -inf
  %4019 = vmax.xlane.f32.xlu0 %v4018
  %v4020 = vpop.xlane.xlu0 %4019
  %v4021 = vsel %vm3960, %v3948, -inf
  %4022 = vmax.xlane.f32.xlu0 %v4021
  %v4023 = vpop.xlane.xlu0 %4022
  %v4024 = vsel %vm3960, %v3949, -inf
  %4025 = vmax.xlane.f32.xlu0 %v4024
  %v4026 = vpop.xlane.xlu0 %4025
  %v4027 = vsel %vm3960, %v3950, -inf
  %4028 = vmax.xlane.f32.xlu0 %v4027
  %v4029 = vpop.xlane.xlu0 %4028
  %v4030 = vsel %vm3960, %v3951, -inf
  %4031 = vmax.xlane.f32.xlu0 %v4030
  %v4032 = vpop.xlane.xlu0 %4031
  %v4033 = vsel %vm3960, %v3952, -inf
  %4034 = vmax.xlane.f32.xlu0 %v4033
  %v4035 = vpop.xlane.xlu0 %4034
  %v4036 = vsel %vm3960, %v3953, -inf
  %4037 = vmax.xlane.f32.xlu0 %v4036
  %v4038 = vpop.xlane.xlu0 %4037
  %v4039 = vsel %vm3960, %v3954, -inf
  %4040 = vmax.xlane.f32.xlu0 %v4039
  %v4041 = vpop.xlane.xlu0 %4040
  %v4042 = vsel %vm3960, %v3955, -inf
  %4043 = vmax.xlane.f32.xlu0 %v4042
  %v4044 = vpop.xlane.xlu0 %4043
  %v4045 = vsel %vm3960, %v3956, -inf
  %4046 = vmax.xlane.f32.xlu0 %v4045
  %v4047 = vpop.xlane.xlu0 %4046
  %v4048 = vsel %vm3960, %v3957, -inf
  %4049 = vmax.xlane.f32.xlu0 %v4048
  %v4050 = vpop.xlane.xlu0 %4049
  %v4051 = vsel %vm3960, %v3958, -inf
  %4052 = vmax.xlane.f32.xlu0 %v4051
  %v4053 = vpop.xlane.xlu0 %4052
  %v4054 = vsel %vm3960, %v3959, -inf
  %4055 = vmax.xlane.f32.xlu0 %v4054
  %v4056 = vpop.xlane.xlu0 %4055
  %v4057 = vsub.f32 %v3928, %v3963
  %v4058 = vsub.f32 %v3929, %v3966
  %v4059 = vsub.f32 %v3930, %v3969
  %v4060 = vsub.f32 %v3931, %v3972
  %v4061 = vsub.f32 %v3932, %v3975
  %v4062 = vsub.f32 %v3933, %v3978
  %v4063 = vsub.f32 %v3934, %v3981
  %v4064 = vsub.f32 %v3935, %v3984
  %v4065 = vsub.f32 %v3936, %v3987
  %v4066 = vsub.f32 %v3937, %v3990
  %v4067 = vsub.f32 %v3938, %v3993
  %v4068 = vsub.f32 %v3939, %v3996
  %v4069 = vsub.f32 %v3940, %v3999
  %v4070 = vsub.f32 %v3941, %v4002
  %v4071 = vsub.f32 %v3942, %v4005
  %v4072 = vsub.f32 %v3943, %v4008
  %v4073 = vsub.f32 %v3944, %v4011
  %v4074 = vsub.f32 %v3945, %v4014
  %v4075 = vsub.f32 %v3946, %v4017
  %v4076 = vsub.f32 %v3947, %v4020
  %v4077 = vsub.f32 %v3948, %v4023
  %v4078 = vsub.f32 %v3949, %v4026
  %v4079 = vsub.f32 %v3950, %v4029
  %v4080 = vsub.f32 %v3951, %v4032
  %v4081 = vsub.f32 %v3952, %v4035
  %v4082 = vsub.f32 %v3953, %v4038
  %v4083 = vsub.f32 %v3954, %v4041
  %v4084 = vsub.f32 %v3955, %v4044
  %v4085 = vsub.f32 %v3956, %v4047
  %v4086 = vsub.f32 %v3957, %v4050
  %v4087 = vsub.f32 %v3958, %v4053
  %v4088 = vsub.f32 %v3959, %v4056
  %v4089 = vmul.f32 %v4057, 1.442695
  %v4090 = vpow.pop %v4089
  %v4091 = vmul.f32 %v4058, 1.442695
  %v4092 = vpow.pop %v4091
  %v4093 = vmul.f32 %v4059, 1.442695
  %v4094 = vpow.pop %v4093
  %v4095 = vmul.f32 %v4060, 1.442695
  %v4096 = vpow.pop %v4095
  %v4097 = vmul.f32 %v4061, 1.442695
  %v4098 = vpow.pop %v4097
  %v4099 = vmul.f32 %v4062, 1.442695
  %v4100 = vpow.pop %v4099
  %v4101 = vmul.f32 %v4063, 1.442695
  %v4102 = vpow.pop %v4101
  %v4103 = vmul.f32 %v4064, 1.442695
  %v4104 = vpow.pop %v4103
  %v4105 = vmul.f32 %v4065, 1.442695
  %v4106 = vpow.pop %v4105
  %v4107 = vmul.f32 %v4066, 1.442695
  %v4108 = vpow.pop %v4107
  %v4109 = vmul.f32 %v4067, 1.442695
  %v4110 = vpow.pop %v4109
  %v4111 = vmul.f32 %v4068, 1.442695
  %v4112 = vpow.pop %v4111
  %v4113 = vmul.f32 %v4069, 1.442695
  %v4114 = vpow.pop %v4113
  %v4115 = vmul.f32 %v4070, 1.442695
  %v4116 = vpow.pop %v4115
  %v4117 = vmul.f32 %v4071, 1.442695
  %v4118 = vpow.pop %v4117
  %v4119 = vmul.f32 %v4072, 1.442695
  %v4120 = vpow.pop %v4119
  %v4121 = vmul.f32 %v4073, 1.442695
  %v4122 = vpow.pop %v4121
  %v4123 = vmul.f32 %v4074, 1.442695
  %v4124 = vpow.pop %v4123
  %v4125 = vmul.f32 %v4075, 1.442695
  %v4126 = vpow.pop %v4125
  %v4127 = vmul.f32 %v4076, 1.442695
  %v4128 = vpow.pop %v4127
  %v4129 = vmul.f32 %v4077, 1.442695
  %v4130 = vpow.pop %v4129
  %v4131 = vmul.f32 %v4078, 1.442695
  %v4132 = vpow.pop %v4131
  %v4133 = vmul.f32 %v4079, 1.442695
  %v4134 = vpow.pop %v4133
  %v4135 = vmul.f32 %v4080, 1.442695
  %v4136 = vpow.pop %v4135
  %v4137 = vmul.f32 %v4081, 1.442695
  %v4138 = vpow.pop %v4137
  %v4139 = vmul.f32 %v4082, 1.442695
  %v4140 = vpow.pop %v4139
  %v4141 = vmul.f32 %v4083, 1.442695
  %v4142 = vpow.pop %v4141
  %v4143 = vmul.f32 %v4084, 1.442695
  %v4144 = vpow.pop %v4143
  %v4145 = vmul.f32 %v4085, 1.442695
  %v4146 = vpow.pop %v4145
  %v4147 = vmul.f32 %v4086, 1.442695
  %v4148 = vpow.pop %v4147
  %v4149 = vmul.f32 %v4087, 1.442695
  %v4150 = vpow.pop %v4149
  %v4151 = vmul.f32 %v4088, 1.442695
  %v4152 = vpow.pop %v4151
  %v4153 = vsel %vm3960, %v4090, 0.0
  %4154 = vadd.xlane.f32.xlu0 %v4153
  %v4155 = vpop.xlane.xlu0 %4154
  %v4156 = vsel %vm3960, %v4092, 0.0
  %4157 = vadd.xlane.f32.xlu0 %v4156
  %v4158 = vpop.xlane.xlu0 %4157
  %v4159 = vsel %vm3960, %v4094, 0.0
  %4160 = vadd.xlane.f32.xlu0 %v4159
  %v4161 = vpop.xlane.xlu0 %4160
  %v4162 = vsel %vm3960, %v4096, 0.0
  %4163 = vadd.xlane.f32.xlu0 %v4162
  %v4164 = vpop.xlane.xlu0 %4163
  %v4165 = vsel %vm3960, %v4098, 0.0
  %4166 = vadd.xlane.f32.xlu0 %v4165
  %v4167 = vpop.xlane.xlu0 %4166
  %v4168 = vsel %vm3960, %v4100, 0.0
  %4169 = vadd.xlane.f32.xlu0 %v4168
  %v4170 = vpop.xlane.xlu0 %4169
  %v4171 = vsel %vm3960, %v4102, 0.0
  %4172 = vadd.xlane.f32.xlu0 %v4171
  %v4173 = vpop.xlane.xlu0 %4172
  %v4174 = vsel %vm3960, %v4104, 0.0
  %4175 = vadd.xlane.f32.xlu0 %v4174
  %v4176 = vpop.xlane.xlu0 %4175
  %v4177 = vsel %vm3960, %v4106, 0.0
  %4178 = vadd.xlane.f32.xlu0 %v4177
  %v4179 = vpop.xlane.xlu0 %4178
  %v4180 = vsel %vm3960, %v4108, 0.0
  %4181 = vadd.xlane.f32.xlu0 %v4180
  %v4182 = vpop.xlane.xlu0 %4181
  %v4183 = vsel %vm3960, %v4110, 0.0
  %4184 = vadd.xlane.f32.xlu0 %v4183
  %v4185 = vpop.xlane.xlu0 %4184
  %v4186 = vsel %vm3960, %v4112, 0.0
  %4187 = vadd.xlane.f32.xlu0 %v4186
  %v4188 = vpop.xlane.xlu0 %4187
  %v4189 = vsel %vm3960, %v4114, 0.0
  %4190 = vadd.xlane.f32.xlu0 %v4189
  %v4191 = vpop.xlane.xlu0 %4190
  %v4192 = vsel %vm3960, %v4116, 0.0
  %4193 = vadd.xlane.f32.xlu0 %v4192
  %v4194 = vpop.xlane.xlu0 %4193
  %v4195 = vsel %vm3960, %v4118, 0.0
  %4196 = vadd.xlane.f32.xlu0 %v4195
  %v4197 = vpop.xlane.xlu0 %4196
  %v4198 = vsel %vm3960, %v4120, 0.0
  %4199 = vadd.xlane.f32.xlu0 %v4198
  %v4200 = vpop.xlane.xlu0 %4199
  %v4201 = vsel %vm3960, %v4122, 0.0
  %4202 = vadd.xlane.f32.xlu0 %v4201
  %v4203 = vpop.xlane.xlu0 %4202
  %v4204 = vsel %vm3960, %v4124, 0.0
  %4205 = vadd.xlane.f32.xlu0 %v4204
  %v4206 = vpop.xlane.xlu0 %4205
  %v4207 = vsel %vm3960, %v4126, 0.0
  %4208 = vadd.xlane.f32.xlu0 %v4207
  %v4209 = vpop.xlane.xlu0 %4208
  %v4210 = vsel %vm3960, %v4128, 0.0
  %4211 = vadd.xlane.f32.xlu0 %v4210
  %v4212 = vpop.xlane.xlu0 %4211
  %v4213 = vsel %vm3960, %v4130, 0.0
  %4214 = vadd.xlane.f32.xlu0 %v4213
  %v4215 = vpop.xlane.xlu0 %4214
  %v4216 = vsel %vm3960, %v4132, 0.0
  %4217 = vadd.xlane.f32.xlu0 %v4216
  %v4218 = vpop.xlane.xlu0 %4217
  %v4219 = vsel %vm3960, %v4134, 0.0
  %4220 = vadd.xlane.f32.xlu0 %v4219
  %v4221 = vpop.xlane.xlu0 %4220
  %v4222 = vsel %vm3960, %v4136, 0.0
  %4223 = vadd.xlane.f32.xlu0 %v4222
  %v4224 = vpop.xlane.xlu0 %4223
  %v4225 = vsel %vm3960, %v4138, 0.0
  %4226 = vadd.xlane.f32.xlu0 %v4225
  %v4227 = vpop.xlane.xlu0 %4226
  %v4228 = vsel %vm3960, %v4140, 0.0
  %4229 = vadd.xlane.f32.xlu0 %v4228
  %v4230 = vpop.xlane.xlu0 %4229
  %v4231 = vsel %vm3960, %v4142, 0.0
  %4232 = vadd.xlane.f32.xlu0 %v4231
  %v4233 = vpop.xlane.xlu0 %4232
  %v4234 = vsel %vm3960, %v4144, 0.0
  %4235 = vadd.xlane.f32.xlu0 %v4234
  %v4236 = vpop.xlane.xlu0 %4235
  %v4237 = vsel %vm3960, %v4146, 0.0
  %4238 = vadd.xlane.f32.xlu0 %v4237
  %v4239 = vpop.xlane.xlu0 %4238
  %v4240 = vsel %vm3960, %v4148, 0.0
  %4241 = vadd.xlane.f32.xlu0 %v4240
  %v4242 = vpop.xlane.xlu0 %4241
  %v4243 = vsel %vm3960, %v4150, 0.0
  %4244 = vadd.xlane.f32.xlu0 %v4243
  %v4245 = vpop.xlane.xlu0 %4244
  %v4246 = vsel %vm3960, %v4152, 0.0
  %4247 = vadd.xlane.f32.xlu0 %v4246
  %v4248 = vpop.xlane.xlu0 %4247
  %v4249 = vrcp.pop %v4155
  %v4250 = vmul.f32 %v4090, %v4249
  %v4251 = vrcp.pop %v4158
  %v4252 = vmul.f32 %v4092, %v4251
  %v4253 = vrcp.pop %v4161
  %v4254 = vmul.f32 %v4094, %v4253
  %v4255 = vrcp.pop %v4164
  %v4256 = vmul.f32 %v4096, %v4255
  %v4257 = vrcp.pop %v4167
  %v4258 = vmul.f32 %v4098, %v4257
  %v4259 = vrcp.pop %v4170
  %v4260 = vmul.f32 %v4100, %v4259
  %v4261 = vrcp.pop %v4173
  %v4262 = vmul.f32 %v4102, %v4261
  %v4263 = vrcp.pop %v4176
  %v4264 = vmul.f32 %v4104, %v4263
  %v4265 = vrcp.pop %v4179
  %v4266 = vmul.f32 %v4106, %v4265
  %v4267 = vrcp.pop %v4182
  %v4268 = vmul.f32 %v4108, %v4267
  %v4269 = vrcp.pop %v4185
  %v4270 = vmul.f32 %v4110, %v4269
  %v4271 = vrcp.pop %v4188
  %v4272 = vmul.f32 %v4112, %v4271
  %v4273 = vrcp.pop %v4191
  %v4274 = vmul.f32 %v4114, %v4273
  %v4275 = vrcp.pop %v4194
  %v4276 = vmul.f32 %v4116, %v4275
  %v4277 = vrcp.pop %v4197
  %v4278 = vmul.f32 %v4118, %v4277
  %v4279 = vrcp.pop %v4200
  %v4280 = vmul.f32 %v4120, %v4279
  %v4281 = vrcp.pop %v4203
  %v4282 = vmul.f32 %v4122, %v4281
  %v4283 = vrcp.pop %v4206
  %v4284 = vmul.f32 %v4124, %v4283
  %v4285 = vrcp.pop %v4209
  %v4286 = vmul.f32 %v4126, %v4285
  %v4287 = vrcp.pop %v4212
  %v4288 = vmul.f32 %v4128, %v4287
  %v4289 = vrcp.pop %v4215
  %v4290 = vmul.f32 %v4130, %v4289
  %v4291 = vrcp.pop %v4218
  %v4292 = vmul.f32 %v4132, %v4291
  %v4293 = vrcp.pop %v4221
  %v4294 = vmul.f32 %v4134, %v4293
  %v4295 = vrcp.pop %v4224
  %v4296 = vmul.f32 %v4136, %v4295
  %v4297 = vrcp.pop %v4227
  %v4298 = vmul.f32 %v4138, %v4297
  %v4299 = vrcp.pop %v4230
  %v4300 = vmul.f32 %v4140, %v4299
  %v4301 = vrcp.pop %v4233
  %v4302 = vmul.f32 %v4142, %v4301
  %v4303 = vrcp.pop %v4236
  %v4304 = vmul.f32 %v4144, %v4303
  %v4305 = vrcp.pop %v4239
  %v4306 = vmul.f32 %v4146, %v4305
  %v4307 = vrcp.pop %v4242
  %v4308 = vmul.f32 %v4148, %v4307
  %v4309 = vrcp.pop %v4245
  %v4310 = vmul.f32 %v4150, %v4309
  %v4311 = vrcp.pop %v4248
  %v4312 = vmul.f32 %v4152, %v4311
  %4313 = vst.msk [vmem:[%s5] sm:$0xff] %vm3960, %v4250
  %4314 = vst.msk [vmem:[%s5 + $0x8] sm:$0xff] %vm3960, %v4252
  %4315 = vst.msk [vmem:[%s5 + $0x10] sm:$0xff] %vm3960, %v4254
  %4316 = vst.msk [vmem:[%s5 + $0x18] sm:$0xff] %vm3960, %v4256
  %4317 = vst.msk [vmem:[%s5 + $0x20] sm:$0xff] %vm3960, %v4258
  %4318 = vst.msk [vmem:[%s5 + $0x28] sm:$0xff] %vm3960, %v4260
  %4319 = vst.msk [vmem:[%s5 + $0x30] sm:$0xff] %vm3960, %v4262
  %4320 = vst.msk [vmem:[%s5 + $0x38] sm:$0xff] %vm3960, %v4264
  %4321 = vst.msk [vmem:[%s5 + $0x40] sm:$0xff] %vm3960, %v4266
  %4322 = vst.msk [vmem:[%s5 + $0x48] sm:$0xff] %vm3960, %v4268
  %4323 = vst.msk [vmem:[%s5 + $0x50] sm:$0xff] %vm3960, %v4270
  %4324 = vst.msk [vmem:[%s5 + $0x58] sm:$0xff] %vm3960, %v4272
  %4325 = vst.msk [vmem:[%s5 + $0x60] sm:$0xff] %vm3960, %v4274
  %4326 = vst.msk [vmem:[%s5 + $0x68] sm:$0xff] %vm3960, %v4276
  %4327 = vst.msk [vmem:[%s5 + $0x70] sm:$0xff] %vm3960, %v4278
  %4328 = vst.msk [vmem:[%s5 + $0x78] sm:$0xff] %vm3960, %v4280
  %4329 = vst.msk [vmem:[%s5 + $0x80] sm:$0xff] %vm3960, %v4282
  %4330 = vst.msk [vmem:[%s5 + $0x88] sm:$0xff] %vm3960, %v4284
  %4331 = vst.msk [vmem:[%s5 + $0x90] sm:$0xff] %vm3960, %v4286
  %4332 = vst.msk [vmem:[%s5 + $0x98] sm:$0xff] %vm3960, %v4288
  %4333 = vst.msk [vmem:[%s5 + $0xa0] sm:$0xff] %vm3960, %v4290
  %4334 = vst.msk [vmem:[%s5 + $0xa8] sm:$0xff] %vm3960, %v4292
  %4335 = vst.msk [vmem:[%s5 + $0xb0] sm:$0xff] %vm3960, %v4294
  %4336 = vst.msk [vmem:[%s5 + $0xb8] sm:$0xff] %vm3960, %v4296
  %4337 = vst.msk [vmem:[%s5 + $0xc0] sm:$0xff] %vm3960, %v4298
  %4338 = vst.msk [vmem:[%s5 + $0xc8] sm:$0xff] %vm3960, %v4300
  %4339 = vst.msk [vmem:[%s5 + $0xd0] sm:$0xff] %vm3960, %v4302
  %4340 = vst.msk [vmem:[%s5 + $0xd8] sm:$0xff] %vm3960, %v4304
  %4341 = vst.msk [vmem:[%s5 + $0xe0] sm:$0xff] %vm3960, %v4306
  %4342 = vst.msk [vmem:[%s5 + $0xe8] sm:$0xff] %vm3960, %v4308
  %4343 = vst.msk [vmem:[%s5 + $0xf0] sm:$0xff] %vm3960, %v4310
  %4344 = vst.msk [vmem:[%s5 + $0xf8] sm:$0xff] %vm3960, %v4312
  // Predicated region
  $region22: #{generate_mode.1} parent=0 // pred_check
    _
  $region23: #{generate_mode.1} parent=0 // pred_check_branch
    %4346 = sbr.rel (0) target = $region25
  $region24: #{generate_mode.1} parent=0 // pred_region
    _
  $region25: #{generate_mode.1} parent=0 // pred_fallthru
    _
  // Predicated region
  $region26: #{generate_mode.1} parent=0 // pred_check
    _
  $region27: #{generate_mode.1} parent=0 // pred_check_branch
    %4348 = sbr.rel (0) target = $region29
  $region28: #{generate_mode.1} parent=0 // pred_region
    _
  $region29: #{generate_mode.1} parent=0 // pred_fallthru
    _

</llo_original>
